<compile_context>
chip_gen: v7x
topology: tpu7x:2x2x1
jax: 0.10.0
libtpu: 0.0.40
codegen_flags: <defaults>
</compile_context>

<pallas_src>
import functools
import math

import jax
import jax.numpy as jnp
from jax import lax
from jax.experimental import pallas as pl
from jax.experimental.pallas import tpu as pltpu

LANE = 128
_DEFAULT_TIME_TILE = 512           # 256-1024 recommended; full-T when T is small
_VMEM_LIMIT = 48 * 1024 * 1024     # safe on v5e / v6e / v7x


def _round_up(x, m):
    return (x + m - 1) // m * m


def _pick_time_tile(t_out, target=_DEFAULT_TIME_TILE):
    """Largest tile <= target that is a multiple of 8 and divides t_out, else full T."""
    if t_out <= target:
        return t_out
    start = (min(target, t_out) // 8) * 8
    for tt in range(start, 7, -8):
        if t_out % tt == 0:
            return tt
    return t_out


def _time_offset(tt, nt):
    """Start row of this grid step's output tile inside the (time-padded) input."""
    if nt == 1:
        return 0
    return pl.multiple_of(pl.program_id(1) * tt, 8)   # tt is a multiple of 8 when nt > 1


# ---------------------------------------------------------------------------
# Pallas kernels
# ---------------------------------------------------------------------------
def _conv_tap_kernel(x_ref, w_ref, b_ref, o_ref, *, k, dil, tt, nt, relu_in):
    """Stride-1 K-tap conv: out[t0:t0+tt] = sum_k  x_pad[t0+k*dil : +tt] @ W[k]  + b.

    x_ref: (1, T_in_pad, C_in_blk) resident per batch; w_ref: (K, C_in_blk, C_out_pad);
    b_ref: (1, C_out_pad) f32; o_ref: (1, tt, C_out_pad).
    """
    t0 = _time_offset(tt, nt)
    cdt = w_ref.dtype
    acc = jnp.zeros((tt, w_ref.shape[-1]), jnp.float32)
    for kk in range(k):                                # static unroll over taps
        xs = x_ref[0, pl.ds(t0 + kk * dil, tt), :]
        if relu_in:
            xs = jnp.maximum(xs, 0)
        acc = acc + jnp.dot(xs.astype(cdt), w_ref[kk],
                            preferred_element_type=jnp.float32)
    o_ref[0] = (acc + b_ref[...]).astype(o_ref.dtype)


def _resblock_kernel(x_ref, w1_ref, b1_ref, w2_ref, b2_ref, o_ref, *, dil, tt, nt, rs):
    """Fused ResConv1DBlock:  y = x + rs * (conv1x1(relu(conv3_dil(relu(x)) + b1)) + b2).

    x_ref is zero-padded by `dil` rows on each side of time; the n_state intermediate
    stays in VMEM/vregs (never written to HBM).
    """
    t0 = _time_offset(tt, nt)
    cdt = w1_ref.dtype
    acc = jnp.zeros((tt, w1_ref.shape[-1]), jnp.float32)
    for kk in range(3):
        xs = x_ref[0, pl.ds(t0 + kk * dil, tt), :]
        xs = jnp.maximum(xs, 0)
        acc = acc + jnp.dot(xs.astype(cdt), w1_ref[kk],
                            preferred_element_type=jnp.float32)
    h = jnp.maximum(acc + b1_ref[...], 0.0).astype(cdt)
    y = jnp.dot(h, w2_ref[0], preferred_element_type=jnp.float32) + b2_ref[...]
    res = x_ref[0, pl.ds(t0 + dil, tt), :].astype(jnp.float32)   # residual in f32
    o_ref[0] = (res + rs * y).astype(o_ref.dtype)


# ---------------------------------------------------------------------------
# pallas_call wrappers
# ---------------------------------------------------------------------------
def _conv_tap_call(x_tpad, w_packed, b_packed, *, k, dil, t_out, out_dtype,
                   relu_in=False):
    n, t_in, c_in_blk = x_tpad.shape
    c_out_pad = w_packed.shape[-1]
    tt = _pick_time_tile(t_out)
    nt = t_out // tt
    kern = functools.partial(_conv_tap_kernel, k=k, dil=dil, tt=tt, nt=nt,
                             relu_in=relu_in)
    flops = 2 * n * t_out * k * c_in_blk * c_out_pad
    bytes_acc = (x_tpad.size * x_tpad.dtype.itemsize
                 + w_packed.size * w_packed.dtype.itemsize
                 + b_packed.size * 4
                 + n * t_out * c_out_pad * jnp.dtype(out_dtype).itemsize)
    return pl.pallas_call(
        kern,
        out_shape=jax.ShapeDtypeStruct((n, t_out, c_out_pad), out_dtype),
        grid=(n, nt),
        in_specs=[
            pl.BlockSpec((1, t_in, c_in_blk), lambda i, j: (i, 0, 0)),       # resident / batch
            pl.BlockSpec((k, c_in_blk, c_out_pad), lambda i, j: (0, 0, 0)),  # resident weights
            pl.BlockSpec((1, c_out_pad), lambda i, j: (0, 0)),
        ],
        out_specs=pl.BlockSpec((1, tt, c_out_pad), lambda i, j: (i, j, 0)),
        compiler_params=pltpu.CompilerParams(
            dimension_semantics=("parallel", "parallel"),
            vmem_limit_bytes=_VMEM_LIMIT),
        cost_estimate=pl.CostEstimate(flops=int(flops), transcendentals=0,
                                      bytes_accessed=int(bytes_acc)),
    )(x_tpad, w_packed, b_packed)


def _resblock_call(x, w1p, b1p, w2p, b2p, *, dil, rs, out_dtype):
    n, t, c_pad = x.shape
    n_state_pad = w1p.shape[-1]
    x_tpad = jnp.pad(x, ((0, 0), (dil, dil), (0, 0)))
    t_in = t + 2 * dil
    tt = _pick_time_tile(t)
    nt = t // tt
    kern = functools.partial(_resblock_kernel, dil=dil, tt=tt, nt=nt, rs=float(rs))
    flops = 2 * n * t * (3 * c_pad * n_state_pad + n_state_pad * c_pad)
    bytes_acc = (x_tpad.size * x_tpad.dtype.itemsize
                 + w1p.size * w1p.dtype.itemsize + w2p.size * w2p.dtype.itemsize
                 + (b1p.size + b2p.size) * 4
                 + n * t * c_pad * jnp.dtype(out_dtype).itemsize)
    return pl.pallas_call(
        kern,
        out_shape=jax.ShapeDtypeStruct((n, t, c_pad), out_dtype),
        grid=(n, nt),
        in_specs=[
            pl.BlockSpec((1, t_in, c_pad), lambda i, j: (i, 0, 0)),
            pl.BlockSpec((3, c_pad, n_state_pad), lambda i, j: (0, 0, 0)),
            pl.BlockSpec((1, n_state_pad), lambda i, j: (0, 0)),
            pl.BlockSpec((1, n_state_pad, c_pad), lambda i, j: (0, 0, 0)),
            pl.BlockSpec((1, c_pad), lambda i, j: (0, 0)),
        ],
        out_specs=pl.BlockSpec((1, tt, c_pad), lambda i, j: (i, j, 0)),
        compiler_params=pltpu.CompilerParams(
            dimension_semantics=("parallel", "parallel"),
            vmem_limit_bytes=_VMEM_LIMIT),
        cost_estimate=pl.CostEstimate(flops=int(flops), transcendentals=0,
                                      bytes_accessed=int(bytes_acc)),
    )(x_tpad, w1p, b1p, w2p, b2p)


# ---------------------------------------------------------------------------
# Weight packing (layout plumbing, traced once under jit)
# ---------------------------------------------------------------------------
def _pack_tap_weight(w, c_in_pad, c_out_pad, dtype):
    """PyTorch (C_out, C_in, K) -> (K, c_in_pad, c_out_pad), zero padded."""
    c_out, c_in, k = w.shape
    wt = jnp.transpose(w, (2, 1, 0))
    wt = jnp.pad(wt, ((0, 0), (0, c_in_pad - c_in), (0, c_out_pad - c_out)))
    return wt.astype(dtype)


def _pack_bias(b, c_out_pad):
    return jnp.pad(b, (0, c_out_pad - b.shape[0])).reshape(1, c_out_pad).astype(jnp.float32)


def _pack_down_weight(w, stride, pad, c_in_slot_pad, c_out_pad, dtype):
    """Strided conv (kernel k, stride s, pad p) re-expressed as a 3-tap stride-1 conv over
    the time axis reshaped (T, Cpad) -> (T//s, s*Cpad). Row offset d in {-1,0,1}, slot j:
    original tap kappa = d*s + j + p (zero weight when out of range)."""
    c_out, c_in, k = w.shape
    wp = jnp.zeros((3, stride * c_in_slot_pad, c_out_pad), jnp.float32)
    for drow in range(3):
        for j in range(stride):
            kappa = (drow - 1) * stride + j + pad
            if 0 <= kappa < k:
                wp = wp.at[drow,
                           j * c_in_slot_pad:j * c_in_slot_pad + c_in,
                           :c_out].set(jnp.transpose(w[:, :, kappa]))
    return wp.astype(dtype)


# ---------------------------------------------------------------------------
# Parameter init (deterministic, PyTorch-default-like uniform) and forward
# ---------------------------------------------------------------------------
def init_conv_params(key, c_out, c_in, k):
    k1, k2 = jax.random.split(key)
    bound = 1.0 / math.sqrt(c_in * k)
    w = jax.random.uniform(k1, (c_out, c_in, k), jnp.float32, -bound, bound)
    b = jax.random.uniform(k2, (c_out,), jnp.float32, -bound, bound)
    return w, b


def make_encoder_params(key, input_emb_width, output_emb_width, down_t, stride_t,
                        width, depth, m_conv):
    params = {"down": []}
    filter_t = stride_t * 2
    n_state = int(m_conv * width)
    for i in range(down_t):
        key, kd = jax.random.split(key)
        c_in = input_emb_width if i == 0 else width
        down_conv = init_conv_params(kd, width, c_in, filter_t)
        res_blocks = []
        for _ in range(depth):
            key, k1, k2 = jax.random.split(key, 3)
            res_blocks.append({
                "conv1": init_conv_params(k1, n_state, width, 3),   # ReLU -> Conv(3, dil)
                "conv2": init_conv_params(k2, width, n_state, 1),   # ReLU -> Conv(1)
            })
        params["down"].append({"conv": down_conv, "res": res_blocks})
    key, kf = jax.random.split(key)
    params["final"] = init_conv_params(kf, output_emb_width, width, 3)
    return params


def encoder_forward(params, x_nct, *, stride_t, depth, dilation_growth_rate=1,
                    dilation_cycle=None, res_scale=False,
                    compute_dtype=jnp.bfloat16):
    """Matches Encoder.forward: (N, in_emb, T) -> (N, out_emb, T // stride_t**down_t)."""
    n, c_in0, t = x_nct.shape
    in_dtype = x_nct.dtype
    rs = 1.0 if not res_scale else 1.0 / math.sqrt(depth)

    s = stride_t
    pad_t = s // 2
    filter_t = s * 2

    # NCT -> NTC, lane-pad channels to a multiple of 128; activations flow in compute_dtype.
    x = jnp.transpose(x_nct, (0, 2, 1))
    x = jnp.pad(x, ((0, 0), (0, 0), (0, _round_up(c_in0, LANE) - c_in0)))
    x = x.astype(compute_dtype)

    for blk in params["down"]:
        w_d, b_d = blk["conv"]
        width = w_d.shape[0]
        width_pad = _round_up(width, LANE)
        cur_c_pad = x.shape[-1]

        # ---- strided downsample conv via reshape -> 3-tap stride-1 conv -------------
        assert t % s == 0, "time length must be divisible by stride_t"
        t_out = (t + 2 * pad_t - filter_t) // s + 1
        xr = x.reshape(n, t // s, s * cur_c_pad)
        xr = jnp.pad(xr, ((0, 0), (1, 1), (0, 0)))
        wdp = _pack_down_weight(w_d, s, pad_t, cur_c_pad, width_pad, compute_dtype)
        bdp = _pack_bias(b_d, width_pad)
        x = _conv_tap_call(xr, wdp, bdp, k=3, dil=1, t_out=t_out,
                           out_dtype=compute_dtype)
        t = t_out

        # ---- fused Resnet1D blocks ---------------------------------------------------
        for d, rb in enumerate(blk["res"]):
            dil = dilation_growth_rate ** (
                d if dilation_cycle is None else d % dilation_cycle)
            w1, b1 = rb["conv1"]
            w2, b2 = rb["conv2"]
            n_state_pad = _round_up(w1.shape[0], LANE)
            w1p = _pack_tap_weight(w1, width_pad, n_state_pad, compute_dtype)
            b1p = _pack_bias(b1, n_state_pad)
            w2p = _pack_tap_weight(w2, n_state_pad, width_pad, compute_dtype)
            b2p = _pack_bias(b2, width_pad)
            x = _resblock_call(x, w1p, b1p, w2p, b2p, dil=dil, rs=rs,
                               out_dtype=compute_dtype)

    # ---- final conv: width -> output_emb_width, k=3, stride 1, pad 1 ------------------
    wf, bf = params["final"]
    c_out = wf.shape[0]
    c_out_pad = _round_up(c_out, LANE)
    wfp = _pack_tap_weight(wf, x.shape[-1], c_out_pad, compute_dtype)
    bfp = _pack_bias(bf, c_out_pad)
    xf = jnp.pad(x, ((0, 0), (1, 1), (0, 0)))
    y = _conv_tap_call(xf, wfp, bfp, k=3, dil=1, t_out=t, out_dtype=jnp.float32)
    y = y[..., :c_out].astype(in_dtype)
    return jnp.transpose(y, (0, 2, 1))  # NTC -> NCT


# ---------------------------------------------------------------------------
# Pure-JAX reference (lax.conv_general_dilated) for correctness check
# ---------------------------------------------------------------------------
def _conv1d_ref(x_nct, w, b, stride, pad, dilation=1):
    y = lax.conv_general_dilated(x_nct, w, (stride,), [(pad, pad)],
                                 rhs_dilation=(dilation,),
                                 dimension_numbers=("NCT", "OIT", "NCT"))
    return y + b[None, :, None]


def encoder_ref(params, x_nct, *, stride_t, depth, dilation_growth_rate=1,
                dilation_cycle=None, res_scale=False):
    x = x_nct
    pad_t = stride_t // 2
    rs = 1.0 if not res_scale else 1.0 / math.sqrt(depth)
    for blk in params["down"]:
        w, b = blk["conv"]
        x = _conv1d_ref(x, w, b, stride_t, pad_t)
        for d, rb in enumerate(blk["res"]):
            dil = dilation_growth_rate ** (
                d if dilation_cycle is None else d % dilation_cycle)
            w1, b1 = rb["conv1"]
            w2, b2 = rb["conv2"]
            h = _conv1d_ref(jnp.maximum(x, 0.0), w1, b1, 1, dil, dil)
            x = x + rs * _conv1d_ref(jnp.maximum(h, 0.0), w2, b2, 1, 0)
    wf, bf = params["final"]
    return _conv1d_ref(x, wf, bf, 1, 1)


if __name__ == "__main__":
    # Small config consistent with Encoder(input_emb_width, output_emb_width,
    #                                      down_t, stride_t, block_kwargs)
    N, T = 2, 16
    input_emb_width, output_emb_width = 4, 8
    down_t, stride_t = 2, 2
    width, depth, m_conv = 32, 2, 1.0
    dgr, dcycle = 3, None          # exercise dilation > 1 in the res blocks

    key = jax.random.PRNGKey(0)
    kx, kp = jax.random.split(key)
    x = jax.random.normal(kx, (N, input_emb_width, T), jnp.float32)
    params = make_encoder_params(kp, input_emb_width, output_emb_width,
                                 down_t, stride_t, width, depth, m_conv)

    common = dict(stride_t=stride_t, depth=depth, dilation_growth_rate=dgr,
                  dilation_cycle=dcycle, res_scale=False)

    expected_shape = (N, output_emb_width, T // stride_t ** down_t)
    ref = encoder_ref(params, x, **common)
    scale = float(jnp.max(jnp.abs(ref)))

    # f32 path: exact verification of the kernel math.
    fwd_f32 = jax.jit(functools.partial(encoder_forward,
                                        compute_dtype=jnp.float32, **common))
    out_f32 = jax.block_until_ready(fwd_f32(params, x))
    assert out_f32.shape == expected_shape, (out_f32.shape, expected_shape)
    err32 = float(jnp.max(jnp.abs(out_f32 - ref)))
    assert err32 < 2e-4, err32

    # bf16 path: the performance default (bf16 activations/weights, f32 accumulation).
    fwd_bf16 = jax.jit(functools.partial(encoder_forward,
                                         compute_dtype=jnp.bfloat16, **common))
    out_bf16 = jax.block_until_ready(fwd_bf16(params, x))
    assert out_bf16.shape == expected_shape, (out_bf16.shape, expected_shape)
    err16 = float(jnp.max(jnp.abs(out_bf16 - ref)))
    assert err16 < 0.1 * scale + 0.05, (err16, scale)

    print("KERNEL_OK")
</pallas_src>

<mosaic_0001>
module attributes {stable_mosaic.version = 11 : i64} {
  func.func @_conv_tap_kernel(%arg0: i32, %arg1: i32, %arg2: memref<1x10x256xf32, #tpu.memory_space<vmem>>, %arg3: memref<3x256x128xf32, #tpu.memory_space<vmem>>, %arg4: memref<1x128xf32, #tpu.memory_space<vmem>>, %arg5: memref<1x8x128xf32, #tpu.memory_space<vmem>>) attributes {dimension_semantics = [#tpu.dimension_semantics<parallel>, #tpu.dimension_semantics<parallel>], iteration_bounds = array<i64: 2, 1>, scalar_prefetch = 0 : i64, scratch_operands = 0 : i64, tpu.core_type = #tpu.core_type<tc>, window_params = [{transform_indices = @transform_0, window_bounds = array<i64: 1, 10, 256>}, {pipeline_mode = #tpu.pipeline_mode<synchronous>, transform_indices = @transform_1, window_bounds = array<i64: 3, 256, 128>}, {pipeline_mode = #tpu.pipeline_mode<synchronous>, transform_indices = @transform_2, window_bounds = array<i64: 1, 128>}, {transform_indices = @transform_3, window_bounds = array<i64: 1, 8, 128>}]} {
    %cst = arith.constant 0.000000e+00 : f32
    %0 = vector.broadcast %cst : f32 to vector<8x128xf32>
    %c0 = arith.constant 0 : index
    %c0_0 = arith.constant 0 : index
    %c0_1 = arith.constant 0 : index
    %1 = vector.load %arg2[%c0, %c0_0, %c0_1] : memref<1x10x256xf32, #tpu.memory_space<vmem>>, vector<1x8x256xf32>
    %2 = vector.shape_cast %1 : vector<1x8x256xf32> to vector<8x256xf32>
    %c0_2 = arith.constant 0 : index
    %c0_3 = arith.constant 0 : index
    %c0_4 = arith.constant 0 : index
    %3 = vector.load %arg3[%c0_2, %c0_3, %c0_4] : memref<3x256x128xf32, #tpu.memory_space<vmem>>, vector<1x256x128xf32>
    %4 = vector.shape_cast %3 : vector<1x256x128xf32> to vector<256x128xf32>
    %cst_5 = arith.constant dense<0.000000e+00> : vector<8x128xf32>
    %5 = tpu.matmul %2, %4, %cst_5 {dimension_numbers = #tpu.dot_dimension_numbers<[1], [0], [0], [1], [0, 0, 1, 1], [], []>} : vector<8x256xf32>, vector<256x128xf32>, vector<8x128xf32> -> vector<8x128xf32>
    %6 = arith.addf %0, %5 : vector<8x128xf32>
    %c0_6 = arith.constant 0 : index
    %c1 = arith.constant 1 : index
    %c0_7 = arith.constant 0 : index
    %7 = vector.load %arg2[%c0_6, %c1, %c0_7] : memref<1x10x256xf32, #tpu.memory_space<vmem>>, vector<1x8x256xf32>
    %8 = vector.shape_cast %7 : vector<1x8x256xf32> to vector<8x256xf32>
    %c1_8 = arith.constant 1 : index
    %c0_9 = arith.constant 0 : index
    %c0_10 = arith.constant 0 : index
    %9 = vector.load %arg3[%c1_8, %c0_9, %c0_10] : memref<3x256x128xf32, #tpu.memory_space<vmem>>, vector<1x256x128xf32>
    %10 = vector.shape_cast %9 : vector<1x256x128xf32> to vector<256x128xf32>
    %cst_11 = arith.constant dense<0.000000e+00> : vector<8x128xf32>
    %11 = tpu.matmul %8, %10, %cst_11 {dimension_numbers = #tpu.dot_dimension_numbers<[1], [0], [0], [1], [0, 0, 1, 1], [], []>} : vector<8x256xf32>, vector<256x128xf32>, vector<8x128xf32> -> vector<8x128xf32>
    %12 = arith.addf %6, %11 : vector<8x128xf32>
    %c0_12 = arith.constant 0 : index
    %c2 = arith.constant 2 : index
    %c0_13 = arith.constant 0 : index
    %13 = vector.load %arg2[%c0_12, %c2, %c0_13] : memref<1x10x256xf32, #tpu.memory_space<vmem>>, vector<1x8x256xf32>
    %14 = vector.shape_cast %13 : vector<1x8x256xf32> to vector<8x256xf32>
    %c2_14 = arith.constant 2 : index
    %c0_15 = arith.constant 0 : index
    %c0_16 = arith.constant 0 : index
    %15 = vector.load %arg3[%c2_14, %c0_15, %c0_16] : memref<3x256x128xf32, #tpu.memory_space<vmem>>, vector<1x256x128xf32>
    %16 = vector.shape_cast %15 : vector<1x256x128xf32> to vector<256x128xf32>
    %cst_17 = arith.constant dense<0.000000e+00> : vector<8x128xf32>
    %17 = tpu.matmul %14, %16, %cst_17 {dimension_numbers = #tpu.dot_dimension_numbers<[1], [0], [0], [1], [0, 0, 1, 1], [], []>} : vector<8x256xf32>, vector<256x128xf32>, vector<8x128xf32> -> vector<8x128xf32>
    %18 = arith.addf %12, %17 : vector<8x128xf32>
    %c0_18 = arith.constant 0 : index
    %c0_19 = arith.constant 0 : index
    %19 = vector.load %arg4[%c0_18, %c0_19] : memref<1x128xf32, #tpu.memory_space<vmem>>, vector<1x128xf32>
    %20 = vector.broadcast %19 : vector<1x128xf32> to vector<8x128xf32>
    %21 = arith.addf %18, %20 : vector<8x128xf32>
    %c0_20 = arith.constant 0 : index
    %c0_21 = arith.constant 0 : index
    %c0_22 = arith.constant 0 : index
    %22 = vector.load %arg5[%c0_20, %c0_21, %c0_22] : memref<1x8x128xf32, #tpu.memory_space<vmem>>, vector<1x8x128xf32>
    %23 = vector.shape_cast %22 : vector<1x8x128xf32> to vector<8x128xf32>
    %24 = vector.shape_cast %21 : vector<8x128xf32> to vector<1x8x128xf32>
    tpu.vector_store %arg5[%c0_20, %c0_21, %c0_22], %24 {strides = array<i32>} : memref<1x8x128xf32, #tpu.memory_space<vmem>>, vector<1x8x128xf32>,
    return
  }
  func.func @transform_0(%arg0: i32, %arg1: i32) -> (i32, i32, i32) {
    %c0_i32 = arith.constant 0 : i32
    %c0_i32_0 = arith.constant 0 : i32
    %c0_i32_1 = arith.constant 0 : i32
    return %arg0, %c0_i32, %c0_i32_0 : i32, i32, i32
  }
  func.func @transform_1(%arg0: i32, %arg1: i32) -> (i32, i32, i32) {
    %c0_i32 = arith.constant 0 : i32
    %c0_i32_0 = arith.constant 0 : i32
    %c0_i32_1 = arith.constant 0 : i32
    %c0_i32_2 = arith.constant 0 : i32
    return %c0_i32, %c0_i32_0, %c0_i32_1 : i32, i32, i32
  }
  func.func @transform_2(%arg0: i32, %arg1: i32) -> (i32, i32) {
    %c0_i32 = arith.constant 0 : i32
    %c0_i32_0 = arith.constant 0 : i32
    %c0_i32_1 = arith.constant 0 : i32
    return %c0_i32, %c0_i32_0 : i32, i32
  }
  func.func @transform_3(%arg0: i32, %arg1: i32) -> (i32, i32, i32) {
    %c0_i32 = arith.constant 0 : i32
    %c0_i32_0 = arith.constant 0 : i32
    return %arg0, %arg1, %c0_i32 : i32, i32, i32
  }
}

module attributes {stable_mosaic.version = 11 : i64} {
  func.func @_resblock_kernel(%arg0: i32, %arg1: i32, %arg2: memref<1x10x128xf32, #tpu.memory_space<vmem>>, %arg3: memref<3x128x128xf32, #tpu.memory_space<vmem>>, %arg4: memref<1x128xf32, #tpu.memory_space<vmem>>, %arg5: memref<1x128x128xf32, #tpu.memory_space<vmem>>, %arg6: memref<1x128xf32, #tpu.memory_space<vmem>>, %arg7: memref<1x8x128xf32, #tpu.memory_space<vmem>>) attributes {dimension_semantics = [#tpu.dimension_semantics<parallel>, #tpu.dimension_semantics<parallel>], iteration_bounds = array<i64: 2, 1>, scalar_prefetch = 0 : i64, scratch_operands = 0 : i64, tpu.core_type = #tpu.core_type<tc>, window_params = [{transform_indices = @transform_0, window_bounds = array<i64: 1, 10, 128>}, {pipeline_mode = #tpu.pipeline_mode<synchronous>, transform_indices = @transform_1, window_bounds = array<i64: 3, 128, 128>}, {pipeline_mode = #tpu.pipeline_mode<synchronous>, transform_indices = @transform_2, window_bounds = array<i64: 1, 128>}, {pipeline_mode = #tpu.pipeline_mode<synchronous>, transform_indices = @transform_3, window_bounds = array<i64: 1, 128, 128>}, {pipeline_mode = #tpu.pipeline_mode<synchronous>, transform_indices = @transform_4, window_bounds = array<i64: 1, 128>}, {transform_indices = @transform_5, window_bounds = array<i64: 1, 8, 128>}]} {
    %cst = arith.constant 0.000000e+00 : f32
    %0 = vector.broadcast %cst : f32 to vector<8x128xf32>
    %c0 = arith.constant 0 : index
    %c0_0 = arith.constant 0 : index
    %c0_1 = arith.constant 0 : index
    %1 = vector.load %arg2[%c0, %c0_0, %c0_1] : memref<1x10x128xf32, #tpu.memory_space<vmem>>, vector<1x8x128xf32>
    %2 = vector.shape_cast %1 : vector<1x8x128xf32> to vector<8x128xf32>
    %cst_2 = arith.constant 0.000000e+00 : f32
    %3 = vector.broadcast %cst_2 : f32 to vector<8x128xf32>
    %4 = arith.maximumf %2, %3 : vector<8x128xf32>
    %c0_3 = arith.constant 0 : index
    %c0_4 = arith.constant 0 : index
    %c0_5 = arith.constant 0 : index
    %5 = vector.load %arg3[%c0_3, %c0_4, %c0_5] : memref<3x128x128xf32, #tpu.memory_space<vmem>>, vector<1x128x128xf32>
    %6 = vector.shape_cast %5 : vector<1x128x128xf32> to vector<128x128xf32>
    %cst_6 = arith.constant dense<0.000000e+00> : vector<8x128xf32>
    %7 = tpu.matmul %4, %6, %cst_6 {dimension_numbers = #tpu.dot_dimension_numbers<[1], [0], [0], [1], [0, 0, 1, 1], [], []>} : vector<8x128xf32>, vector<128x128xf32>, vector<8x128xf32> -> vector<8x128xf32>
    %8 = arith.addf %0, %7 : vector<8x128xf32>
    %c0_7 = arith.constant 0 : index
    %c1 = arith.constant 1 : index
    %c0_8 = arith.constant 0 : index
    %9 = vector.load %arg2[%c0_7, %c1, %c0_8] : memref<1x10x128xf32, #tpu.memory_space<vmem>>, vector<1x8x128xf32>
    %10 = vector.shape_cast %9 : vector<1x8x128xf32> to vector<8x128xf32>
    %cst_9 = arith.constant 0.000000e+00 : f32
    %11 = vector.broadcast %cst_9 : f32 to vector<8x128xf32>
    %12 = arith.maximumf %10, %11 : vector<8x128xf32>
    %c1_10 = arith.constant 1 : index
    %c0_11 = arith.constant 0 : index
    %c0_12 = arith.constant 0 : index
    %13 = vector.load %arg3[%c1_10, %c0_11, %c0_12] : memref<3x128x128xf32, #tpu.memory_space<vmem>>, vector<1x128x128xf32>
    %14 = vector.shape_cast %13 : vector<1x128x128xf32> to vector<128x128xf32>
    %cst_13 = arith.constant dense<0.000000e+00> : vector<8x128xf32>
    %15 = tpu.matmul %12, %14, %cst_13 {dimension_numbers = #tpu.dot_dimension_numbers<[1], [0], [0], [1], [0, 0, 1, 1], [], []>} : vector<8x128xf32>, vector<128x128xf32>, vector<8x128xf32> -> vector<8x128xf32>
    %16 = arith.addf %8, %15 : vector<8x128xf32>
    %c0_14 = arith.constant 0 : index
    %c2 = arith.constant 2 : index
    %c0_15 = arith.constant 0 : index
    %17 = vector.load %arg2[%c0_14, %c2, %c0_15] : memref<1x10x128xf32, #tpu.memory_space<vmem>>, vector<1x8x128xf32>
    %18 = vector.shape_cast %17 : vector<1x8x128xf32> to vector<8x128xf32>
    %cst_16 = arith.constant 0.000000e+00 : f32
    %19 = vector.broadcast %cst_16 : f32 to vector<8x128xf32>
    %20 = arith.maximumf %18, %19 : vector<8x128xf32>
    %c2_17 = arith.constant 2 : index
    %c0_18 = arith.constant 0 : index
    %c0_19 = arith.constant 0 : index
    %21 = vector.load %arg3[%c2_17, %c0_18, %c0_19] : memref<3x128x128xf32, #tpu.memory_space<vmem>>, vector<1x128x128xf32>
    %22 = vector.shape_cast %21 : vector<1x128x128xf32> to vector<128x128xf32>
    %cst_20 = arith.constant dense<0.000000e+00> : vector<8x128xf32>
    %23 = tpu.matmul %20, %22, %cst_20 {dimension_numbers = #tpu.dot_dimension_numbers<[1], [0], [0], [1], [0, 0, 1, 1], [], []>} : vector<8x128xf32>, vector<128x128xf32>, vector<8x128xf32> -> vector<8x128xf32>
    %24 = arith.addf %16, %23 : vector<8x128xf32>
    %c0_21 = arith.constant 0 : index
    %c0_22 = arith.constant 0 : index
    %25 = vector.load %arg4[%c0_21, %c0_22] : memref<1x128xf32, #tpu.memory_space<vmem>>, vector<1x128xf32>
    %26 = vector.broadcast %25 : vector<1x128xf32> to vector<8x128xf32>
    %27 = arith.addf %24, %26 : vector<8x128xf32>
    %cst_23 = arith.constant 0.000000e+00 : f32
    %28 = vector.broadcast %cst_23 : f32 to vector<8x128xf32>
    %29 = arith.maximumf %27, %28 : vector<8x128xf32>
    %c0_24 = arith.constant 0 : index
    %c0_25 = arith.constant 0 : index
    %c0_26 = arith.constant 0 : index
    %30 = vector.load %arg5[%c0_24, %c0_25, %c0_26] : memref<1x128x128xf32, #tpu.memory_space<vmem>>, vector<1x128x128xf32>
    %31 = vector.shape_cast %30 : vector<1x128x128xf32> to vector<128x128xf32>
    %cst_27 = arith.constant dense<0.000000e+00> : vector<8x128xf32>
    %32 = tpu.matmul %29, %31, %cst_27 {dimension_numbers = #tpu.dot_dimension_numbers<[1], [0], [0], [1], [0, 0, 1, 1], [], []>} : vector<8x128xf32>, vector<128x128xf32>, vector<8x128xf32> -> vector<8x128xf32>
    %c0_28 = arith.constant 0 : index
    %c0_29 = arith.constant 0 : index
    %33 = vector.load %arg6[%c0_28, %c0_29] : memref<1x128xf32, #tpu.memory_space<vmem>>, vector<1x128xf32>
    %34 = vector.broadcast %33 : vector<1x128xf32> to vector<8x128xf32>
    %35 = arith.addf %32, %34 : vector<8x128xf32>
    %c0_30 = arith.constant 0 : index
    %c1_31 = arith.constant 1 : index
    %c0_32 = arith.constant 0 : index
    %36 = vector.load %arg2[%c0_30, %c1_31, %c0_32] : memref<1x10x128xf32, #tpu.memory_space<vmem>>, vector<1x8x128xf32>
    %37 = vector.shape_cast %36 : vector<1x8x128xf32> to vector<8x128xf32>
    %cst_33 = arith.constant 1.000000e+00 : f32
    %38 = vector.broadcast %cst_33 : f32 to vector<8x128xf32>
    %39 = arith.mulf %38, %35 : vector<8x128xf32>
    %40 = arith.addf %37, %39 : vector<8x128xf32>
    %c0_34 = arith.constant 0 : index
    %c0_35 = arith.constant 0 : index
    %c0_36 = arith.constant 0 : index
    %41 = vector.load %arg7[%c0_34, %c0_35, %c0_36] : memref<1x8x128xf32, #tpu.memory_space<vmem>>, vector<1x8x128xf32>
    %42 = vector.shape_cast %41 : vector<1x8x128xf32> to vector<8x128xf32>
    %43 = vector.shape_cast %40 : vector<8x128xf32> to vector<1x8x128xf32>
    tpu.vector_store %arg7[%c0_34, %c0_35, %c0_36], %43 {strides = array<i32>} : memref<1x8x128xf32, #tpu.memory_space<vmem>>, vector<1x8x128xf32>,
    return
  }
  func.func @transform_0(%arg0: i32, %arg1: i32) -> (i32, i32, i32) {
    %c0_i32 = arith.constant 0 : i32
    %c0_i32_0 = arith.constant 0 : i32
    %c0_i32_1 = arith.constant 0 : i32
    return %arg0, %c0_i32, %c0_i32_0 : i32, i32, i32
  }
  func.func @transform_1(%arg0: i32, %arg1: i32) -> (i32, i32, i32) {
    %c0_i32 = arith.constant 0 : i32
    %c0_i32_0 = arith.constant 0 : i32
    %c0_i32_1 = arith.constant 0 : i32
    %c0_i32_2 = arith.constant 0 : i32
    return %c0_i32, %c0_i32_0, %c0_i32_1 : i32, i32, i32
  }
  func.func @transform_2(%arg0: i32, %arg1: i32) -> (i32, i32) {
    %c0_i32 = arith.constant 0 : i32
    %c0_i32_0 = arith.constant 0 : i32
    %c0_i32_1 = arith.constant 0 : i32
    return %c0_i32, %c0_i32_0 : i32, i32
  }
  func.func @transform_3(%arg0: i32, %arg1: i32) -> (i32, i32, i32) {
    %c0_i32 = arith.constant 0 : i32
    %c0_i32_0 = arith.constant 0 : i32
    %c0_i32_1 = arith.constant 0 : i32
    %c0_i32_2 = arith.constant 0 : i32
    return %c0_i32, %c0_i32_0, %c0_i32_1 : i32, i32, i32
  }
  func.func @transform_4(%arg0: i32, %arg1: i32) -> (i32, i32) {
    %c0_i32 = arith.constant 0 : i32
    %c0_i32_0 = arith.constant 0 : i32
    %c0_i32_1 = arith.constant 0 : i32
    return %c0_i32, %c0_i32_0 : i32, i32
  }
  func.func @transform_5(%arg0: i32, %arg1: i32) -> (i32, i32, i32) {
    %c0_i32 = arith.constant 0 : i32
    %c0_i32_0 = arith.constant 0 : i32
    return %arg0, %arg1, %c0_i32 : i32, i32, i32
  }
}

module attributes {stable_mosaic.version = 11 : i64} {
  func.func @_resblock_kernel(%arg0: i32, %arg1: i32, %arg2: memref<1x14x128xf32, #tpu.memory_space<vmem>>, %arg3: memref<3x128x128xf32, #tpu.memory_space<vmem>>, %arg4: memref<1x128xf32, #tpu.memory_space<vmem>>, %arg5: memref<1x128x128xf32, #tpu.memory_space<vmem>>, %arg6: memref<1x128xf32, #tpu.memory_space<vmem>>, %arg7: memref<1x8x128xf32, #tpu.memory_space<vmem>>) attributes {dimension_semantics = [#tpu.dimension_semantics<parallel>, #tpu.dimension_semantics<parallel>], iteration_bounds = array<i64: 2, 1>, scalar_prefetch = 0 : i64, scratch_operands = 0 : i64, tpu.core_type = #tpu.core_type<tc>, window_params = [{transform_indices = @transform_0, window_bounds = array<i64: 1, 14, 128>}, {pipeline_mode = #tpu.pipeline_mode<synchronous>, transform_indices = @transform_1, window_bounds = array<i64: 3, 128, 128>}, {pipeline_mode = #tpu.pipeline_mode<synchronous>, transform_indices = @transform_2, window_bounds = array<i64: 1, 128>}, {pipeline_mode = #tpu.pipeline_mode<synchronous>, transform_indices = @transform_3, window_bounds = array<i64: 1, 128, 128>}, {pipeline_mode = #tpu.pipeline_mode<synchronous>, transform_indices = @transform_4, window_bounds = array<i64: 1, 128>}, {transform_indices = @transform_5, window_bounds = array<i64: 1, 8, 128>}]} {
    %cst = arith.constant 0.000000e+00 : f32
    %0 = vector.broadcast %cst : f32 to vector<8x128xf32>
    %c0 = arith.constant 0 : index
    %c0_0 = arith.constant 0 : index
    %c0_1 = arith.constant 0 : index
    %1 = vector.load %arg2[%c0, %c0_0, %c0_1] : memref<1x14x128xf32, #tpu.memory_space<vmem>>, vector<1x8x128xf32>
    %2 = vector.shape_cast %1 : vector<1x8x128xf32> to vector<8x128xf32>
    %cst_2 = arith.constant 0.000000e+00 : f32
    %3 = vector.broadcast %cst_2 : f32 to vector<8x128xf32>
    %4 = arith.maximumf %2, %3 : vector<8x128xf32>
    %c0_3 = arith.constant 0 : index
    %c0_4 = arith.constant 0 : index
    %c0_5 = arith.constant 0 : index
    %5 = vector.load %arg3[%c0_3, %c0_4, %c0_5] : memref<3x128x128xf32, #tpu.memory_space<vmem>>, vector<1x128x128xf32>
    %6 = vector.shape_cast %5 : vector<1x128x128xf32> to vector<128x128xf32>
    %cst_6 = arith.constant dense<0.000000e+00> : vector<8x128xf32>
    %7 = tpu.matmul %4, %6, %cst_6 {dimension_numbers = #tpu.dot_dimension_numbers<[1], [0], [0], [1], [0, 0, 1, 1], [], []>} : vector<8x128xf32>, vector<128x128xf32>, vector<8x128xf32> -> vector<8x128xf32>
    %8 = arith.addf %0, %7 : vector<8x128xf32>
    %c0_7 = arith.constant 0 : index
    %c3 = arith.constant 3 : index
    %c0_8 = arith.constant 0 : index
    %9 = vector.load %arg2[%c0_7, %c3, %c0_8] : memref<1x14x128xf32, #tpu.memory_space<vmem>>, vector<1x8x128xf32>
    %10 = vector.shape_cast %9 : vector<1x8x128xf32> to vector<8x128xf32>
    %cst_9 = arith.constant 0.000000e+00 : f32
    %11 = vector.broadcast %cst_9 : f32 to vector<8x128xf32>
    %12 = arith.maximumf %10, %11 : vector<8x128xf32>
    %c1 = arith.constant 1 : index
    %c0_10 = arith.constant 0 : index
    %c0_11 = arith.constant 0 : index
    %13 = vector.load %arg3[%c1, %c0_10, %c0_11] : memref<3x128x128xf32, #tpu.memory_space<vmem>>, vector<1x128x128xf32>
    %14 = vector.shape_cast %13 : vector<1x128x128xf32> to vector<128x128xf32>
    %cst_12 = arith.constant dense<0.000000e+00> : vector<8x128xf32>
    %15 = tpu.matmul %12, %14, %cst_12 {dimension_numbers = #tpu.dot_dimension_numbers<[1], [0], [0], [1], [0, 0, 1, 1], [], []>} : vector<8x128xf32>, vector<128x128xf32>, vector<8x128xf32> -> vector<8x128xf32>
    %16 = arith.addf %8, %15 : vector<8x128xf32>
    %c0_13 = arith.constant 0 : index
    %c6 = arith.constant 6 : index
    %c0_14 = arith.constant 0 : index
    %17 = vector.load %arg2[%c0_13, %c6, %c0_14] : memref<1x14x128xf32, #tpu.memory_space<vmem>>, vector<1x8x128xf32>
    %18 = vector.shape_cast %17 : vector<1x8x128xf32> to vector<8x128xf32>
    %cst_15 = arith.constant 0.000000e+00 : f32
    %19 = vector.broadcast %cst_15 : f32 to vector<8x128xf32>
    %20 = arith.maximumf %18, %19 : vector<8x128xf32>
    %c2 = arith.constant 2 : index
    %c0_16 = arith.constant 0 : index
    %c0_17 = arith.constant 0 : index
    %21 = vector.load %arg3[%c2, %c0_16, %c0_17] : memref<3x128x128xf32, #tpu.memory_space<vmem>>, vector<1x128x128xf32>
    %22 = vector.shape_cast %21 : vector<1x128x128xf32> to vector<128x128xf32>
    %cst_18 = arith.constant dense<0.000000e+00> : vector<8x128xf32>
    %23 = tpu.matmul %20, %22, %cst_18 {dimension_numbers = #tpu.dot_dimension_numbers<[1], [0], [0], [1], [0, 0, 1, 1], [], []>} : vector<8x128xf32>, vector<128x128xf32>, vector<8x128xf32> -> vector<8x128xf32>
    %24 = arith.addf %16, %23 : vector<8x128xf32>
    %c0_19 = arith.constant 0 : index
    %c0_20 = arith.constant 0 : index
    %25 = vector.load %arg4[%c0_19, %c0_20] : memref<1x128xf32, #tpu.memory_space<vmem>>, vector<1x128xf32>
    %26 = vector.broadcast %25 : vector<1x128xf32> to vector<8x128xf32>
    %27 = arith.addf %24, %26 : vector<8x128xf32>
    %cst_21 = arith.constant 0.000000e+00 : f32
    %28 = vector.broadcast %cst_21 : f32 to vector<8x128xf32>
    %29 = arith.maximumf %27, %28 : vector<8x128xf32>
    %c0_22 = arith.constant 0 : index
    %c0_23 = arith.constant 0 : index
    %c0_24 = arith.constant 0 : index
    %30 = vector.load %arg5[%c0_22, %c0_23, %c0_24] : memref<1x128x128xf32, #tpu.memory_space<vmem>>, vector<1x128x128xf32>
    %31 = vector.shape_cast %30 : vector<1x128x128xf32> to vector<128x128xf32>
    %cst_25 = arith.constant dense<0.000000e+00> : vector<8x128xf32>
    %32 = tpu.matmul %29, %31, %cst_25 {dimension_numbers = #tpu.dot_dimension_numbers<[1], [0], [0], [1], [0, 0, 1, 1], [], []>} : vector<8x128xf32>, vector<128x128xf32>, vector<8x128xf32> -> vector<8x128xf32>
    %c0_26 = arith.constant 0 : index
    %c0_27 = arith.constant 0 : index
    %33 = vector.load %arg6[%c0_26, %c0_27] : memref<1x128xf32, #tpu.memory_space<vmem>>, vector<1x128xf32>
    %34 = vector.broadcast %33 : vector<1x128xf32> to vector<8x128xf32>
    %35 = arith.addf %32, %34 : vector<8x128xf32>
    %c0_28 = arith.constant 0 : index
    %c3_29 = arith.constant 3 : index
    %c0_30 = arith.constant 0 : index
    %36 = vector.load %arg2[%c0_28, %c3_29, %c0_30] : memref<1x14x128xf32, #tpu.memory_space<vmem>>, vector<1x8x128xf32>
    %37 = vector.shape_cast %36 : vector<1x8x128xf32> to vector<8x128xf32>
    %cst_31 = arith.constant 1.000000e+00 : f32
    %38 = vector.broadcast %cst_31 : f32 to vector<8x128xf32>
    %39 = arith.mulf %38, %35 : vector<8x128xf32>
    %40 = arith.addf %37, %39 : vector<8x128xf32>
    %c0_32 = arith.constant 0 : index
    %c0_33 = arith.constant 0 : index
    %c0_34 = arith.constant 0 : index
    %41 = vector.load %arg7[%c0_32, %c0_33, %c0_34] : memref<1x8x128xf32, #tpu.memory_space<vmem>>, vector<1x8x128xf32>
    %42 = vector.shape_cast %41 : vector<1x8x128xf32> to vector<8x128xf32>
    %43 = vector.shape_cast %40 : vector<8x128xf32> to vector<1x8x128xf32>
    tpu.vector_store %arg7[%c0_32, %c0_33, %c0_34], %43 {strides = array<i32>} : memref<1x8x128xf32, #tpu.memory_space<vmem>>, vector<1x8x128xf32>,
    return
  }
  func.func @transform_0(%arg0: i32, %arg1: i32) -> (i32, i32, i32) {
    %c0_i32 = arith.constant 0 : i32
    %c0_i32_0 = arith.constant 0 : i32
    %c0_i32_1 = arith.constant 0 : i32
    return %arg0, %c0_i32, %c0_i32_0 : i32, i32, i32
  }
  func.func @transform_1(%arg0: i32, %arg1: i32) -> (i32, i32, i32) {
    %c0_i32 = arith.constant 0 : i32
    %c0_i32_0 = arith.constant 0 : i32
    %c0_i32_1 = arith.constant 0 : i32
    %c0_i32_2 = arith.constant 0 : i32
    return %c0_i32, %c0_i32_0, %c0_i32_1 : i32, i32, i32
  }
  func.func @transform_2(%arg0: i32, %arg1: i32) -> (i32, i32) {
    %c0_i32 = arith.constant 0 : i32
    %c0_i32_0 = arith.constant 0 : i32
    %c0_i32_1 = arith.constant 0 : i32
    return %c0_i32, %c0_i32_0 : i32, i32
  }
  func.func @transform_3(%arg0: i32, %arg1: i32) -> (i32, i32, i32) {
    %c0_i32 = arith.constant 0 : i32
    %c0_i32_0 = arith.constant 0 : i32
    %c0_i32_1 = arith.constant 0 : i32
    %c0_i32_2 = arith.constant 0 : i32
    return %c0_i32, %c0_i32_0, %c0_i32_1 : i32, i32, i32
  }
  func.func @transform_4(%arg0: i32, %arg1: i32) -> (i32, i32) {
    %c0_i32 = arith.constant 0 : i32
    %c0_i32_0 = arith.constant 0 : i32
    %c0_i32_1 = arith.constant 0 : i32
    return %c0_i32, %c0_i32_0 : i32, i32
  }
  func.func @transform_5(%arg0: i32, %arg1: i32) -> (i32, i32, i32) {
    %c0_i32 = arith.constant 0 : i32
    %c0_i32_0 = arith.constant 0 : i32
    return %arg0, %arg1, %c0_i32 : i32, i32, i32
  }
}

module attributes {stable_mosaic.version = 11 : i64} {
  func.func @_conv_tap_kernel(%arg0: i32, %arg1: i32, %arg2: memref<1x6x256xf32, #tpu.memory_space<vmem>>, %arg3: memref<3x256x128xf32, #tpu.memory_space<vmem>>, %arg4: memref<1x128xf32, #tpu.memory_space<vmem>>, %arg5: memref<1x4x128xf32, #tpu.memory_space<vmem>>) attributes {dimension_semantics = [#tpu.dimension_semantics<parallel>, #tpu.dimension_semantics<parallel>], iteration_bounds = array<i64: 2, 1>, scalar_prefetch = 0 : i64, scratch_operands = 0 : i64, tpu.core_type = #tpu.core_type<tc>, window_params = [{transform_indices = @transform_0, window_bounds = array<i64: 1, 6, 256>}, {pipeline_mode = #tpu.pipeline_mode<synchronous>, transform_indices = @transform_1, window_bounds = array<i64: 3, 256, 128>}, {pipeline_mode = #tpu.pipeline_mode<synchronous>, transform_indices = @transform_2, window_bounds = array<i64: 1, 128>}, {transform_indices = @transform_3, window_bounds = array<i64: 1, 4, 128>}]} {
    %cst = arith.constant 0.000000e+00 : f32
    %0 = vector.broadcast %cst : f32 to vector<4x128xf32>
    %c0 = arith.constant 0 : index
    %c0_0 = arith.constant 0 : index
    %c0_1 = arith.constant 0 : index
    %1 = vector.load %arg2[%c0, %c0_0, %c0_1] : memref<1x6x256xf32, #tpu.memory_space<vmem>>, vector<1x4x256xf32>
    %2 = vector.shape_cast %1 : vector<1x4x256xf32> to vector<4x256xf32>
    %c0_2 = arith.constant 0 : index
    %c0_3 = arith.constant 0 : index
    %c0_4 = arith.constant 0 : index
    %3 = vector.load %arg3[%c0_2, %c0_3, %c0_4] : memref<3x256x128xf32, #tpu.memory_space<vmem>>, vector<1x256x128xf32>
    %4 = vector.shape_cast %3 : vector<1x256x128xf32> to vector<256x128xf32>
    %cst_5 = arith.constant dense<0.000000e+00> : vector<4x128xf32>
    %5 = tpu.matmul %2, %4, %cst_5 {dimension_numbers = #tpu.dot_dimension_numbers<[1], [0], [0], [1], [0, 0, 1, 1], [], []>} : vector<4x256xf32>, vector<256x128xf32>, vector<4x128xf32> -> vector<4x128xf32>
    %6 = arith.addf %0, %5 : vector<4x128xf32>
    %c0_6 = arith.constant 0 : index
    %c1 = arith.constant 1 : index
    %c0_7 = arith.constant 0 : index
    %7 = vector.load %arg2[%c0_6, %c1, %c0_7] : memref<1x6x256xf32, #tpu.memory_space<vmem>>, vector<1x4x256xf32>
    %8 = vector.shape_cast %7 : vector<1x4x256xf32> to vector<4x256xf32>
    %c1_8 = arith.constant 1 : index
    %c0_9 = arith.constant 0 : index
    %c0_10 = arith.constant 0 : index
    %9 = vector.load %arg3[%c1_8, %c0_9, %c0_10] : memref<3x256x128xf32, #tpu.memory_space<vmem>>, vector<1x256x128xf32>
    %10 = vector.shape_cast %9 : vector<1x256x128xf32> to vector<256x128xf32>
    %cst_11 = arith.constant dense<0.000000e+00> : vector<4x128xf32>
    %11 = tpu.matmul %8, %10, %cst_11 {dimension_numbers = #tpu.dot_dimension_numbers<[1], [0], [0], [1], [0, 0, 1, 1], [], []>} : vector<4x256xf32>, vector<256x128xf32>, vector<4x128xf32> -> vector<4x128xf32>
    %12 = arith.addf %6, %11 : vector<4x128xf32>
    %c0_12 = arith.constant 0 : index
    %c2 = arith.constant 2 : index
    %c0_13 = arith.constant 0 : index
    %13 = vector.load %arg2[%c0_12, %c2, %c0_13] : memref<1x6x256xf32, #tpu.memory_space<vmem>>, vector<1x4x256xf32>
    %14 = vector.shape_cast %13 : vector<1x4x256xf32> to vector<4x256xf32>
    %c2_14 = arith.constant 2 : index
    %c0_15 = arith.constant 0 : index
    %c0_16 = arith.constant 0 : index
    %15 = vector.load %arg3[%c2_14, %c0_15, %c0_16] : memref<3x256x128xf32, #tpu.memory_space<vmem>>, vector<1x256x128xf32>
    %16 = vector.shape_cast %15 : vector<1x256x128xf32> to vector<256x128xf32>
    %cst_17 = arith.constant dense<0.000000e+00> : vector<4x128xf32>
    %17 = tpu.matmul %14, %16, %cst_17 {dimension_numbers = #tpu.dot_dimension_numbers<[1], [0], [0], [1], [0, 0, 1, 1], [], []>} : vector<4x256xf32>, vector<256x128xf32>, vector<4x128xf32> -> vector<4x128xf32>
    %18 = arith.addf %12, %17 : vector<4x128xf32>
    %c0_18 = arith.constant 0 : index
    %c0_19 = arith.constant 0 : index
    %19 = vector.load %arg4[%c0_18, %c0_19] : memref<1x128xf32, #tpu.memory_space<vmem>>, vector<1x128xf32>
    %20 = vector.broadcast %19 : vector<1x128xf32> to vector<4x128xf32>
    %21 = arith.addf %18, %20 : vector<4x128xf32>
    %c0_20 = arith.constant 0 : index
    %c0_21 = arith.constant 0 : index
    %c0_22 = arith.constant 0 : index
    %22 = vector.load %arg5[%c0_20, %c0_21, %c0_22] : memref<1x4x128xf32, #tpu.memory_space<vmem>>, vector<1x4x128xf32>
    %23 = vector.shape_cast %22 : vector<1x4x128xf32> to vector<4x128xf32>
    %24 = vector.shape_cast %21 : vector<4x128xf32> to vector<1x4x128xf32>
    tpu.vector_store %arg5[%c0_20, %c0_21, %c0_22], %24 {strides = array<i32>} : memref<1x4x128xf32, #tpu.memory_space<vmem>>, vector<1x4x128xf32>,
    return
  }
  func.func @transform_0(%arg0: i32, %arg1: i32) -> (i32, i32, i32) {
    %c0_i32 = arith.constant 0 : i32
    %c0_i32_0 = arith.constant 0 : i32
    %c0_i32_1 = arith.constant 0 : i32
    return %arg0, %c0_i32, %c0_i32_0 : i32, i32, i32
  }
  func.func @transform_1(%arg0: i32, %arg1: i32) -> (i32, i32, i32) {
    %c0_i32 = arith.constant 0 : i32
    %c0_i32_0 = arith.constant 0 : i32
    %c0_i32_1 = arith.constant 0 : i32
    %c0_i32_2 = arith.constant 0 : i32
    return %c0_i32, %c0_i32_0, %c0_i32_1 : i32, i32, i32
  }
  func.func @transform_2(%arg0: i32, %arg1: i32) -> (i32, i32) {
    %c0_i32 = arith.constant 0 : i32
    %c0_i32_0 = arith.constant 0 : i32
    %c0_i32_1 = arith.constant 0 : i32
    return %c0_i32, %c0_i32_0 : i32, i32
  }
  func.func @transform_3(%arg0: i32, %arg1: i32) -> (i32, i32, i32) {
    %c0_i32 = arith.constant 0 : i32
    %c0_i32_0 = arith.constant 0 : i32
    return %arg0, %arg1, %c0_i32 : i32, i32, i32
  }
}

module attributes {stable_mosaic.version = 11 : i64} {
  func.func @_resblock_kernel(%arg0: i32, %arg1: i32, %arg2: memref<1x6x128xf32, #tpu.memory_space<vmem>>, %arg3: memref<3x128x128xf32, #tpu.memory_space<vmem>>, %arg4: memref<1x128xf32, #tpu.memory_space<vmem>>, %arg5: memref<1x128x128xf32, #tpu.memory_space<vmem>>, %arg6: memref<1x128xf32, #tpu.memory_space<vmem>>, %arg7: memref<1x4x128xf32, #tpu.memory_space<vmem>>) attributes {dimension_semantics = [#tpu.dimension_semantics<parallel>, #tpu.dimension_semantics<parallel>], iteration_bounds = array<i64: 2, 1>, scalar_prefetch = 0 : i64, scratch_operands = 0 : i64, tpu.core_type = #tpu.core_type<tc>, window_params = [{transform_indices = @transform_0, window_bounds = array<i64: 1, 6, 128>}, {pipeline_mode = #tpu.pipeline_mode<synchronous>, transform_indices = @transform_1, window_bounds = array<i64: 3, 128, 128>}, {pipeline_mode = #tpu.pipeline_mode<synchronous>, transform_indices = @transform_2, window_bounds = array<i64: 1, 128>}, {pipeline_mode = #tpu.pipeline_mode<synchronous>, transform_indices = @transform_3, window_bounds = array<i64: 1, 128, 128>}, {pipeline_mode = #tpu.pipeline_mode<synchronous>, transform_indices = @transform_4, window_bounds = array<i64: 1, 128>}, {transform_indices = @transform_5, window_bounds = array<i64: 1, 4, 128>}]} {
    %cst = arith.constant 0.000000e+00 : f32
    %0 = vector.broadcast %cst : f32 to vector<4x128xf32>
    %c0 = arith.constant 0 : index
    %c0_0 = arith.constant 0 : index
    %c0_1 = arith.constant 0 : index
    %1 = vector.load %arg2[%c0, %c0_0, %c0_1] : memref<1x6x128xf32, #tpu.memory_space<vmem>>, vector<1x4x128xf32>
    %2 = vector.shape_cast %1 : vector<1x4x128xf32> to vector<4x128xf32>
    %cst_2 = arith.constant 0.000000e+00 : f32
    %3 = vector.broadcast %cst_2 : f32 to vector<4x128xf32>
    %4 = arith.maximumf %2, %3 : vector<4x128xf32>
    %c0_3 = arith.constant 0 : index
    %c0_4 = arith.constant 0 : index
    %c0_5 = arith.constant 0 : index
    %5 = vector.load %arg3[%c0_3, %c0_4, %c0_5] : memref<3x128x128xf32, #tpu.memory_space<vmem>>, vector<1x128x128xf32>
    %6 = vector.shape_cast %5 : vector<1x128x128xf32> to vector<128x128xf32>
    %cst_6 = arith.constant dense<0.000000e+00> : vector<4x128xf32>
    %7 = tpu.matmul %4, %6, %cst_6 {dimension_numbers = #tpu.dot_dimension_numbers<[1], [0], [0], [1], [0, 0, 1, 1], [], []>} : vector<4x128xf32>, vector<128x128xf32>, vector<4x128xf32> -> vector<4x128xf32>
    %8 = arith.addf %0, %7 : vector<4x128xf32>
    %c0_7 = arith.constant 0 : index
    %c1 = arith.constant 1 : index
    %c0_8 = arith.constant 0 : index
    %9 = vector.load %arg2[%c0_7, %c1, %c0_8] : memref<1x6x128xf32, #tpu.memory_space<vmem>>, vector<1x4x128xf32>
    %10 = vector.shape_cast %9 : vector<1x4x128xf32> to vector<4x128xf32>
    %cst_9 = arith.constant 0.000000e+00 : f32
    %11 = vector.broadcast %cst_9 : f32 to vector<4x128xf32>
    %12 = arith.maximumf %10, %11 : vector<4x128xf32>
    %c1_10 = arith.constant 1 : index
    %c0_11 = arith.constant 0 : index
    %c0_12 = arith.constant 0 : index
    %13 = vector.load %arg3[%c1_10, %c0_11, %c0_12] : memref<3x128x128xf32, #tpu.memory_space<vmem>>, vector<1x128x128xf32>
    %14 = vector.shape_cast %13 : vector<1x128x128xf32> to vector<128x128xf32>
    %cst_13 = arith.constant dense<0.000000e+00> : vector<4x128xf32>
    %15 = tpu.matmul %12, %14, %cst_13 {dimension_numbers = #tpu.dot_dimension_numbers<[1], [0], [0], [1], [0, 0, 1, 1], [], []>} : vector<4x128xf32>, vector<128x128xf32>, vector<4x128xf32> -> vector<4x128xf32>
    %16 = arith.addf %8, %15 : vector<4x128xf32>
    %c0_14 = arith.constant 0 : index
    %c2 = arith.constant 2 : index
    %c0_15 = arith.constant 0 : index
    %17 = vector.load %arg2[%c0_14, %c2, %c0_15] : memref<1x6x128xf32, #tpu.memory_space<vmem>>, vector<1x4x128xf32>
    %18 = vector.shape_cast %17 : vector<1x4x128xf32> to vector<4x128xf32>
    %cst_16 = arith.constant 0.000000e+00 : f32
    %19 = vector.broadcast %cst_16 : f32 to vector<4x128xf32>
    %20 = arith.maximumf %18, %19 : vector<4x128xf32>
    %c2_17 = arith.constant 2 : index
    %c0_18 = arith.constant 0 : index
    %c0_19 = arith.constant 0 : index
    %21 = vector.load %arg3[%c2_17, %c0_18, %c0_19] : memref<3x128x128xf32, #tpu.memory_space<vmem>>, vector<1x128x128xf32>
    %22 = vector.shape_cast %21 : vector<1x128x128xf32> to vector<128x128xf32>
    %cst_20 = arith.constant dense<0.000000e+00> : vector<4x128xf32>
    %23 = tpu.matmul %20, %22, %cst_20 {dimension_numbers = #tpu.dot_dimension_numbers<[1], [0], [0], [1], [0, 0, 1, 1], [], []>} : vector<4x128xf32>, vector<128x128xf32>, vector<4x128xf32> -> vector<4x128xf32>
    %24 = arith.addf %16, %23 : vector<4x128xf32>
    %c0_21 = arith.constant 0 : index
    %c0_22 = arith.constant 0 : index
    %25 = vector.load %arg4[%c0_21, %c0_22] : memref<1x128xf32, #tpu.memory_space<vmem>>, vector<1x128xf32>
    %26 = vector.broadcast %25 : vector<1x128xf32> to vector<4x128xf32>
    %27 = arith.addf %24, %26 : vector<4x128xf32>
    %cst_23 = arith.constant 0.000000e+00 : f32
    %28 = vector.broadcast %cst_23 : f32 to vector<4x128xf32>
    %29 = arith.maximumf %27, %28 : vector<4x128xf32>
    %c0_24 = arith.constant 0 : index
    %c0_25 = arith.constant 0 : index
    %c0_26 = arith.constant 0 : index
    %30 = vector.load %arg5[%c0_24, %c0_25, %c0_26] : memref<1x128x128xf32, #tpu.memory_space<vmem>>, vector<1x128x128xf32>
    %31 = vector.shape_cast %30 : vector<1x128x128xf32> to vector<128x128xf32>
    %cst_27 = arith.constant dense<0.000000e+00> : vector<4x128xf32>
    %32 = tpu.matmul %29, %31, %cst_27 {dimension_numbers = #tpu.dot_dimension_numbers<[1], [0], [0], [1], [0, 0, 1, 1], [], []>} : vector<4x128xf32>, vector<128x128xf32>, vector<4x128xf32> -> vector<4x128xf32>
    %c0_28 = arith.constant 0 : index
    %c0_29 = arith.constant 0 : index
    %33 = vector.load %arg6[%c0_28, %c0_29] : memref<1x128xf32, #tpu.memory_space<vmem>>, vector<1x128xf32>
    %34 = vector.broadcast %33 : vector<1x128xf32> to vector<4x128xf32>
    %35 = arith.addf %32, %34 : vector<4x128xf32>
    %c0_30 = arith.constant 0 : index
    %c1_31 = arith.constant 1 : index
    %c0_32 = arith.constant 0 : index
    %36 = vector.load %arg2[%c0_30, %c1_31, %c0_32] : memref<1x6x128xf32, #tpu.memory_space<vmem>>, vector<1x4x128xf32>
    %37 = vector.shape_cast %36 : vector<1x4x128xf32> to vector<4x128xf32>
    %cst_33 = arith.constant 1.000000e+00 : f32
    %38 = vector.broadcast %cst_33 : f32 to vector<4x128xf32>
    %39 = arith.mulf %38, %35 : vector<4x128xf32>
    %40 = arith.addf %37, %39 : vector<4x128xf32>
    %c0_34 = arith.constant 0 : index
    %c0_35 = arith.constant 0 : index
    %c0_36 = arith.constant 0 : index
    %41 = vector.load %arg7[%c0_34, %c0_35, %c0_36] : memref<1x4x128xf32, #tpu.memory_space<vmem>>, vector<1x4x128xf32>
    %42 = vector.shape_cast %41 : vector<1x4x128xf32> to vector<4x128xf32>
    %43 = vector.shape_cast %40 : vector<4x128xf32> to vector<1x4x128xf32>
    tpu.vector_store %arg7[%c0_34, %c0_35, %c0_36], %43 {strides = array<i32>} : memref<1x4x128xf32, #tpu.memory_space<vmem>>, vector<1x4x128xf32>,
    return
  }
  func.func @transform_0(%arg0: i32, %arg1: i32) -> (i32, i32, i32) {
    %c0_i32 = arith.constant 0 : i32
    %c0_i32_0 = arith.constant 0 : i32
    %c0_i32_1 = arith.constant 0 : i32
    return %arg0, %c0_i32, %c0_i32_0 : i32, i32, i32
  }
  func.func @transform_1(%arg0: i32, %arg1: i32) -> (i32, i32, i32) {
    %c0_i32 = arith.constant 0 : i32
    %c0_i32_0 = arith.constant 0 : i32
    %c0_i32_1 = arith.constant 0 : i32
    %c0_i32_2 = arith.constant 0 : i32
    return %c0_i32, %c0_i32_0, %c0_i32_1 : i32, i32, i32
  }
  func.func @transform_2(%arg0: i32, %arg1: i32) -> (i32, i32) {
    %c0_i32 = arith.constant 0 : i32
    %c0_i32_0 = arith.constant 0 : i32
    %c0_i32_1 = arith.constant 0 : i32
    return %c0_i32, %c0_i32_0 : i32, i32
  }
  func.func @transform_3(%arg0: i32, %arg1: i32) -> (i32, i32, i32) {
    %c0_i32 = arith.constant 0 : i32
    %c0_i32_0 = arith.constant 0 : i32
    %c0_i32_1 = arith.constant 0 : i32
    %c0_i32_2 = arith.constant 0 : i32
    return %c0_i32, %c0_i32_0, %c0_i32_1 : i32, i32, i32
  }
  func.func @transform_4(%arg0: i32, %arg1: i32) -> (i32, i32) {
    %c0_i32 = arith.constant 0 : i32
    %c0_i32_0 = arith.constant 0 : i32
    %c0_i32_1 = arith.constant 0 : i32
    return %c0_i32, %c0_i32_0 : i32, i32
  }
  func.func @transform_5(%arg0: i32, %arg1: i32) -> (i32, i32, i32) {
    %c0_i32 = arith.constant 0 : i32
    %c0_i32_0 = arith.constant 0 : i32
    return %arg0, %arg1, %c0_i32 : i32, i32, i32
  }
}

module attributes {stable_mosaic.version = 11 : i64} {
  func.func @_resblock_kernel(%arg0: i32, %arg1: i32, %arg2: memref<1x10x128xf32, #tpu.memory_space<vmem>>, %arg3: memref<3x128x128xf32, #tpu.memory_space<vmem>>, %arg4: memref<1x128xf32, #tpu.memory_space<vmem>>, %arg5: memref<1x128x128xf32, #tpu.memory_space<vmem>>, %arg6: memref<1x128xf32, #tpu.memory_space<vmem>>, %arg7: memref<1x4x128xf32, #tpu.memory_space<vmem>>) attributes {dimension_semantics = [#tpu.dimension_semantics<parallel>, #tpu.dimension_semantics<parallel>], iteration_bounds = array<i64: 2, 1>, scalar_prefetch = 0 : i64, scratch_operands = 0 : i64, tpu.core_type = #tpu.core_type<tc>, window_params = [{transform_indices = @transform_0, window_bounds = array<i64: 1, 10, 128>}, {pipeline_mode = #tpu.pipeline_mode<synchronous>, transform_indices = @transform_1, window_bounds = array<i64: 3, 128, 128>}, {pipeline_mode = #tpu.pipeline_mode<synchronous>, transform_indices = @transform_2, window_bounds = array<i64: 1, 128>}, {pipeline_mode = #tpu.pipeline_mode<synchronous>, transform_indices = @transform_3, window_bounds = array<i64: 1, 128, 128>}, {pipeline_mode = #tpu.pipeline_mode<synchronous>, transform_indices = @transform_4, window_bounds = array<i64: 1, 128>}, {transform_indices = @transform_5, window_bounds = array<i64: 1, 4, 128>}]} {
    %cst = arith.constant 0.000000e+00 : f32
    %0 = vector.broadcast %cst : f32 to vector<4x128xf32>
    %c0 = arith.constant 0 : index
    %c0_0 = arith.constant 0 : index
    %c0_1 = arith.constant 0 : index
    %1 = vector.load %arg2[%c0, %c0_0, %c0_1] : memref<1x10x128xf32, #tpu.memory_space<vmem>>, vector<1x4x128xf32>
    %2 = vector.shape_cast %1 : vector<1x4x128xf32> to vector<4x128xf32>
    %cst_2 = arith.constant 0.000000e+00 : f32
    %3 = vector.broadcast %cst_2 : f32 to vector<4x128xf32>
    %4 = arith.maximumf %2, %3 : vector<4x128xf32>
    %c0_3 = arith.constant 0 : index
    %c0_4 = arith.constant 0 : index
    %c0_5 = arith.constant 0 : index
    %5 = vector.load %arg3[%c0_3, %c0_4, %c0_5] : memref<3x128x128xf32, #tpu.memory_space<vmem>>, vector<1x128x128xf32>
    %6 = vector.shape_cast %5 : vector<1x128x128xf32> to vector<128x128xf32>
    %cst_6 = arith.constant dense<0.000000e+00> : vector<4x128xf32>
    %7 = tpu.matmul %4, %6, %cst_6 {dimension_numbers = #tpu.dot_dimension_numbers<[1], [0], [0], [1], [0, 0, 1, 1], [], []>} : vector<4x128xf32>, vector<128x128xf32>, vector<4x128xf32> -> vector<4x128xf32>
    %8 = arith.addf %0, %7 : vector<4x128xf32>
    %c0_7 = arith.constant 0 : index
    %c3 = arith.constant 3 : index
    %c0_8 = arith.constant 0 : index
    %9 = vector.load %arg2[%c0_7, %c3, %c0_8] : memref<1x10x128xf32, #tpu.memory_space<vmem>>, vector<1x4x128xf32>
    %10 = vector.shape_cast %9 : vector<1x4x128xf32> to vector<4x128xf32>
    %cst_9 = arith.constant 0.000000e+00 : f32
    %11 = vector.broadcast %cst_9 : f32 to vector<4x128xf32>
    %12 = arith.maximumf %10, %11 : vector<4x128xf32>
    %c1 = arith.constant 1 : index
    %c0_10 = arith.constant 0 : index
    %c0_11 = arith.constant 0 : index
    %13 = vector.load %arg3[%c1, %c0_10, %c0_11] : memref<3x128x128xf32, #tpu.memory_space<vmem>>, vector<1x128x128xf32>
    %14 = vector.shape_cast %13 : vector<1x128x128xf32> to vector<128x128xf32>
    %cst_12 = arith.constant dense<0.000000e+00> : vector<4x128xf32>
    %15 = tpu.matmul %12, %14, %cst_12 {dimension_numbers = #tpu.dot_dimension_numbers<[1], [0], [0], [1], [0, 0, 1, 1], [], []>} : vector<4x128xf32>, vector<128x128xf32>, vector<4x128xf32> -> vector<4x128xf32>
    %16 = arith.addf %8, %15 : vector<4x128xf32>
    %c0_13 = arith.constant 0 : index
    %c6 = arith.constant 6 : index
    %c0_14 = arith.constant 0 : index
    %17 = vector.load %arg2[%c0_13, %c6, %c0_14] : memref<1x10x128xf32, #tpu.memory_space<vmem>>, vector<1x4x128xf32>
    %18 = vector.shape_cast %17 : vector<1x4x128xf32> to vector<4x128xf32>
    %cst_15 = arith.constant 0.000000e+00 : f32
    %19 = vector.broadcast %cst_15 : f32 to vector<4x128xf32>
    %20 = arith.maximumf %18, %19 : vector<4x128xf32>
    %c2 = arith.constant 2 : index
    %c0_16 = arith.constant 0 : index
    %c0_17 = arith.constant 0 : index
    %21 = vector.load %arg3[%c2, %c0_16, %c0_17] : memref<3x128x128xf32, #tpu.memory_space<vmem>>, vector<1x128x128xf32>
    %22 = vector.shape_cast %21 : vector<1x128x128xf32> to vector<128x128xf32>
    %cst_18 = arith.constant dense<0.000000e+00> : vector<4x128xf32>
    %23 = tpu.matmul %20, %22, %cst_18 {dimension_numbers = #tpu.dot_dimension_numbers<[1], [0], [0], [1], [0, 0, 1, 1], [], []>} : vector<4x128xf32>, vector<128x128xf32>, vector<4x128xf32> -> vector<4x128xf32>
    %24 = arith.addf %16, %23 : vector<4x128xf32>
    %c0_19 = arith.constant 0 : index
    %c0_20 = arith.constant 0 : index
    %25 = vector.load %arg4[%c0_19, %c0_20] : memref<1x128xf32, #tpu.memory_space<vmem>>, vector<1x128xf32>
    %26 = vector.broadcast %25 : vector<1x128xf32> to vector<4x128xf32>
    %27 = arith.addf %24, %26 : vector<4x128xf32>
    %cst_21 = arith.constant 0.000000e+00 : f32
    %28 = vector.broadcast %cst_21 : f32 to vector<4x128xf32>
    %29 = arith.maximumf %27, %28 : vector<4x128xf32>
    %c0_22 = arith.constant 0 : index
    %c0_23 = arith.constant 0 : index
    %c0_24 = arith.constant 0 : index
    %30 = vector.load %arg5[%c0_22, %c0_23, %c0_24] : memref<1x128x128xf32, #tpu.memory_space<vmem>>, vector<1x128x128xf32>
    %31 = vector.shape_cast %30 : vector<1x128x128xf32> to vector<128x128xf32>
    %cst_25 = arith.constant dense<0.000000e+00> : vector<4x128xf32>
    %32 = tpu.matmul %29, %31, %cst_25 {dimension_numbers = #tpu.dot_dimension_numbers<[1], [0], [0], [1], [0, 0, 1, 1], [], []>} : vector<4x128xf32>, vector<128x128xf32>, vector<4x128xf32> -> vector<4x128xf32>
    %c0_26 = arith.constant 0 : index
    %c0_27 = arith.constant 0 : index
    %33 = vector.load %arg6[%c0_26, %c0_27] : memref<1x128xf32, #tpu.memory_space<vmem>>, vector<1x128xf32>
    %34 = vector.broadcast %33 : vector<1x128xf32> to vector<4x128xf32>
    %35 = arith.addf %32, %34 : vector<4x128xf32>
    %c0_28 = arith.constant 0 : index
    %c3_29 = arith.constant 3 : index
    %c0_30 = arith.constant 0 : index
    %36 = vector.load %arg2[%c0_28, %c3_29, %c0_30] : memref<1x10x128xf32, #tpu.memory_space<vmem>>, vector<1x4x128xf32>
    %37 = vector.shape_cast %36 : vector<1x4x128xf32> to vector<4x128xf32>
    %cst_31 = arith.constant 1.000000e+00 : f32
    %38 = vector.broadcast %cst_31 : f32 to vector<4x128xf32>
    %39 = arith.mulf %38, %35 : vector<4x128xf32>
    %40 = arith.addf %37, %39 : vector<4x128xf32>
    %c0_32 = arith.constant 0 : index
    %c0_33 = arith.constant 0 : index
    %c0_34 = arith.constant 0 : index
    %41 = vector.load %arg7[%c0_32, %c0_33, %c0_34] : memref<1x4x128xf32, #tpu.memory_space<vmem>>, vector<1x4x128xf32>
    %42 = vector.shape_cast %41 : vector<1x4x128xf32> to vector<4x128xf32>
    %43 = vector.shape_cast %40 : vector<4x128xf32> to vector<1x4x128xf32>
    tpu.vector_store %arg7[%c0_32, %c0_33, %c0_34], %43 {strides = array<i32>} : memref<1x4x128xf32, #tpu.memory_space<vmem>>, vector<1x4x128xf32>,
    return
  }
  func.func @transform_0(%arg0: i32, %arg1: i32) -> (i32, i32, i32) {
    %c0_i32 = arith.constant 0 : i32
    %c0_i32_0 = arith.constant 0 : i32
    %c0_i32_1 = arith.constant 0 : i32
    return %arg0, %c0_i32, %c0_i32_0 : i32, i32, i32
  }
  func.func @transform_1(%arg0: i32, %arg1: i32) -> (i32, i32, i32) {
    %c0_i32 = arith.constant 0 : i32
    %c0_i32_0 = arith.constant 0 : i32
    %c0_i32_1 = arith.constant 0 : i32
    %c0_i32_2 = arith.constant 0 : i32
    return %c0_i32, %c0_i32_0, %c0_i32_1 : i32, i32, i32
  }
  func.func @transform_2(%arg0: i32, %arg1: i32) -> (i32, i32) {
    %c0_i32 = arith.constant 0 : i32
    %c0_i32_0 = arith.constant 0 : i32
    %c0_i32_1 = arith.constant 0 : i32
    return %c0_i32, %c0_i32_0 : i32, i32
  }
  func.func @transform_3(%arg0: i32, %arg1: i32) -> (i32, i32, i32) {
    %c0_i32 = arith.constant 0 : i32
    %c0_i32_0 = arith.constant 0 : i32
    %c0_i32_1 = arith.constant 0 : i32
    %c0_i32_2 = arith.constant 0 : i32
    return %c0_i32, %c0_i32_0, %c0_i32_1 : i32, i32, i32
  }
  func.func @transform_4(%arg0: i32, %arg1: i32) -> (i32, i32) {
    %c0_i32 = arith.constant 0 : i32
    %c0_i32_0 = arith.constant 0 : i32
    %c0_i32_1 = arith.constant 0 : i32
    return %c0_i32, %c0_i32_0 : i32, i32
  }
  func.func @transform_5(%arg0: i32, %arg1: i32) -> (i32, i32, i32) {
    %c0_i32 = arith.constant 0 : i32
    %c0_i32_0 = arith.constant 0 : i32
    return %arg0, %arg1, %c0_i32 : i32, i32, i32
  }
}

module attributes {stable_mosaic.version = 11 : i64} {
  func.func @_conv_tap_kernel(%arg0: i32, %arg1: i32, %arg2: memref<1x6x128xf32, #tpu.memory_space<vmem>>, %arg3: memref<3x128x128xf32, #tpu.memory_space<vmem>>, %arg4: memref<1x128xf32, #tpu.memory_space<vmem>>, %arg5: memref<1x4x128xf32, #tpu.memory_space<vmem>>) attributes {dimension_semantics = [#tpu.dimension_semantics<parallel>, #tpu.dimension_semantics<parallel>], iteration_bounds = array<i64: 2, 1>, scalar_prefetch = 0 : i64, scratch_operands = 0 : i64, tpu.core_type = #tpu.core_type<tc>, window_params = [{transform_indices = @transform_0, window_bounds = array<i64: 1, 6, 128>}, {pipeline_mode = #tpu.pipeline_mode<synchronous>, transform_indices = @transform_1, window_bounds = array<i64: 3, 128, 128>}, {pipeline_mode = #tpu.pipeline_mode<synchronous>, transform_indices = @transform_2, window_bounds = array<i64: 1, 128>}, {transform_indices = @transform_3, window_bounds = array<i64: 1, 4, 128>}]} {
    %cst = arith.constant 0.000000e+00 : f32
    %0 = vector.broadcast %cst : f32 to vector<4x128xf32>
    %c0 = arith.constant 0 : index
    %c0_0 = arith.constant 0 : index
    %c0_1 = arith.constant 0 : index
    %1 = vector.load %arg2[%c0, %c0_0, %c0_1] : memref<1x6x128xf32, #tpu.memory_space<vmem>>, vector<1x4x128xf32>
    %2 = vector.shape_cast %1 : vector<1x4x128xf32> to vector<4x128xf32>
    %c0_2 = arith.constant 0 : index
    %c0_3 = arith.constant 0 : index
    %c0_4 = arith.constant 0 : index
    %3 = vector.load %arg3[%c0_2, %c0_3, %c0_4] : memref<3x128x128xf32, #tpu.memory_space<vmem>>, vector<1x128x128xf32>
    %4 = vector.shape_cast %3 : vector<1x128x128xf32> to vector<128x128xf32>
    %cst_5 = arith.constant dense<0.000000e+00> : vector<4x128xf32>
    %5 = tpu.matmul %2, %4, %cst_5 {dimension_numbers = #tpu.dot_dimension_numbers<[1], [0], [0], [1], [0, 0, 1, 1], [], []>} : vector<4x128xf32>, vector<128x128xf32>, vector<4x128xf32> -> vector<4x128xf32>
    %6 = arith.addf %0, %5 : vector<4x128xf32>
    %c0_6 = arith.constant 0 : index
    %c1 = arith.constant 1 : index
    %c0_7 = arith.constant 0 : index
    %7 = vector.load %arg2[%c0_6, %c1, %c0_7] : memref<1x6x128xf32, #tpu.memory_space<vmem>>, vector<1x4x128xf32>
    %8 = vector.shape_cast %7 : vector<1x4x128xf32> to vector<4x128xf32>
    %c1_8 = arith.constant 1 : index
    %c0_9 = arith.constant 0 : index
    %c0_10 = arith.constant 0 : index
    %9 = vector.load %arg3[%c1_8, %c0_9, %c0_10] : memref<3x128x128xf32, #tpu.memory_space<vmem>>, vector<1x128x128xf32>
    %10 = vector.shape_cast %9 : vector<1x128x128xf32> to vector<128x128xf32>
    %cst_11 = arith.constant dense<0.000000e+00> : vector<4x128xf32>
    %11 = tpu.matmul %8, %10, %cst_11 {dimension_numbers = #tpu.dot_dimension_numbers<[1], [0], [0], [1], [0, 0, 1, 1], [], []>} : vector<4x128xf32>, vector<128x128xf32>, vector<4x128xf32> -> vector<4x128xf32>
    %12 = arith.addf %6, %11 : vector<4x128xf32>
    %c0_12 = arith.constant 0 : index
    %c2 = arith.constant 2 : index
    %c0_13 = arith.constant 0 : index
    %13 = vector.load %arg2[%c0_12, %c2, %c0_13] : memref<1x6x128xf32, #tpu.memory_space<vmem>>, vector<1x4x128xf32>
    %14 = vector.shape_cast %13 : vector<1x4x128xf32> to vector<4x128xf32>
    %c2_14 = arith.constant 2 : index
    %c0_15 = arith.constant 0 : index
    %c0_16 = arith.constant 0 : index
    %15 = vector.load %arg3[%c2_14, %c0_15, %c0_16] : memref<3x128x128xf32, #tpu.memory_space<vmem>>, vector<1x128x128xf32>
    %16 = vector.shape_cast %15 : vector<1x128x128xf32> to vector<128x128xf32>
    %cst_17 = arith.constant dense<0.000000e+00> : vector<4x128xf32>
    %17 = tpu.matmul %14, %16, %cst_17 {dimension_numbers = #tpu.dot_dimension_numbers<[1], [0], [0], [1], [0, 0, 1, 1], [], []>} : vector<4x128xf32>, vector<128x128xf32>, vector<4x128xf32> -> vector<4x128xf32>
    %18 = arith.addf %12, %17 : vector<4x128xf32>
    %c0_18 = arith.constant 0 : index
    %c0_19 = arith.constant 0 : index
    %19 = vector.load %arg4[%c0_18, %c0_19] : memref<1x128xf32, #tpu.memory_space<vmem>>, vector<1x128xf32>
    %20 = vector.broadcast %19 : vector<1x128xf32> to vector<4x128xf32>
    %21 = arith.addf %18, %20 : vector<4x128xf32>
    %c0_20 = arith.constant 0 : index
    %c0_21 = arith.constant 0 : index
    %c0_22 = arith.constant 0 : index
    %22 = vector.load %arg5[%c0_20, %c0_21, %c0_22] : memref<1x4x128xf32, #tpu.memory_space<vmem>>, vector<1x4x128xf32>
    %23 = vector.shape_cast %22 : vector<1x4x128xf32> to vector<4x128xf32>
    %24 = vector.shape_cast %21 : vector<4x128xf32> to vector<1x4x128xf32>
    tpu.vector_store %arg5[%c0_20, %c0_21, %c0_22], %24 {strides = array<i32>} : memref<1x4x128xf32, #tpu.memory_space<vmem>>, vector<1x4x128xf32>,
    return
  }
  func.func @transform_0(%arg0: i32, %arg1: i32) -> (i32, i32, i32) {
    %c0_i32 = arith.constant 0 : i32
    %c0_i32_0 = arith.constant 0 : i32
    %c0_i32_1 = arith.constant 0 : i32
    return %arg0, %c0_i32, %c0_i32_0 : i32, i32, i32
  }
  func.func @transform_1(%arg0: i32, %arg1: i32) -> (i32, i32, i32) {
    %c0_i32 = arith.constant 0 : i32
    %c0_i32_0 = arith.constant 0 : i32
    %c0_i32_1 = arith.constant 0 : i32
    %c0_i32_2 = arith.constant 0 : i32
    return %c0_i32, %c0_i32_0, %c0_i32_1 : i32, i32, i32
  }
  func.func @transform_2(%arg0: i32, %arg1: i32) -> (i32, i32) {
    %c0_i32 = arith.constant 0 : i32
    %c0_i32_0 = arith.constant 0 : i32
    %c0_i32_1 = arith.constant 0 : i32
    return %c0_i32, %c0_i32_0 : i32, i32
  }
  func.func @transform_3(%arg0: i32, %arg1: i32) -> (i32, i32, i32) {
    %c0_i32 = arith.constant 0 : i32
    %c0_i32_0 = arith.constant 0 : i32
    return %arg0, %arg1, %c0_i32 : i32, i32, i32
  }
}

</mosaic_0001>

<llo_original>
// kernel: encoder_forward.8
$region0: #{encoder_forward.8}
  #allocation0 [shape = 'u32[]', space=smem, size = 0x4, offset = 0x4, fixed_abs, tag = 'smem constant byte address 0x4 - core index']
  #allocation1 [shape = 'u32[144,128]{1,0:T(1,128)}', space=vmem, size = 0x12000, scoped, tag = 'internal scratch']
  %s0 = inlined_call_operand.vmem [shape: f32[2,10,128], index: 0, kind: input, shape index: {}]
  %s1 = inlined_call_operand.vmem [shape: f32[3,128,128], index: 1, kind: input, shape index: {}]
  %s2 = inlined_call_operand.vmem [shape: f32[1,128], index: 2, kind: input, shape index: {}]
  %s3 = inlined_call_operand.vmem [shape: f32[1,128,128], index: 3, kind: input, shape index: {}]
  %s4 = inlined_call_operand.vmem [shape: f32[1,128], index: 4, kind: input, shape index: {}]
  %s5 = inlined_call_operand.vmem [shape: f32[2,8,128], index: 5, kind: output, shape index: {}]
  %s6 = sld [smem:[#allocation0]]
  $region53: #{encoder_forward.8} parent=0
    _
  %s8 = ssub.s32 1, %s6
  %s9 = scalar_select 0, %s8, %s6
  loop: start=0, step=1, limit=4
  $region2: #{encoder_forward.8} parent=0 // loop_pre_header
    _
  $region3: #{encoder_forward.8} parent=0 // loop_header
    %s11 = sphi 0, %s15
    %p12 = scmp.ge.s32.totalorder %s11, 4
    %s18 = sphi 0, %s30
    %s19 = sphi 0, %s26
    %s20 = sphi 0, %s18
    %s21 = sphi 0, %s19
    %s22 = sphi 0, %s20
    %s23 = sphi 0, %s21
    %s33 = sphi 0, %s35
    %s36 = sphi 0, %s33
    %s37 = sphi 0, %s36
    %s53 = sphi 0, %s37
    %s57 = sphi 0, %s57
    %s59 = sphi 0, %s57
    %s60 = sphi 0, %s59
    %s74 = sphi 0, %s60
    %s78 = sphi 0, %s78
    %s80 = sphi 0, %s78
    %s81 = sphi 0, %s80
    %s95 = sphi 0, %s81
    %s99 = sphi 0, %s99
    %s101 = sphi 0, %s99
    %s102 = sphi 0, %s101
    %s116 = sphi 0, %s102
    %s120 = sphi 0, %s120
    %s122 = sphi 0, %s120
    %s123 = sphi 0, %s122
    %s137 = sphi 0, %s123
    %s145 = sphi 0, %s147
    %s148 = sphi 0, %s145
    %s149 = sphi 0, %s148
    %s165 = sphi 0, %s149
  $region4: #{encoder_forward.8} parent=0 // loop_header_branch
    %14 = sbr.rel (%p12) target = $region8
  $region5: #{encoder_forward.8} parent=0 // loop_body
    %s16 = ssub.s32 %s11, 1
    %s17 = ssub.s32 %s11, 2
    %s24 = sadd.s32 1, %s19
    %p25 = scmp.ge.s32.totalorder %s24, 1
    %s26 = scalar_select %p25, 0, %s24
    %s27 = sadd.s32 1, %s18
    %s28 = scalar_select %p25, %s27, %s18
    %p29 = scmp.ge.s32.totalorder %s28, 2
    %s30 = scalar_select %p29, 0, %s28
    %s31 = ssub.s32 %s18, %s30
    %p32 = scmp.eq.s32.totalorder %s31, 0
    %s34 = sadd.s32 %s33, 1
    %s35 = scalar_select %p32, %s33, %s34
    %p38 = pneg %p32
    %p39 = scmp.eq.s32.totalorder %s11, 1
    %p40 = por %p38, %p39
    %p41 = scmp.ne.s32.totalorder %s33, %s36
    %p42 = scmp.eq.s32.totalorder %s11, 0
    %p43 = por %p41, %p42
    %p44 = scmp.ne.s32.totalorder %s33, %s36
    %p45 = scmp.eq.s32.totalorder %s16, 1
    %p46 = por %p44, %p45
    %p47 = scmp.ne.s32.totalorder %s36, %s37
    %p48 = scmp.eq.s32.totalorder %s16, 0
    %p49 = por %p47, %p48
    %p50 = scmp.ne.s32.totalorder %s36, %s37
    %p51 = scmp.eq.s32.totalorder %s17, 1
    %p52 = por %p50, %p51
    %p54 = scmp.ne.s32.totalorder %s37, %s53
    %p55 = scmp.eq.s32.totalorder %s17, 0
    %p56 = por %p54, %p55
    %s58 = sadd.s32 %s57, 1
    %p61 = scmp.eq.s32.totalorder %s11, 1
    %p62 = scmp.ne.s32.totalorder %s57, %s59
    %p63 = scmp.eq.s32.totalorder %s11, 0
    %p64 = por %p62, %p63
    %p65 = scmp.ne.s32.totalorder %s57, %s59
    %p66 = scmp.eq.s32.totalorder %s16, 1
    %p67 = por %p65, %p66
    %p68 = scmp.ne.s32.totalorder %s59, %s60
    %p69 = scmp.eq.s32.totalorder %s16, 0
    %p70 = por %p68, %p69
    %p71 = scmp.ne.s32.totalorder %s59, %s60
    %p72 = scmp.eq.s32.totalorder %s17, 1
    %p73 = por %p71, %p72
    %p75 = scmp.ne.s32.totalorder %s60, %s74
    %p76 = scmp.eq.s32.totalorder %s17, 0
    %p77 = por %p75, %p76
    %s79 = sadd.s32 %s78, 1
    %p82 = scmp.eq.s32.totalorder %s11, 1
    %p83 = scmp.ne.s32.totalorder %s78, %s80
    %p84 = scmp.eq.s32.totalorder %s11, 0
    %p85 = por %p83, %p84
    %p86 = scmp.ne.s32.totalorder %s78, %s80
    %p87 = scmp.eq.s32.totalorder %s16, 1
    %p88 = por %p86, %p87
    %p89 = scmp.ne.s32.totalorder %s80, %s81
    %p90 = scmp.eq.s32.totalorder %s16, 0
    %p91 = por %p89, %p90
    %p92 = scmp.ne.s32.totalorder %s80, %s81
    %p93 = scmp.eq.s32.totalorder %s17, 1
    %p94 = por %p92, %p93
    %p96 = scmp.ne.s32.totalorder %s81, %s95
    %p97 = scmp.eq.s32.totalorder %s17, 0
    %p98 = por %p96, %p97
    %s100 = sadd.s32 %s99, 1
    %p103 = scmp.eq.s32.totalorder %s11, 1
    %p104 = scmp.ne.s32.totalorder %s99, %s101
    %p105 = scmp.eq.s32.totalorder %s11, 0
    %p106 = por %p104, %p105
    %p107 = scmp.ne.s32.totalorder %s99, %s101
    %p108 = scmp.eq.s32.totalorder %s16, 1
    %p109 = por %p107, %p108
    %p110 = scmp.ne.s32.totalorder %s101, %s102
    %p111 = scmp.eq.s32.totalorder %s16, 0
    %p112 = por %p110, %p111
    %p113 = scmp.ne.s32.totalorder %s101, %s102
    %p114 = scmp.eq.s32.totalorder %s17, 1
    %p115 = por %p113, %p114
    %p117 = scmp.ne.s32.totalorder %s102, %s116
    %p118 = scmp.eq.s32.totalorder %s17, 0
    %p119 = por %p117, %p118
    %s121 = sadd.s32 %s120, 1
    %p124 = scmp.eq.s32.totalorder %s11, 1
    %p125 = scmp.ne.s32.totalorder %s120, %s122
    %p126 = scmp.eq.s32.totalorder %s11, 0
    %p127 = por %p125, %p126
    %p128 = scmp.ne.s32.totalorder %s120, %s122
    %p129 = scmp.eq.s32.totalorder %s16, 1
    %p130 = por %p128, %p129
    %p131 = scmp.ne.s32.totalorder %s122, %s123
    %p132 = scmp.eq.s32.totalorder %s16, 0
    %p133 = por %p131, %p132
    %p134 = scmp.ne.s32.totalorder %s122, %s123
    %p135 = scmp.eq.s32.totalorder %s17, 1
    %p136 = por %p134, %p135
    %p138 = scmp.ne.s32.totalorder %s123, %s137
    %p139 = scmp.eq.s32.totalorder %s17, 0
    %p140 = por %p138, %p139
    %s141 = ssub.s32 %s18, %s30
    %s142 = ssub.s32 %s19, %s26
    %s143 = sor.u32 %s141, %s142
    %p144 = scmp.eq.s32.totalorder %s143, 0
    %s146 = sadd.s32 %s145, 1
    %s147 = scalar_select %p144, %s145, %s146
    %p150 = pneg %p144
    %p151 = scmp.eq.s32.totalorder %s11, 1
    %p152 = por %p150, %p151
    %p153 = scmp.ne.s32.totalorder %s145, %s148
    %p154 = scmp.eq.s32.totalorder %s11, 0
    %p155 = por %p153, %p154
    %p156 = scmp.ne.s32.totalorder %s145, %s148
    %p157 = scmp.eq.s32.totalorder %s16, 1
    %p158 = por %p156, %p157
    %p159 = scmp.ne.s32.totalorder %s148, %s149
    %p160 = scmp.eq.s32.totalorder %s16, 0
    %p161 = por %p159, %p160
    %p162 = scmp.ne.s32.totalorder %s148, %s149
    %p163 = scmp.eq.s32.totalorder %s17, 1
    %p164 = por %p162, %p163
    %p166 = scmp.ne.s32.totalorder %s149, %s165
    %p167 = scmp.eq.s32.totalorder %s17, 0
    %p168 = por %p166, %p167
    %p169 = scmp.le.s32.totalorder 1, %s11
    %p170 = scmp.lt.s32.totalorder %s11, 3
    %p171 = pnand %p169, %p170
    %p172 = pneg %p171
    // Predicated region
    $region9: #{encoder_forward.8} parent=5 // pred_check
      _
    $region10: #{encoder_forward.8} parent=5 // pred_check_branch
      %174 = sbr.rel (%p171) target = $region12
    $region11: #{encoder_forward.8} parent=5 // pred_region
      %s175 = ssub.s32 %s11, 1
      // Predicated region
      $region13: #{encoder_forward.8} parent=11 // pred_check
        %p176 = pneg %p70
      $region14: #{encoder_forward.8} parent=11 // pred_check_branch
        %178 = sbr.rel (%p176) target = $region16
      $region15: #{encoder_forward.8} parent=11 // pred_region
        _
      $region16: #{encoder_forward.8} parent=11 // pred_fallthru
        _
      // Predicated region
      $region17: #{encoder_forward.8} parent=11 // pred_check
        %p179 = pneg %p91
      $region18: #{encoder_forward.8} parent=11 // pred_check_branch
        %181 = sbr.rel (%p179) target = $region20
      $region19: #{encoder_forward.8} parent=11 // pred_region
        _
      $region20: #{encoder_forward.8} parent=11 // pred_fallthru
        _
      // Predicated region
      $region21: #{encoder_forward.8} parent=11 // pred_check
        %p182 = pneg %p112
      $region22: #{encoder_forward.8} parent=11 // pred_check_branch
        %184 = sbr.rel (%p182) target = $region24
      $region23: #{encoder_forward.8} parent=11 // pred_region
        _
      $region24: #{encoder_forward.8} parent=11 // pred_fallthru
        _
      // Predicated region
      $region25: #{encoder_forward.8} parent=11 // pred_check
        %p185 = pneg %p133
      $region26: #{encoder_forward.8} parent=11 // pred_check_branch
        %187 = sbr.rel (%p185) target = $region28
      $region27: #{encoder_forward.8} parent=11 // pred_region
        _
      $region28: #{encoder_forward.8} parent=11 // pred_fallthru
        _
    $region12: #{encoder_forward.8} parent=5 // pred_fallthru
      _
    %p188 = scmp.lt.s32.totalorder %s11, 2
    // Predicated region
    $region29: #{encoder_forward.8} parent=5 // pred_check
      %p189 = pneg %p188
    $region30: #{encoder_forward.8} parent=5 // pred_check_branch
      %191 = sbr.rel (%p189) target = $region32
    $region31: #{encoder_forward.8} parent=5 // pred_region
      // Predicated region
      $region33: #{encoder_forward.8} parent=31 // pred_check
        %p192 = pneg %p43
      $region34: #{encoder_forward.8} parent=31 // pred_check_branch
        %194 = sbr.rel (%p192) target = $region36
      $region35: #{encoder_forward.8} parent=31 // pred_region
        %p195 = scmp.lt.s32.totalorder %s18, 1
        %s196 = scalar_select %p195, %s18, 1
        %s197 = smul.addr %s196, 2
        %s198 = smul.addr %s197, 8
        %s199 = scalar_lea.vmem %s0, %s198
      $region36: #{encoder_forward.8} parent=31 // pred_fallthru
        _
    $region32: #{encoder_forward.8} parent=5 // pred_fallthru
      _
    %p200 = scmp.le.s32.totalorder 1, %s11
    %p201 = scmp.lt.s32.totalorder %s11, 3
    %p202 = pnand %p200, %p201
    %p203 = pneg %p202
    // Predicated region
    $region37: #{encoder_forward.8} parent=5 // pred_check
      _
    $region38: #{encoder_forward.8} parent=5 // pred_check_branch
      %205 = sbr.rel (%p202) target = $region40
    $region39: #{encoder_forward.8} parent=5 // pred_region
      %s206 = ssub.s32 %s11, 1
      %p207 = scmp.lt.s32.totalorder %s20, 1
      %s208 = scalar_select %p207, %s20, 1
      %s209 = smul.addr %s208, 2
      %s210 = smul.addr %s209, 8
      %s211 = scalar_lea.vmem %s0, %s210
      %p212 = pneg %p49
      %p213 = pneg %p46
      %p214 = pneg %p70
      %p215 = pneg %p67
      %p216 = pneg %p91
      %p217 = pneg %p88
      %p218 = pneg %p112
      %p219 = pneg %p109
      %p220 = pneg %p133
      %p221 = pneg %p130
      %p222 = pneg %p161
      %p223 = pneg %p158
      %p224 = scmp.lt.s32.totalorder %s20, 1
      %s225 = scalar_select %p224, %s20, 1
      %p226 = scmp.lt.s32.totalorder %s21, 0
      %s227 = scalar_select %p226, %s21, 0
      %s228 = sadd.s32 %s227, %s225
      %s229 = smul.addr %s228, 8
      %s230 = scalar_lea.vmem %s5, %s229
      %p231 = scmp.lt.s32.totalorder %s20, 1
      %s232 = scalar_select %p231, %s20, 1
      %s233 = smul.addr %s232, 2
      %s234 = smul.addr %s233, 8
      %s235 = scalar_lea.vmem %s0, %s234
      %p236 = scmp.lt.s32.totalorder %s20, 1
      %s237 = scalar_select %p236, %s20, 1
      %p238 = scmp.lt.s32.totalorder %s21, 0
      %s239 = scalar_select %p238, %s21, 0
      %s240 = sadd.s32 %s239, %s237
      %s241 = smul.addr %s240, 8
      %s242 = scalar_lea.vmem %s5, %s241
      %v243 = vld [vmem:[%s235] sm:$0xff]
      %v244 = vmax.f32 %v243, 0.0
      %v245 = vld [vmem:[%s1] sm:$0xff]
      %v246 = vld [vmem:[%s1 + $0x8] sm:$0xff]
      %v247 = vld [vmem:[%s1 + $0x10] sm:$0xff]
      %v248 = vld [vmem:[%s1 + $0x18] sm:$0xff]
      %v249 = vld [vmem:[%s1 + $0x20] sm:$0xff]
      %v250 = vld [vmem:[%s1 + $0x28] sm:$0xff]
      %v251 = vld [vmem:[%s1 + $0x30] sm:$0xff]
      %v252 = vld [vmem:[%s1 + $0x38] sm:$0xff]
      %v253 = vld [vmem:[%s1 + $0x40] sm:$0xff]
      %v254 = vld [vmem:[%s1 + $0x48] sm:$0xff]
      %v255 = vld [vmem:[%s1 + $0x50] sm:$0xff]
      %v256 = vld [vmem:[%s1 + $0x58] sm:$0xff]
      %v257 = vld [vmem:[%s1 + $0x60] sm:$0xff]
      %v258 = vld [vmem:[%s1 + $0x68] sm:$0xff]
      %v259 = vld [vmem:[%s1 + $0x70] sm:$0xff]
      %v260 = vld [vmem:[%s1 + $0x78] sm:$0xff]
      %v261 = vld [vmem:[%s235 + $0x1] sm:$0xff]
      %v262 = vmax.f32 %v261, 0.0
      %s263 = scalar_lea.vmem %s1, 128
      %v264 = vld [vmem:[%s263] sm:$0xff]
      %v265 = vld [vmem:[%s263 + $0x8] sm:$0xff]
      %v266 = vld [vmem:[%s263 + $0x10] sm:$0xff]
      %v267 = vld [vmem:[%s263 + $0x18] sm:$0xff]
      %v268 = vld [vmem:[%s263 + $0x20] sm:$0xff]
      %v269 = vld [vmem:[%s263 + $0x28] sm:$0xff]
      %v270 = vld [vmem:[%s263 + $0x30] sm:$0xff]
      %v271 = vld [vmem:[%s263 + $0x38] sm:$0xff]
      %v272 = vld [vmem:[%s263 + $0x40] sm:$0xff]
      %v273 = vld [vmem:[%s263 + $0x48] sm:$0xff]
      %v274 = vld [vmem:[%s263 + $0x50] sm:$0xff]
      %v275 = vld [vmem:[%s263 + $0x58] sm:$0xff]
      %v276 = vld [vmem:[%s263 + $0x60] sm:$0xff]
      %v277 = vld [vmem:[%s263 + $0x68] sm:$0xff]
      %v278 = vld [vmem:[%s263 + $0x70] sm:$0xff]
      %v279 = vld [vmem:[%s263 + $0x78] sm:$0xff]
      %280 = vmatprep.subr.mxu0 0.0
      %281 = vmatpush1.msra.mxu0 %v264
      %282 = vmatprep.subr.mxu0 0.0
      %283 = vmatpush1.msra.mxu0 %v265
      %284 = vmatprep.subr.mxu0 0.0
      %285 = vmatpush1.msra.mxu0 %v266
      %286 = vmatprep.subr.mxu0 0.0
      %287 = vmatpush1.msra.mxu0 %v267
      %288 = vmatprep.subr.mxu0 0.0
      %289 = vmatpush1.msra.mxu0 %v268
      %290 = vmatprep.subr.mxu0 0.0
      %291 = vmatpush1.msra.mxu0 %v269
      %292 = vmatprep.subr.mxu0 0.0
      %293 = vmatpush1.msra.mxu0 %v270
      %294 = vmatprep.subr.mxu0 0.0
      %295 = vmatpush1.msra.mxu0 %v271
      %296 = vmatprep.subr.mxu0 0.0
      %297 = vmatpush1.msra.mxu0 %v272
      %298 = vmatprep.subr.mxu0 0.0
      %299 = vmatpush1.msra.mxu0 %v273
      %300 = vmatprep.subr.mxu0 0.0
      %301 = vmatpush1.msra.mxu0 %v274
      %302 = vmatprep.subr.mxu0 0.0
      %303 = vmatpush1.msra.mxu0 %v275
      %304 = vmatprep.subr.mxu0 0.0
      %305 = vmatpush1.msra.mxu0 %v276
      %306 = vmatprep.subr.mxu0 0.0
      %307 = vmatpush1.msra.mxu0 %v277
      %308 = vmatprep.subr.mxu0 0.0
      %309 = vmatpush1.msra.mxu0 %v278
      %310 = vmatprep.subr.mxu0 0.0
      %311 = vmatpush1.msra.mxu0 %v279
      %312 = vmatprep.subr.mxu0 0.0
      %313 = vmatpush1.msra.mxu0 0.0
      %314 = vmatprep.subr.mxu0 0.0
      %315 = vmatpush1.msra.mxu0 0.0
      %316 = vmatprep.subr.mxu0 0.0
      %317 = vmatpush1.msra.mxu0 0.0
      %318 = vmatprep.subr.mxu0 0.0
      %319 = vmatpush1.msra.mxu0 0.0
      %320 = vmatprep.subr.mxu0 0.0
      %321 = vmatpush1.msra.mxu0 0.0
      %322 = vmatprep.subr.mxu0 0.0
      %323 = vmatpush1.msra.mxu0 0.0
      %324 = vmatprep.subr.mxu0 0.0
      %325 = vmatpush1.msra.mxu0 0.0
      %326 = vmatprep.subr.mxu0 0.0
      %327 = vmatpush1.msra.mxu0 0.0
      %328 = vmatprep.subr.mxu0 0.0
      %329 = vmatpush1.msra.mxu0 0.0
      %330 = vmatprep.subr.mxu0 0.0
      %331 = vmatpush1.msra.mxu0 0.0
      %332 = vmatprep.subr.mxu0 0.0
      %333 = vmatpush1.msra.mxu0 0.0
      %334 = vmatprep.subr.mxu0 0.0
      %335 = vmatpush1.msra.mxu0 0.0
      %336 = vmatprep.subr.mxu0 0.0
      %337 = vmatpush1.msra.mxu0 0.0
      %338 = vmatprep.subr.mxu0 0.0
      %339 = vmatpush1.msra.mxu0 0.0
      %340 = vmatprep.subr.mxu0 0.0
      %341 = vmatpush1.msra.mxu0 0.0
      %342 = vmatprep.subr.mxu0 0.0
      %343 = vmatpush1.msra.mxu0 0.0
      %344 = vmatprep.mubr.f32.mxu0 0.0
      %345 = vmatmul.mubr.f32.gmra.mrb[0].mxu0 %v262
      %v346 = vpop.f32.mrb[0].mxu0
      %v347 = vadd.f32 0.0, %v346
      %v348 = vpop.f32.mrb[0].mxu0
      %349 = vdwg.mxu0
      %350 = vmatprep.subr.mxu0 0.0
      %351 = vmatpush1.msra.mxu0 %v245
      %352 = vmatprep.subr.mxu0 0.0
      %353 = vmatpush1.msra.mxu0 %v246
      %354 = vmatprep.subr.mxu0 0.0
      %355 = vmatpush1.msra.mxu0 %v247
      %356 = vmatprep.subr.mxu0 0.0
      %357 = vmatpush1.msra.mxu0 %v248
      %358 = vmatprep.subr.mxu0 0.0
      %359 = vmatpush1.msra.mxu0 %v249
      %360 = vmatprep.subr.mxu0 0.0
      %361 = vmatpush1.msra.mxu0 %v250
      %362 = vmatprep.subr.mxu0 0.0
      %363 = vmatpush1.msra.mxu0 %v251
      %364 = vmatprep.subr.mxu0 0.0
      %365 = vmatpush1.msra.mxu0 %v252
      %366 = vmatprep.subr.mxu0 0.0
      %367 = vmatpush1.msra.mxu0 %v253
      %368 = vmatprep.subr.mxu0 0.0
      %369 = vmatpush1.msra.mxu0 %v254
      %370 = vmatprep.subr.mxu0 0.0
      %371 = vmatpush1.msra.mxu0 %v255
      %372 = vmatprep.subr.mxu0 0.0
      %373 = vmatpush1.msra.mxu0 %v256
      %374 = vmatprep.subr.mxu0 0.0
      %375 = vmatpush1.msra.mxu0 %v257
      %376 = vmatprep.subr.mxu0 0.0
      %377 = vmatpush1.msra.mxu0 %v258
      %378 = vmatprep.subr.mxu0 0.0
      %379 = vmatpush1.msra.mxu0 %v259
      %380 = vmatprep.subr.mxu0 0.0
      %381 = vmatpush1.msra.mxu0 %v260
      %382 = vmatprep.subr.mxu0 0.0
      %383 = vmatpush1.msra.mxu0 0.0
      %384 = vmatprep.subr.mxu0 0.0
      %385 = vmatpush1.msra.mxu0 0.0
      %386 = vmatprep.subr.mxu0 0.0
      %387 = vmatpush1.msra.mxu0 0.0
      %388 = vmatprep.subr.mxu0 0.0
      %389 = vmatpush1.msra.mxu0 0.0
      %390 = vmatprep.subr.mxu0 0.0
      %391 = vmatpush1.msra.mxu0 0.0
      %392 = vmatprep.subr.mxu0 0.0
      %393 = vmatpush1.msra.mxu0 0.0
      %394 = vmatprep.subr.mxu0 0.0
      %395 = vmatpush1.msra.mxu0 0.0
      %396 = vmatprep.subr.mxu0 0.0
      %397 = vmatpush1.msra.mxu0 0.0
      %398 = vmatprep.subr.mxu0 0.0
      %399 = vmatpush1.msra.mxu0 0.0
      %400 = vmatprep.subr.mxu0 0.0
      %401 = vmatpush1.msra.mxu0 0.0
      %402 = vmatprep.subr.mxu0 0.0
      %403 = vmatpush1.msra.mxu0 0.0
      %404 = vmatprep.subr.mxu0 0.0
      %405 = vmatpush1.msra.mxu0 0.0
      %406 = vmatprep.subr.mxu0 0.0
      %407 = vmatpush1.msra.mxu0 0.0
      %408 = vmatprep.subr.mxu0 0.0
      %409 = vmatpush1.msra.mxu0 0.0
      %410 = vmatprep.subr.mxu0 0.0
      %411 = vmatpush1.msra.mxu0 0.0
      %412 = vmatprep.subr.mxu0 0.0
      %413 = vmatpush1.msra.mxu0 0.0
      %414 = vmatprep.mubr.f32.mxu0 0.0
      %415 = vmatmul.mubr.f32.gmra.mrb[0].mxu0 %v244
      %v416 = vpop.f32.mrb[0].mxu0
      %v417 = vadd.f32 %v347, %v416
      %v418 = vpop.f32.mrb[0].mxu0
      %419 = vdwg.mxu0
      %v420 = vld [vmem:[%s235 + $0x2] sm:$0xff]
      %v421 = vmax.f32 %v420, 0.0
      %s422 = scalar_lea.vmem %s1, 256
      %v423 = vld [vmem:[%s422] sm:$0xff]
      %v424 = vld [vmem:[%s422 + $0x8] sm:$0xff]
      %v425 = vld [vmem:[%s422 + $0x10] sm:$0xff]
      %v426 = vld [vmem:[%s422 + $0x18] sm:$0xff]
      %v427 = vld [vmem:[%s422 + $0x20] sm:$0xff]
      %v428 = vld [vmem:[%s422 + $0x28] sm:$0xff]
      %v429 = vld [vmem:[%s422 + $0x30] sm:$0xff]
      %v430 = vld [vmem:[%s422 + $0x38] sm:$0xff]
      %v431 = vld [vmem:[%s422 + $0x40] sm:$0xff]
      %v432 = vld [vmem:[%s422 + $0x48] sm:$0xff]
      %v433 = vld [vmem:[%s422 + $0x50] sm:$0xff]
      %v434 = vld [vmem:[%s422 + $0x58] sm:$0xff]
      %v435 = vld [vmem:[%s422 + $0x60] sm:$0xff]
      %v436 = vld [vmem:[%s422 + $0x68] sm:$0xff]
      %v437 = vld [vmem:[%s422 + $0x70] sm:$0xff]
      %v438 = vld [vmem:[%s422 + $0x78] sm:$0xff]
      %439 = vmatprep.subr.mxu0 0.0
      %440 = vmatpush1.msra.mxu0 %v423
      %441 = vmatprep.subr.mxu0 0.0
      %442 = vmatpush1.msra.mxu0 %v424
      %443 = vmatprep.subr.mxu0 0.0
      %444 = vmatpush1.msra.mxu0 %v425
      %445 = vmatprep.subr.mxu0 0.0
      %446 = vmatpush1.msra.mxu0 %v426
      %447 = vmatprep.subr.mxu0 0.0
      %448 = vmatpush1.msra.mxu0 %v427
      %449 = vmatprep.subr.mxu0 0.0
      %450 = vmatpush1.msra.mxu0 %v428
      %451 = vmatprep.subr.mxu0 0.0
      %452 = vmatpush1.msra.mxu0 %v429
      %453 = vmatprep.subr.mxu0 0.0
      %454 = vmatpush1.msra.mxu0 %v430
      %455 = vmatprep.subr.mxu0 0.0
      %456 = vmatpush1.msra.mxu0 %v431
      %457 = vmatprep.subr.mxu0 0.0
      %458 = vmatpush1.msra.mxu0 %v432
      %459 = vmatprep.subr.mxu0 0.0
      %460 = vmatpush1.msra.mxu0 %v433
      %461 = vmatprep.subr.mxu0 0.0
      %462 = vmatpush1.msra.mxu0 %v434
      %463 = vmatprep.subr.mxu0 0.0
      %464 = vmatpush1.msra.mxu0 %v435
      %465 = vmatprep.subr.mxu0 0.0
      %466 = vmatpush1.msra.mxu0 %v436
      %467 = vmatprep.subr.mxu0 0.0
      %468 = vmatpush1.msra.mxu0 %v437
      %469 = vmatprep.subr.mxu0 0.0
      %470 = vmatpush1.msra.mxu0 %v438
      %471 = vmatprep.subr.mxu0 0.0
      %472 = vmatpush1.msra.mxu0 0.0
      %473 = vmatprep.subr.mxu0 0.0
      %474 = vmatpush1.msra.mxu0 0.0
      %475 = vmatprep.subr.mxu0 0.0
      %476 = vmatpush1.msra.mxu0 0.0
      %477 = vmatprep.subr.mxu0 0.0
      %478 = vmatpush1.msra.mxu0 0.0
      %479 = vmatprep.subr.mxu0 0.0
      %480 = vmatpush1.msra.mxu0 0.0
      %481 = vmatprep.subr.mxu0 0.0
      %482 = vmatpush1.msra.mxu0 0.0
      %483 = vmatprep.subr.mxu0 0.0
      %484 = vmatpush1.msra.mxu0 0.0
      %485 = vmatprep.subr.mxu0 0.0
      %486 = vmatpush1.msra.mxu0 0.0
      %487 = vmatprep.subr.mxu0 0.0
      %488 = vmatpush1.msra.mxu0 0.0
      %489 = vmatprep.subr.mxu0 0.0
      %490 = vmatpush1.msra.mxu0 0.0
      %491 = vmatprep.subr.mxu0 0.0
      %492 = vmatpush1.msra.mxu0 0.0
      %493 = vmatprep.subr.mxu0 0.0
      %494 = vmatpush1.msra.mxu0 0.0
      %495 = vmatprep.subr.mxu0 0.0
      %496 = vmatpush1.msra.mxu0 0.0
      %497 = vmatprep.subr.mxu0 0.0
      %498 = vmatpush1.msra.mxu0 0.0
      %499 = vmatprep.subr.mxu0 0.0
      %500 = vmatpush1.msra.mxu0 0.0
      %501 = vmatprep.subr.mxu0 0.0
      %502 = vmatpush1.msra.mxu0 0.0
      %503 = vmatprep.mubr.f32.mxu0 0.0
      %504 = vmatmul.mubr.f32.gmra.mrb[0].mxu0 %v421
      %v505 = vpop.f32.mrb[0].mxu0
      %v506 = vadd.f32 0.0, %v505
      %v507 = vpop.f32.mrb[0].mxu0
      %508 = vdwg.mxu0
      %v509 = vadd.f32 %v417, %v506
      %v510 = vld [vmem:[%s2] sm:$0x1]
      %v512 = vlaneseq
      %v513 = vshrl.u32 %v512, 7
      %v514 = vsub.s32 0, %v513
      %v515 = vrot.slane %v510, %v514
      %v517 = vadd.f32 %v509, %v515
      %v518 = vmax.f32 %v517, 0.0
      %v519 = vld [vmem:[%s3] sm:$0xff]
      %v520 = vld [vmem:[%s3 + $0x8] sm:$0xff]
      %v521 = vld [vmem:[%s3 + $0x10] sm:$0xff]
      %v522 = vld [vmem:[%s3 + $0x18] sm:$0xff]
      %v523 = vld [vmem:[%s3 + $0x20] sm:$0xff]
      %v524 = vld [vmem:[%s3 + $0x28] sm:$0xff]
      %v525 = vld [vmem:[%s3 + $0x30] sm:$0xff]
      %v526 = vld [vmem:[%s3 + $0x38] sm:$0xff]
      %v527 = vld [vmem:[%s3 + $0x40] sm:$0xff]
      %v528 = vld [vmem:[%s3 + $0x48] sm:$0xff]
      %v529 = vld [vmem:[%s3 + $0x50] sm:$0xff]
      %v530 = vld [vmem:[%s3 + $0x58] sm:$0xff]
      %v531 = vld [vmem:[%s3 + $0x60] sm:$0xff]
      %v532 = vld [vmem:[%s3 + $0x68] sm:$0xff]
      %v533 = vld [vmem:[%s3 + $0x70] sm:$0xff]
      %v534 = vld [vmem:[%s3 + $0x78] sm:$0xff]
      %v535 = vld [vmem:[%s4] sm:$0x1]
      %v537 = vlaneseq
      %v538 = vshrl.u32 %v537, 7
      %v539 = vsub.s32 0, %v538
      %v540 = vrot.slane %v535, %v539
      %542 = vmatprep.subr.mxu0 0.0
      %543 = vmatpush1.msra.mxu0 %v519
      %544 = vmatprep.subr.mxu0 0.0
      %545 = vmatpush1.msra.mxu0 %v520
      %546 = vmatprep.subr.mxu0 0.0
      %547 = vmatpush1.msra.mxu0 %v521
      %548 = vmatprep.subr.mxu0 0.0
      %549 = vmatpush1.msra.mxu0 %v522
      %550 = vmatprep.subr.mxu0 0.0
      %551 = vmatpush1.msra.mxu0 %v523
      %552 = vmatprep.subr.mxu0 0.0
      %553 = vmatpush1.msra.mxu0 %v524
      %554 = vmatprep.subr.mxu0 0.0
      %555 = vmatpush1.msra.mxu0 %v525
      %556 = vmatprep.subr.mxu0 0.0
      %557 = vmatpush1.msra.mxu0 %v526
      %558 = vmatprep.subr.mxu0 0.0
      %559 = vmatpush1.msra.mxu0 %v527
      %560 = vmatprep.subr.mxu0 0.0
      %561 = vmatpush1.msra.mxu0 %v528
      %562 = vmatprep.subr.mxu0 0.0
      %563 = vmatpush1.msra.mxu0 %v529
      %564 = vmatprep.subr.mxu0 0.0
      %565 = vmatpush1.msra.mxu0 %v530
      %566 = vmatprep.subr.mxu0 0.0
      %567 = vmatpush1.msra.mxu0 %v531
      %568 = vmatprep.subr.mxu0 0.0
      %569 = vmatpush1.msra.mxu0 %v532
      %570 = vmatprep.subr.mxu0 0.0
      %571 = vmatpush1.msra.mxu0 %v533
      %572 = vmatprep.subr.mxu0 0.0
      %573 = vmatpush1.msra.mxu0 %v534
      %574 = vmatprep.subr.mxu0 0.0
      %575 = vmatpush1.msra.mxu0 0.0
      %576 = vmatprep.subr.mxu0 0.0
      %577 = vmatpush1.msra.mxu0 0.0
      %578 = vmatprep.subr.mxu0 0.0
      %579 = vmatpush1.msra.mxu0 0.0
      %580 = vmatprep.subr.mxu0 0.0
      %581 = vmatpush1.msra.mxu0 0.0
      %582 = vmatprep.subr.mxu0 0.0
      %583 = vmatpush1.msra.mxu0 0.0
      %584 = vmatprep.subr.mxu0 0.0
      %585 = vmatpush1.msra.mxu0 0.0
      %586 = vmatprep.subr.mxu0 0.0
      %587 = vmatpush1.msra.mxu0 0.0
      %588 = vmatprep.subr.mxu0 0.0
      %589 = vmatpush1.msra.mxu0 0.0
      %590 = vmatprep.subr.mxu0 0.0
      %591 = vmatpush1.msra.mxu0 0.0
      %592 = vmatprep.subr.mxu0 0.0
      %593 = vmatpush1.msra.mxu0 0.0
      %594 = vmatprep.subr.mxu0 0.0
      %595 = vmatpush1.msra.mxu0 0.0
      %596 = vmatprep.subr.mxu0 0.0
      %597 = vmatpush1.msra.mxu0 0.0
      %598 = vmatprep.subr.mxu0 0.0
      %599 = vmatpush1.msra.mxu0 0.0
      %600 = vmatprep.subr.mxu0 0.0
      %601 = vmatpush1.msra.mxu0 0.0
      %602 = vmatprep.subr.mxu0 0.0
      %603 = vmatpush1.msra.mxu0 0.0
      %604 = vmatprep.subr.mxu0 0.0
      %605 = vmatpush1.msra.mxu0 0.0
      %606 = vmatprep.mubr.f32.mxu0 0.0
      %607 = vmatmul.mubr.f32.gmra.mrb[0].mxu0 %v518
      %v608 = vpop.f32.mrb[0].mxu0
      %v609 = vadd.f32 %v540, %v608
      %v610 = vpop.f32.mrb[0].mxu0
      %611 = vdwg.mxu0
      %v612 = vadd.f32 %v261, %v609
      %613 = vst [vmem:[%s242] sm:$0xff] %v612
      %p614 = scmp.lt.s32.totalorder %s20, 1
      %s615 = scalar_select %p614, %s20, 1
      %p616 = scmp.lt.s32.totalorder %s21, 0
      %s617 = scalar_select %p616, %s21, 0
      %s618 = sadd.s32 %s617, %s615
      %s619 = smul.addr %s618, 8
      %s620 = scalar_lea.vmem %s5, %s619
      // Predicated region
      $region41: #{encoder_forward.8} parent=39 // pred_check
        %p621 = pneg %p158
      $region42: #{encoder_forward.8} parent=39 // pred_check_branch
        %623 = sbr.rel (%p621) target = $region44
      $region43: #{encoder_forward.8} parent=39 // pred_region
        _
      $region44: #{encoder_forward.8} parent=39 // pred_fallthru
        _
    $region40: #{encoder_forward.8} parent=5 // pred_fallthru
      _
    %p624 = scmp.le.s32.totalorder 2, %s11
    // Predicated region
    $region45: #{encoder_forward.8} parent=5 // pred_check
      %p625 = pneg %p624
    $region46: #{encoder_forward.8} parent=5 // pred_check_branch
      %627 = sbr.rel (%p625) target = $region48
    $region47: #{encoder_forward.8} parent=5 // pred_region
      %s628 = ssub.s32 %s11, 2
      // Predicated region
      $region49: #{encoder_forward.8} parent=47 // pred_check
        %p629 = pneg %p164
      $region50: #{encoder_forward.8} parent=47 // pred_check_branch
        %631 = sbr.rel (%p629) target = $region52
      $region51: #{encoder_forward.8} parent=47 // pred_region
        %p632 = scmp.lt.s32.totalorder %s22, 1
        %s633 = scalar_select %p632, %s22, 1
        %p634 = scmp.lt.s32.totalorder %s23, 0
        %s635 = scalar_select %p634, %s23, 0
        %s636 = sadd.s32 %s635, %s633
        %s637 = smul.addr %s636, 8
        %s638 = scalar_lea.vmem %s5, %s637
      $region52: #{encoder_forward.8} parent=47 // pred_fallthru
        _
    $region48: #{encoder_forward.8} parent=5 // pred_fallthru
      _
  $region6: #{encoder_forward.8} parent=0 // loop_footer
    %s15 = sadd.s32 1, %s11
  $region7: #{encoder_forward.8} parent=0 // loop_footer_branch
    %10 = sbr.rel target = $region3
  $region8: #{encoder_forward.8} parent=0 // loop_exit
    _

// kernel: encoder_forward.7
$region0: #{encoder_forward.7}
  #allocation0 [shape = 'u32[]', space=smem, size = 0x4, offset = 0x4, fixed_abs, tag = 'smem constant byte address 0x4 - core index']
  #allocation1 [shape = 'u32[144,128]{1,0:T(1,128)}', space=vmem, size = 0x12000, scoped, tag = 'internal scratch']
  %s0 = inlined_call_operand.vmem [shape: f32[2,10,256], index: 0, kind: input, shape index: {}]
  %s1 = inlined_call_operand.vmem [shape: f32[3,256,128], index: 1, kind: input, shape index: {}]
  %s2 = inlined_call_operand.vmem [shape: f32[1,128], index: 2, kind: input, shape index: {}]
  %s3 = inlined_call_operand.vmem [shape: f32[2,8,128], index: 3, kind: output, shape index: {}]
  %s4 = sld [smem:[#allocation0]]
  $region45: #{encoder_forward.7} parent=0
    _
  %s6 = ssub.s32 1, %s4
  %s7 = scalar_select 0, %s6, %s4
  loop: start=0, step=1, limit=4
  $region2: #{encoder_forward.7} parent=0 // loop_pre_header
    _
  $region3: #{encoder_forward.7} parent=0 // loop_header
    %s9 = sphi 0, %s13
    %p10 = scmp.ge.s32.totalorder %s9, 4
    %s16 = sphi 0, %s28
    %s17 = sphi 0, %s24
    %s18 = sphi 0, %s16
    %s19 = sphi 0, %s17
    %s20 = sphi 0, %s18
    %s21 = sphi 0, %s19
    %s31 = sphi 0, %s33
    %s34 = sphi 0, %s31
    %s35 = sphi 0, %s34
    %s51 = sphi 0, %s35
    %s55 = sphi 0, %s55
    %s57 = sphi 0, %s55
    %s58 = sphi 0, %s57
    %s72 = sphi 0, %s58
    %s76 = sphi 0, %s76
    %s78 = sphi 0, %s76
    %s79 = sphi 0, %s78
    %s93 = sphi 0, %s79
    %s101 = sphi 0, %s103
    %s104 = sphi 0, %s101
    %s105 = sphi 0, %s104
    %s121 = sphi 0, %s105
  $region4: #{encoder_forward.7} parent=0 // loop_header_branch
    %12 = sbr.rel (%p10) target = $region8
  $region5: #{encoder_forward.7} parent=0 // loop_body
    %s14 = ssub.s32 %s9, 1
    %s15 = ssub.s32 %s9, 2
    %s22 = sadd.s32 1, %s17
    %p23 = scmp.ge.s32.totalorder %s22, 1
    %s24 = scalar_select %p23, 0, %s22
    %s25 = sadd.s32 1, %s16
    %s26 = scalar_select %p23, %s25, %s16
    %p27 = scmp.ge.s32.totalorder %s26, 2
    %s28 = scalar_select %p27, 0, %s26
    %s29 = ssub.s32 %s16, %s28
    %p30 = scmp.eq.s32.totalorder %s29, 0
    %s32 = sadd.s32 %s31, 1
    %s33 = scalar_select %p30, %s31, %s32
    %p36 = pneg %p30
    %p37 = scmp.eq.s32.totalorder %s9, 1
    %p38 = por %p36, %p37
    %p39 = scmp.ne.s32.totalorder %s31, %s34
    %p40 = scmp.eq.s32.totalorder %s9, 0
    %p41 = por %p39, %p40
    %p42 = scmp.ne.s32.totalorder %s31, %s34
    %p43 = scmp.eq.s32.totalorder %s14, 1
    %p44 = por %p42, %p43
    %p45 = scmp.ne.s32.totalorder %s34, %s35
    %p46 = scmp.eq.s32.totalorder %s14, 0
    %p47 = por %p45, %p46
    %p48 = scmp.ne.s32.totalorder %s34, %s35
    %p49 = scmp.eq.s32.totalorder %s15, 1
    %p50 = por %p48, %p49
    %p52 = scmp.ne.s32.totalorder %s35, %s51
    %p53 = scmp.eq.s32.totalorder %s15, 0
    %p54 = por %p52, %p53
    %s56 = sadd.s32 %s55, 1
    %p59 = scmp.eq.s32.totalorder %s9, 1
    %p60 = scmp.ne.s32.totalorder %s55, %s57
    %p61 = scmp.eq.s32.totalorder %s9, 0
    %p62 = por %p60, %p61
    %p63 = scmp.ne.s32.totalorder %s55, %s57
    %p64 = scmp.eq.s32.totalorder %s14, 1
    %p65 = por %p63, %p64
    %p66 = scmp.ne.s32.totalorder %s57, %s58
    %p67 = scmp.eq.s32.totalorder %s14, 0
    %p68 = por %p66, %p67
    %p69 = scmp.ne.s32.totalorder %s57, %s58
    %p70 = scmp.eq.s32.totalorder %s15, 1
    %p71 = por %p69, %p70
    %p73 = scmp.ne.s32.totalorder %s58, %s72
    %p74 = scmp.eq.s32.totalorder %s15, 0
    %p75 = por %p73, %p74
    %s77 = sadd.s32 %s76, 1
    %p80 = scmp.eq.s32.totalorder %s9, 1
    %p81 = scmp.ne.s32.totalorder %s76, %s78
    %p82 = scmp.eq.s32.totalorder %s9, 0
    %p83 = por %p81, %p82
    %p84 = scmp.ne.s32.totalorder %s76, %s78
    %p85 = scmp.eq.s32.totalorder %s14, 1
    %p86 = por %p84, %p85
    %p87 = scmp.ne.s32.totalorder %s78, %s79
    %p88 = scmp.eq.s32.totalorder %s14, 0
    %p89 = por %p87, %p88
    %p90 = scmp.ne.s32.totalorder %s78, %s79
    %p91 = scmp.eq.s32.totalorder %s15, 1
    %p92 = por %p90, %p91
    %p94 = scmp.ne.s32.totalorder %s79, %s93
    %p95 = scmp.eq.s32.totalorder %s15, 0
    %p96 = por %p94, %p95
    %s97 = ssub.s32 %s16, %s28
    %s98 = ssub.s32 %s17, %s24
    %s99 = sor.u32 %s97, %s98
    %p100 = scmp.eq.s32.totalorder %s99, 0
    %s102 = sadd.s32 %s101, 1
    %s103 = scalar_select %p100, %s101, %s102
    %p106 = pneg %p100
    %p107 = scmp.eq.s32.totalorder %s9, 1
    %p108 = por %p106, %p107
    %p109 = scmp.ne.s32.totalorder %s101, %s104
    %p110 = scmp.eq.s32.totalorder %s9, 0
    %p111 = por %p109, %p110
    %p112 = scmp.ne.s32.totalorder %s101, %s104
    %p113 = scmp.eq.s32.totalorder %s14, 1
    %p114 = por %p112, %p113
    %p115 = scmp.ne.s32.totalorder %s104, %s105
    %p116 = scmp.eq.s32.totalorder %s14, 0
    %p117 = por %p115, %p116
    %p118 = scmp.ne.s32.totalorder %s104, %s105
    %p119 = scmp.eq.s32.totalorder %s15, 1
    %p120 = por %p118, %p119
    %p122 = scmp.ne.s32.totalorder %s105, %s121
    %p123 = scmp.eq.s32.totalorder %s15, 0
    %p124 = por %p122, %p123
    %p125 = scmp.le.s32.totalorder 1, %s9
    %p126 = scmp.lt.s32.totalorder %s9, 3
    %p127 = pnand %p125, %p126
    %p128 = pneg %p127
    // Predicated region
    $region9: #{encoder_forward.7} parent=5 // pred_check
      _
    $region10: #{encoder_forward.7} parent=5 // pred_check_branch
      %130 = sbr.rel (%p127) target = $region12
    $region11: #{encoder_forward.7} parent=5 // pred_region
      %s131 = ssub.s32 %s9, 1
      // Predicated region
      $region13: #{encoder_forward.7} parent=11 // pred_check
        %p132 = pneg %p68
      $region14: #{encoder_forward.7} parent=11 // pred_check_branch
        %134 = sbr.rel (%p132) target = $region16
      $region15: #{encoder_forward.7} parent=11 // pred_region
        _
      $region16: #{encoder_forward.7} parent=11 // pred_fallthru
        _
      // Predicated region
      $region17: #{encoder_forward.7} parent=11 // pred_check
        %p135 = pneg %p89
      $region18: #{encoder_forward.7} parent=11 // pred_check_branch
        %137 = sbr.rel (%p135) target = $region20
      $region19: #{encoder_forward.7} parent=11 // pred_region
        _
      $region20: #{encoder_forward.7} parent=11 // pred_fallthru
        _
    $region12: #{encoder_forward.7} parent=5 // pred_fallthru
      _
    %p138 = scmp.lt.s32.totalorder %s9, 2
    // Predicated region
    $region21: #{encoder_forward.7} parent=5 // pred_check
      %p139 = pneg %p138
    $region22: #{encoder_forward.7} parent=5 // pred_check_branch
      %141 = sbr.rel (%p139) target = $region24
    $region23: #{encoder_forward.7} parent=5 // pred_region
      // Predicated region
      $region25: #{encoder_forward.7} parent=23 // pred_check
        %p142 = pneg %p41
      $region26: #{encoder_forward.7} parent=23 // pred_check_branch
        %144 = sbr.rel (%p142) target = $region28
      $region27: #{encoder_forward.7} parent=23 // pred_region
        %p145 = scmp.lt.s32.totalorder %s16, 1
        %s146 = scalar_select %p145, %s16, 1
        %s147 = smul.addr %s146, 4
        %s148 = smul.addr %s147, 8
        %s149 = scalar_lea.vmem %s0, %s148
      $region28: #{encoder_forward.7} parent=23 // pred_fallthru
        _
    $region24: #{encoder_forward.7} parent=5 // pred_fallthru
      _
    %p150 = scmp.le.s32.totalorder 1, %s9
    %p151 = scmp.lt.s32.totalorder %s9, 3
    %p152 = pnand %p150, %p151
    %p153 = pneg %p152
    // Predicated region
    $region29: #{encoder_forward.7} parent=5 // pred_check
      _
    $region30: #{encoder_forward.7} parent=5 // pred_check_branch
      %155 = sbr.rel (%p152) target = $region32
    $region31: #{encoder_forward.7} parent=5 // pred_region
      %s156 = ssub.s32 %s9, 1
      %p157 = scmp.lt.s32.totalorder %s18, 1
      %s158 = scalar_select %p157, %s18, 1
      %s159 = smul.addr %s158, 4
      %s160 = smul.addr %s159, 8
      %s161 = scalar_lea.vmem %s0, %s160
      %p162 = pneg %p47
      %p163 = pneg %p44
      %p164 = pneg %p68
      %p165 = pneg %p65
      %p166 = pneg %p89
      %p167 = pneg %p86
      %p168 = pneg %p117
      %p169 = pneg %p114
      %p170 = scmp.lt.s32.totalorder %s18, 1
      %s171 = scalar_select %p170, %s18, 1
      %p172 = scmp.lt.s32.totalorder %s19, 0
      %s173 = scalar_select %p172, %s19, 0
      %s174 = sadd.s32 %s173, %s171
      %s175 = smul.addr %s174, 8
      %s176 = scalar_lea.vmem %s3, %s175
      %p177 = scmp.lt.s32.totalorder %s18, 1
      %s178 = scalar_select %p177, %s18, 1
      %s179 = smul.addr %s178, 4
      %s180 = smul.addr %s179, 8
      %s181 = scalar_lea.vmem %s0, %s180
      %p182 = scmp.lt.s32.totalorder %s18, 1
      %s183 = scalar_select %p182, %s18, 1
      %p184 = scmp.lt.s32.totalorder %s19, 0
      %s185 = scalar_select %p184, %s19, 0
      %s186 = sadd.s32 %s185, %s183
      %s187 = smul.addr %s186, 8
      %s188 = scalar_lea.vmem %s3, %s187
      %v189 = vld [vmem:[%s181] sm:$0xff]
      %v190 = vld [vmem:[%s181 + $0x8] sm:$0xff]
      %v191 = vld [vmem:[%s1] sm:$0xff]
      %v192 = vld [vmem:[%s1 + $0x8] sm:$0xff]
      %v193 = vld [vmem:[%s1 + $0x10] sm:$0xff]
      %v194 = vld [vmem:[%s1 + $0x18] sm:$0xff]
      %v195 = vld [vmem:[%s1 + $0x20] sm:$0xff]
      %v196 = vld [vmem:[%s1 + $0x28] sm:$0xff]
      %v197 = vld [vmem:[%s1 + $0x30] sm:$0xff]
      %v198 = vld [vmem:[%s1 + $0x38] sm:$0xff]
      %v199 = vld [vmem:[%s1 + $0x40] sm:$0xff]
      %v200 = vld [vmem:[%s1 + $0x48] sm:$0xff]
      %v201 = vld [vmem:[%s1 + $0x50] sm:$0xff]
      %v202 = vld [vmem:[%s1 + $0x58] sm:$0xff]
      %v203 = vld [vmem:[%s1 + $0x60] sm:$0xff]
      %v204 = vld [vmem:[%s1 + $0x68] sm:$0xff]
      %v205 = vld [vmem:[%s1 + $0x70] sm:$0xff]
      %v206 = vld [vmem:[%s1 + $0x78] sm:$0xff]
      %v207 = vld [vmem:[%s1 + $0x80] sm:$0xff]
      %v208 = vld [vmem:[%s1 + $0x88] sm:$0xff]
      %v209 = vld [vmem:[%s1 + $0x90] sm:$0xff]
      %v210 = vld [vmem:[%s1 + $0x98] sm:$0xff]
      %v211 = vld [vmem:[%s1 + $0xa0] sm:$0xff]
      %v212 = vld [vmem:[%s1 + $0xa8] sm:$0xff]
      %v213 = vld [vmem:[%s1 + $0xb0] sm:$0xff]
      %v214 = vld [vmem:[%s1 + $0xb8] sm:$0xff]
      %v215 = vld [vmem:[%s1 + $0xc0] sm:$0xff]
      %v216 = vld [vmem:[%s1 + $0xc8] sm:$0xff]
      %v217 = vld [vmem:[%s1 + $0xd0] sm:$0xff]
      %v218 = vld [vmem:[%s1 + $0xd8] sm:$0xff]
      %v219 = vld [vmem:[%s1 + $0xe0] sm:$0xff]
      %v220 = vld [vmem:[%s1 + $0xe8] sm:$0xff]
      %v221 = vld [vmem:[%s1 + $0xf0] sm:$0xff]
      %v222 = vld [vmem:[%s1 + $0xf8] sm:$0xff]
      %v223 = vld [vmem:[%s181] sm:$0xfe]
      %v224 = vld [vmem:[%s181 + $0x8] sm:$0xfe]
      %v225 = vld [vmem:[%s181 + $0x10] sm:$0x1]
      %v226 = vld [vmem:[%s181 + $0x18] sm:$0x1]
      %s227 = scalar_lea.vmem %s1, 256
      %v228 = vld [vmem:[%s227] sm:$0xff]
      %v229 = vld [vmem:[%s227 + $0x8] sm:$0xff]
      %v230 = vld [vmem:[%s227 + $0x10] sm:$0xff]
      %v231 = vld [vmem:[%s227 + $0x18] sm:$0xff]
      %v232 = vld [vmem:[%s227 + $0x20] sm:$0xff]
      %v233 = vld [vmem:[%s227 + $0x28] sm:$0xff]
      %v234 = vld [vmem:[%s227 + $0x30] sm:$0xff]
      %v235 = vld [vmem:[%s227 + $0x38] sm:$0xff]
      %v236 = vld [vmem:[%s227 + $0x40] sm:$0xff]
      %v237 = vld [vmem:[%s227 + $0x48] sm:$0xff]
      %v238 = vld [vmem:[%s227 + $0x50] sm:$0xff]
      %v239 = vld [vmem:[%s227 + $0x58] sm:$0xff]
      %v240 = vld [vmem:[%s227 + $0x60] sm:$0xff]
      %v241 = vld [vmem:[%s227 + $0x68] sm:$0xff]
      %v242 = vld [vmem:[%s227 + $0x70] sm:$0xff]
      %v243 = vld [vmem:[%s227 + $0x78] sm:$0xff]
      %v244 = vld [vmem:[%s227 + $0x80] sm:$0xff]
      %v245 = vld [vmem:[%s227 + $0x88] sm:$0xff]
      %v246 = vld [vmem:[%s227 + $0x90] sm:$0xff]
      %v247 = vld [vmem:[%s227 + $0x98] sm:$0xff]
      %v248 = vld [vmem:[%s227 + $0xa0] sm:$0xff]
      %v249 = vld [vmem:[%s227 + $0xa8] sm:$0xff]
      %v250 = vld [vmem:[%s227 + $0xb0] sm:$0xff]
      %v251 = vld [vmem:[%s227 + $0xb8] sm:$0xff]
      %v252 = vld [vmem:[%s227 + $0xc0] sm:$0xff]
      %v253 = vld [vmem:[%s227 + $0xc8] sm:$0xff]
      %v254 = vld [vmem:[%s227 + $0xd0] sm:$0xff]
      %v255 = vld [vmem:[%s227 + $0xd8] sm:$0xff]
      %v256 = vld [vmem:[%s227 + $0xe0] sm:$0xff]
      %v257 = vld [vmem:[%s227 + $0xe8] sm:$0xff]
      %v258 = vld [vmem:[%s227 + $0xf0] sm:$0xff]
      %v259 = vld [vmem:[%s227 + $0xf8] sm:$0xff]
      %vm264 = vcmask 1046528
      %v265 = vrot.slane %v223, 1
      %v266 = vrot.slane %v225, 1
      %v267 = vsel %vm264, %v265, %v266
      %v268 = vrot.slane %v224, 1
      %v269 = vrot.slane %v226, 1
      %v270 = vsel %vm264, %v268, %v269
      %273 = vmatprep.subr.mxu0 0.0
      %274 = vmatpush1.msra.mxu0 %v228
      %275 = vmatprep.subr.mxu0 0.0
      %276 = vmatpush1.msra.mxu0 %v229
      %277 = vmatprep.subr.mxu0 0.0
      %278 = vmatpush1.msra.mxu0 %v230
      %279 = vmatprep.subr.mxu0 0.0
      %280 = vmatpush1.msra.mxu0 %v231
      %281 = vmatprep.subr.mxu0 0.0
      %282 = vmatpush1.msra.mxu0 %v232
      %283 = vmatprep.subr.mxu0 0.0
      %284 = vmatpush1.msra.mxu0 %v233
      %285 = vmatprep.subr.mxu0 0.0
      %286 = vmatpush1.msra.mxu0 %v234
      %287 = vmatprep.subr.mxu0 0.0
      %288 = vmatpush1.msra.mxu0 %v235
      %289 = vmatprep.subr.mxu0 0.0
      %290 = vmatpush1.msra.mxu0 %v236
      %291 = vmatprep.subr.mxu0 0.0
      %292 = vmatpush1.msra.mxu0 %v237
      %293 = vmatprep.subr.mxu0 0.0
      %294 = vmatpush1.msra.mxu0 %v238
      %295 = vmatprep.subr.mxu0 0.0
      %296 = vmatpush1.msra.mxu0 %v239
      %297 = vmatprep.subr.mxu0 0.0
      %298 = vmatpush1.msra.mxu0 %v240
      %299 = vmatprep.subr.mxu0 0.0
      %300 = vmatpush1.msra.mxu0 %v241
      %301 = vmatprep.subr.mxu0 0.0
      %302 = vmatpush1.msra.mxu0 %v242
      %303 = vmatprep.subr.mxu0 0.0
      %304 = vmatpush1.msra.mxu0 %v243
      %305 = vmatprep.subr.mxu0 0.0
      %306 = vmatpush1.msra.mxu0 %v244
      %307 = vmatprep.subr.mxu0 0.0
      %308 = vmatpush1.msra.mxu0 %v245
      %309 = vmatprep.subr.mxu0 0.0
      %310 = vmatpush1.msra.mxu0 %v246
      %311 = vmatprep.subr.mxu0 0.0
      %312 = vmatpush1.msra.mxu0 %v247
      %313 = vmatprep.subr.mxu0 0.0
      %314 = vmatpush1.msra.mxu0 %v248
      %315 = vmatprep.subr.mxu0 0.0
      %316 = vmatpush1.msra.mxu0 %v249
      %317 = vmatprep.subr.mxu0 0.0
      %318 = vmatpush1.msra.mxu0 %v250
      %319 = vmatprep.subr.mxu0 0.0
      %320 = vmatpush1.msra.mxu0 %v251
      %321 = vmatprep.subr.mxu0 0.0
      %322 = vmatpush1.msra.mxu0 %v252
      %323 = vmatprep.subr.mxu0 0.0
      %324 = vmatpush1.msra.mxu0 %v253
      %325 = vmatprep.subr.mxu0 0.0
      %326 = vmatpush1.msra.mxu0 %v254
      %327 = vmatprep.subr.mxu0 0.0
      %328 = vmatpush1.msra.mxu0 %v255
      %329 = vmatprep.subr.mxu0 0.0
      %330 = vmatpush1.msra.mxu0 %v256
      %331 = vmatprep.subr.mxu0 0.0
      %332 = vmatpush1.msra.mxu0 %v257
      %333 = vmatprep.subr.mxu0 0.0
      %334 = vmatpush1.msra.mxu0 %v258
      %335 = vmatprep.subr.mxu0 0.0
      %336 = vmatpush1.msra.mxu0 %v259
      %337 = vmatprep.mubr.f32.mxu0 %v270
      %338 = vmatmul.mubr.f32.gmra.mrb[0].mxu0 %v267
      %v339 = vpop.f32.mrb[0].mxu0
      %v340 = vadd.f32 0.0, %v339
      %v341 = vpop.f32.mrb[0].mxu0
      %342 = vdwg.mxu0
      %343 = vmatprep.subr.mxu0 0.0
      %344 = vmatpush1.msra.mxu0 %v191
      %345 = vmatprep.subr.mxu0 0.0
      %346 = vmatpush1.msra.mxu0 %v192
      %347 = vmatprep.subr.mxu0 0.0
      %348 = vmatpush1.msra.mxu0 %v193
      %349 = vmatprep.subr.mxu0 0.0
      %350 = vmatpush1.msra.mxu0 %v194
      %351 = vmatprep.subr.mxu0 0.0
      %352 = vmatpush1.msra.mxu0 %v195
      %353 = vmatprep.subr.mxu0 0.0
      %354 = vmatpush1.msra.mxu0 %v196
      %355 = vmatprep.subr.mxu0 0.0
      %356 = vmatpush1.msra.mxu0 %v197
      %357 = vmatprep.subr.mxu0 0.0
      %358 = vmatpush1.msra.mxu0 %v198
      %359 = vmatprep.subr.mxu0 0.0
      %360 = vmatpush1.msra.mxu0 %v199
      %361 = vmatprep.subr.mxu0 0.0
      %362 = vmatpush1.msra.mxu0 %v200
      %363 = vmatprep.subr.mxu0 0.0
      %364 = vmatpush1.msra.mxu0 %v201
      %365 = vmatprep.subr.mxu0 0.0
      %366 = vmatpush1.msra.mxu0 %v202
      %367 = vmatprep.subr.mxu0 0.0
      %368 = vmatpush1.msra.mxu0 %v203
      %369 = vmatprep.subr.mxu0 0.0
      %370 = vmatpush1.msra.mxu0 %v204
      %371 = vmatprep.subr.mxu0 0.0
      %372 = vmatpush1.msra.mxu0 %v205
      %373 = vmatprep.subr.mxu0 0.0
      %374 = vmatpush1.msra.mxu0 %v206
      %375 = vmatprep.subr.mxu0 0.0
      %376 = vmatpush1.msra.mxu0 %v207
      %377 = vmatprep.subr.mxu0 0.0
      %378 = vmatpush1.msra.mxu0 %v208
      %379 = vmatprep.subr.mxu0 0.0
      %380 = vmatpush1.msra.mxu0 %v209
      %381 = vmatprep.subr.mxu0 0.0
      %382 = vmatpush1.msra.mxu0 %v210
      %383 = vmatprep.subr.mxu0 0.0
      %384 = vmatpush1.msra.mxu0 %v211
      %385 = vmatprep.subr.mxu0 0.0
      %386 = vmatpush1.msra.mxu0 %v212
      %387 = vmatprep.subr.mxu0 0.0
      %388 = vmatpush1.msra.mxu0 %v213
      %389 = vmatprep.subr.mxu0 0.0
      %390 = vmatpush1.msra.mxu0 %v214
      %391 = vmatprep.subr.mxu0 0.0
      %392 = vmatpush1.msra.mxu0 %v215
      %393 = vmatprep.subr.mxu0 0.0
      %394 = vmatpush1.msra.mxu0 %v216
      %395 = vmatprep.subr.mxu0 0.0
      %396 = vmatpush1.msra.mxu0 %v217
      %397 = vmatprep.subr.mxu0 0.0
      %398 = vmatpush1.msra.mxu0 %v218
      %399 = vmatprep.subr.mxu0 0.0
      %400 = vmatpush1.msra.mxu0 %v219
      %401 = vmatprep.subr.mxu0 0.0
      %402 = vmatpush1.msra.mxu0 %v220
      %403 = vmatprep.subr.mxu0 0.0
      %404 = vmatpush1.msra.mxu0 %v221
      %405 = vmatprep.subr.mxu0 0.0
      %406 = vmatpush1.msra.mxu0 %v222
      %407 = vmatprep.mubr.f32.mxu0 %v190
      %408 = vmatmul.mubr.f32.gmra.mrb[0].mxu0 %v189
      %v409 = vpop.f32.mrb[0].mxu0
      %v410 = vadd.f32 %v340, %v409
      %v411 = vpop.f32.mrb[0].mxu0
      %412 = vdwg.mxu0
      %v413 = vld [vmem:[%s181] sm:$0xfc]
      %v414 = vld [vmem:[%s181 + $0x8] sm:$0xfc]
      %v415 = vld [vmem:[%s181 + $0x10] sm:$0x3]
      %v416 = vld [vmem:[%s181 + $0x18] sm:$0x3]
      %s417 = scalar_lea.vmem %s1, 512
      %v418 = vld [vmem:[%s417] sm:$0xff]
      %v419 = vld [vmem:[%s417 + $0x8] sm:$0xff]
      %v420 = vld [vmem:[%s417 + $0x10] sm:$0xff]
      %v421 = vld [vmem:[%s417 + $0x18] sm:$0xff]
      %v422 = vld [vmem:[%s417 + $0x20] sm:$0xff]
      %v423 = vld [vmem:[%s417 + $0x28] sm:$0xff]
      %v424 = vld [vmem:[%s417 + $0x30] sm:$0xff]
      %v425 = vld [vmem:[%s417 + $0x38] sm:$0xff]
      %v426 = vld [vmem:[%s417 + $0x40] sm:$0xff]
      %v427 = vld [vmem:[%s417 + $0x48] sm:$0xff]
      %v428 = vld [vmem:[%s417 + $0x50] sm:$0xff]
      %v429 = vld [vmem:[%s417 + $0x58] sm:$0xff]
      %v430 = vld [vmem:[%s417 + $0x60] sm:$0xff]
      %v431 = vld [vmem:[%s417 + $0x68] sm:$0xff]
      %v432 = vld [vmem:[%s417 + $0x70] sm:$0xff]
      %v433 = vld [vmem:[%s417 + $0x78] sm:$0xff]
      %v434 = vld [vmem:[%s417 + $0x80] sm:$0xff]
      %v435 = vld [vmem:[%s417 + $0x88] sm:$0xff]
      %v436 = vld [vmem:[%s417 + $0x90] sm:$0xff]
      %v437 = vld [vmem:[%s417 + $0x98] sm:$0xff]
      %v438 = vld [vmem:[%s417 + $0xa0] sm:$0xff]
      %v439 = vld [vmem:[%s417 + $0xa8] sm:$0xff]
      %v440 = vld [vmem:[%s417 + $0xb0] sm:$0xff]
      %v441 = vld [vmem:[%s417 + $0xb8] sm:$0xff]
      %v442 = vld [vmem:[%s417 + $0xc0] sm:$0xff]
      %v443 = vld [vmem:[%s417 + $0xc8] sm:$0xff]
      %v444 = vld [vmem:[%s417 + $0xd0] sm:$0xff]
      %v445 = vld [vmem:[%s417 + $0xd8] sm:$0xff]
      %v446 = vld [vmem:[%s417 + $0xe0] sm:$0xff]
      %v447 = vld [vmem:[%s417 + $0xe8] sm:$0xff]
      %v448 = vld [vmem:[%s417 + $0xf0] sm:$0xff]
      %v449 = vld [vmem:[%s417 + $0xf8] sm:$0xff]
      %vm454 = vcmask 1045504
      %v455 = vrot.slane %v413, 2
      %v456 = vrot.slane %v415, 2
      %v457 = vsel %vm454, %v455, %v456
      %v458 = vrot.slane %v414, 2
      %v459 = vrot.slane %v416, 2
      %v460 = vsel %vm454, %v458, %v459
      %463 = vmatprep.subr.mxu0 0.0
      %464 = vmatpush1.msra.mxu0 %v418
      %465 = vmatprep.subr.mxu0 0.0
      %466 = vmatpush1.msra.mxu0 %v419
      %467 = vmatprep.subr.mxu0 0.0
      %468 = vmatpush1.msra.mxu0 %v420
      %469 = vmatprep.subr.mxu0 0.0
      %470 = vmatpush1.msra.mxu0 %v421
      %471 = vmatprep.subr.mxu0 0.0
      %472 = vmatpush1.msra.mxu0 %v422
      %473 = vmatprep.subr.mxu0 0.0
      %474 = vmatpush1.msra.mxu0 %v423
      %475 = vmatprep.subr.mxu0 0.0
      %476 = vmatpush1.msra.mxu0 %v424
      %477 = vmatprep.subr.mxu0 0.0
      %478 = vmatpush1.msra.mxu0 %v425
      %479 = vmatprep.subr.mxu0 0.0
      %480 = vmatpush1.msra.mxu0 %v426
      %481 = vmatprep.subr.mxu0 0.0
      %482 = vmatpush1.msra.mxu0 %v427
      %483 = vmatprep.subr.mxu0 0.0
      %484 = vmatpush1.msra.mxu0 %v428
      %485 = vmatprep.subr.mxu0 0.0
      %486 = vmatpush1.msra.mxu0 %v429
      %487 = vmatprep.subr.mxu0 0.0
      %488 = vmatpush1.msra.mxu0 %v430
      %489 = vmatprep.subr.mxu0 0.0
      %490 = vmatpush1.msra.mxu0 %v431
      %491 = vmatprep.subr.mxu0 0.0
      %492 = vmatpush1.msra.mxu0 %v432
      %493 = vmatprep.subr.mxu0 0.0
      %494 = vmatpush1.msra.mxu0 %v433
      %495 = vmatprep.subr.mxu0 0.0
      %496 = vmatpush1.msra.mxu0 %v434
      %497 = vmatprep.subr.mxu0 0.0
      %498 = vmatpush1.msra.mxu0 %v435
      %499 = vmatprep.subr.mxu0 0.0
      %500 = vmatpush1.msra.mxu0 %v436
      %501 = vmatprep.subr.mxu0 0.0
      %502 = vmatpush1.msra.mxu0 %v437
      %503 = vmatprep.subr.mxu0 0.0
      %504 = vmatpush1.msra.mxu0 %v438
      %505 = vmatprep.subr.mxu0 0.0
      %506 = vmatpush1.msra.mxu0 %v439
      %507 = vmatprep.subr.mxu0 0.0
      %508 = vmatpush1.msra.mxu0 %v440
      %509 = vmatprep.subr.mxu0 0.0
      %510 = vmatpush1.msra.mxu0 %v441
      %511 = vmatprep.subr.mxu0 0.0
      %512 = vmatpush1.msra.mxu0 %v442
      %513 = vmatprep.subr.mxu0 0.0
      %514 = vmatpush1.msra.mxu0 %v443
      %515 = vmatprep.subr.mxu0 0.0
      %516 = vmatpush1.msra.mxu0 %v444
      %517 = vmatprep.subr.mxu0 0.0
      %518 = vmatpush1.msra.mxu0 %v445
      %519 = vmatprep.subr.mxu0 0.0
      %520 = vmatpush1.msra.mxu0 %v446
      %521 = vmatprep.subr.mxu0 0.0
      %522 = vmatpush1.msra.mxu0 %v447
      %523 = vmatprep.subr.mxu0 0.0
      %524 = vmatpush1.msra.mxu0 %v448
      %525 = vmatprep.subr.mxu0 0.0
      %526 = vmatpush1.msra.mxu0 %v449
      %527 = vmatprep.mubr.f32.mxu0 %v460
      %528 = vmatmul.mubr.f32.gmra.mrb[0].mxu0 %v457
      %v529 = vpop.f32.mrb[0].mxu0
      %v530 = vadd.f32 0.0, %v529
      %v531 = vpop.f32.mrb[0].mxu0
      %532 = vdwg.mxu0
      %v533 = vadd.f32 %v410, %v530
      %v534 = vld [vmem:[%s2] sm:$0x1]
      %v536 = vlaneseq
      %v537 = vshrl.u32 %v536, 7
      %v538 = vsub.s32 0, %v537
      %v539 = vrot.slane %v534, %v538
      %v541 = vadd.f32 %v533, %v539
      %542 = vst [vmem:[%s188] sm:$0xff] %v541
      %p543 = scmp.lt.s32.totalorder %s18, 1
      %s544 = scalar_select %p543, %s18, 1
      %p545 = scmp.lt.s32.totalorder %s19, 0
      %s546 = scalar_select %p545, %s19, 0
      %s547 = sadd.s32 %s546, %s544
      %s548 = smul.addr %s547, 8
      %s549 = scalar_lea.vmem %s3, %s548
      // Predicated region
      $region33: #{encoder_forward.7} parent=31 // pred_check
        %p550 = pneg %p114
      $region34: #{encoder_forward.7} parent=31 // pred_check_branch
        %552 = sbr.rel (%p550) target = $region36
      $region35: #{encoder_forward.7} parent=31 // pred_region
        _
      $region36: #{encoder_forward.7} parent=31 // pred_fallthru
        _
    $region32: #{encoder_forward.7} parent=5 // pred_fallthru
      _
    %p553 = scmp.le.s32.totalorder 2, %s9
    // Predicated region
    $region37: #{encoder_forward.7} parent=5 // pred_check
      %p554 = pneg %p553
    $region38: #{encoder_forward.7} parent=5 // pred_check_branch
      %556 = sbr.rel (%p554) target = $region40
    $region39: #{encoder_forward.7} parent=5 // pred_region
      %s557 = ssub.s32 %s9, 2
      // Predicated region
      $region41: #{encoder_forward.7} parent=39 // pred_check
        %p558 = pneg %p120
      $region42: #{encoder_forward.7} parent=39 // pred_check_branch
        %560 = sbr.rel (%p558) target = $region44
      $region43: #{encoder_forward.7} parent=39 // pred_region
        %p561 = scmp.lt.s32.totalorder %s20, 1
        %s562 = scalar_select %p561, %s20, 1
        %p563 = scmp.lt.s32.totalorder %s21, 0
        %s564 = scalar_select %p563, %s21, 0
        %s565 = sadd.s32 %s564, %s562
        %s566 = smul.addr %s565, 8
        %s567 = scalar_lea.vmem %s3, %s566
      $region44: #{encoder_forward.7} parent=39 // pred_fallthru
        _
    $region40: #{encoder_forward.7} parent=5 // pred_fallthru
      _
  $region6: #{encoder_forward.7} parent=0 // loop_footer
    %s13 = sadd.s32 1, %s9
  $region7: #{encoder_forward.7} parent=0 // loop_footer_branch
    %8 = sbr.rel target = $region3
  $region8: #{encoder_forward.7} parent=0 // loop_exit
    _

// kernel: encoder_forward.9
$region0: #{encoder_forward.9}
  #allocation0 [shape = 'u32[]', space=smem, size = 0x4, offset = 0x4, fixed_abs, tag = 'smem constant byte address 0x4 - core index']
  #allocation1 [shape = 'u32[144,128]{1,0:T(1,128)}', space=vmem, size = 0x12000, scoped, tag = 'internal scratch']
  %s0 = inlined_call_operand.vmem [shape: f32[2,14,128], index: 0, kind: input, shape index: {}]
  %s1 = inlined_call_operand.vmem [shape: f32[3,128,128], index: 1, kind: input, shape index: {}]
  %s2 = inlined_call_operand.vmem [shape: f32[1,128], index: 2, kind: input, shape index: {}]
  %s3 = inlined_call_operand.vmem [shape: f32[1,128,128], index: 3, kind: input, shape index: {}]
  %s4 = inlined_call_operand.vmem [shape: f32[1,128], index: 4, kind: input, shape index: {}]
  %s5 = inlined_call_operand.vmem [shape: f32[2,8,128], index: 5, kind: output, shape index: {}]
  %s6 = sld [smem:[#allocation0]]
  $region53: #{encoder_forward.9} parent=0
    _
  %s8 = ssub.s32 1, %s6
  %s9 = scalar_select 0, %s8, %s6
  loop: start=0, step=1, limit=4
  $region2: #{encoder_forward.9} parent=0 // loop_pre_header
    _
  $region3: #{encoder_forward.9} parent=0 // loop_header
    %s11 = sphi 0, %s15
    %p12 = scmp.ge.s32.totalorder %s11, 4
    %s18 = sphi 0, %s30
    %s19 = sphi 0, %s26
    %s20 = sphi 0, %s18
    %s21 = sphi 0, %s19
    %s22 = sphi 0, %s20
    %s23 = sphi 0, %s21
    %s33 = sphi 0, %s35
    %s36 = sphi 0, %s33
    %s37 = sphi 0, %s36
    %s53 = sphi 0, %s37
    %s57 = sphi 0, %s57
    %s59 = sphi 0, %s57
    %s60 = sphi 0, %s59
    %s74 = sphi 0, %s60
    %s78 = sphi 0, %s78
    %s80 = sphi 0, %s78
    %s81 = sphi 0, %s80
    %s95 = sphi 0, %s81
    %s99 = sphi 0, %s99
    %s101 = sphi 0, %s99
    %s102 = sphi 0, %s101
    %s116 = sphi 0, %s102
    %s120 = sphi 0, %s120
    %s122 = sphi 0, %s120
    %s123 = sphi 0, %s122
    %s137 = sphi 0, %s123
    %s145 = sphi 0, %s147
    %s148 = sphi 0, %s145
    %s149 = sphi 0, %s148
    %s165 = sphi 0, %s149
  $region4: #{encoder_forward.9} parent=0 // loop_header_branch
    %14 = sbr.rel (%p12) target = $region8
  $region5: #{encoder_forward.9} parent=0 // loop_body
    %s16 = ssub.s32 %s11, 1
    %s17 = ssub.s32 %s11, 2
    %s24 = sadd.s32 1, %s19
    %p25 = scmp.ge.s32.totalorder %s24, 1
    %s26 = scalar_select %p25, 0, %s24
    %s27 = sadd.s32 1, %s18
    %s28 = scalar_select %p25, %s27, %s18
    %p29 = scmp.ge.s32.totalorder %s28, 2
    %s30 = scalar_select %p29, 0, %s28
    %s31 = ssub.s32 %s18, %s30
    %p32 = scmp.eq.s32.totalorder %s31, 0
    %s34 = sadd.s32 %s33, 1
    %s35 = scalar_select %p32, %s33, %s34
    %p38 = pneg %p32
    %p39 = scmp.eq.s32.totalorder %s11, 1
    %p40 = por %p38, %p39
    %p41 = scmp.ne.s32.totalorder %s33, %s36
    %p42 = scmp.eq.s32.totalorder %s11, 0
    %p43 = por %p41, %p42
    %p44 = scmp.ne.s32.totalorder %s33, %s36
    %p45 = scmp.eq.s32.totalorder %s16, 1
    %p46 = por %p44, %p45
    %p47 = scmp.ne.s32.totalorder %s36, %s37
    %p48 = scmp.eq.s32.totalorder %s16, 0
    %p49 = por %p47, %p48
    %p50 = scmp.ne.s32.totalorder %s36, %s37
    %p51 = scmp.eq.s32.totalorder %s17, 1
    %p52 = por %p50, %p51
    %p54 = scmp.ne.s32.totalorder %s37, %s53
    %p55 = scmp.eq.s32.totalorder %s17, 0
    %p56 = por %p54, %p55
    %s58 = sadd.s32 %s57, 1
    %p61 = scmp.eq.s32.totalorder %s11, 1
    %p62 = scmp.ne.s32.totalorder %s57, %s59
    %p63 = scmp.eq.s32.totalorder %s11, 0
    %p64 = por %p62, %p63
    %p65 = scmp.ne.s32.totalorder %s57, %s59
    %p66 = scmp.eq.s32.totalorder %s16, 1
    %p67 = por %p65, %p66
    %p68 = scmp.ne.s32.totalorder %s59, %s60
    %p69 = scmp.eq.s32.totalorder %s16, 0
    %p70 = por %p68, %p69
    %p71 = scmp.ne.s32.totalorder %s59, %s60
    %p72 = scmp.eq.s32.totalorder %s17, 1
    %p73 = por %p71, %p72
    %p75 = scmp.ne.s32.totalorder %s60, %s74
    %p76 = scmp.eq.s32.totalorder %s17, 0
    %p77 = por %p75, %p76
    %s79 = sadd.s32 %s78, 1
    %p82 = scmp.eq.s32.totalorder %s11, 1
    %p83 = scmp.ne.s32.totalorder %s78, %s80
    %p84 = scmp.eq.s32.totalorder %s11, 0
    %p85 = por %p83, %p84
    %p86 = scmp.ne.s32.totalorder %s78, %s80
    %p87 = scmp.eq.s32.totalorder %s16, 1
    %p88 = por %p86, %p87
    %p89 = scmp.ne.s32.totalorder %s80, %s81
    %p90 = scmp.eq.s32.totalorder %s16, 0
    %p91 = por %p89, %p90
    %p92 = scmp.ne.s32.totalorder %s80, %s81
    %p93 = scmp.eq.s32.totalorder %s17, 1
    %p94 = por %p92, %p93
    %p96 = scmp.ne.s32.totalorder %s81, %s95
    %p97 = scmp.eq.s32.totalorder %s17, 0
    %p98 = por %p96, %p97
    %s100 = sadd.s32 %s99, 1
    %p103 = scmp.eq.s32.totalorder %s11, 1
    %p104 = scmp.ne.s32.totalorder %s99, %s101
    %p105 = scmp.eq.s32.totalorder %s11, 0
    %p106 = por %p104, %p105
    %p107 = scmp.ne.s32.totalorder %s99, %s101
    %p108 = scmp.eq.s32.totalorder %s16, 1
    %p109 = por %p107, %p108
    %p110 = scmp.ne.s32.totalorder %s101, %s102
    %p111 = scmp.eq.s32.totalorder %s16, 0
    %p112 = por %p110, %p111
    %p113 = scmp.ne.s32.totalorder %s101, %s102
    %p114 = scmp.eq.s32.totalorder %s17, 1
    %p115 = por %p113, %p114
    %p117 = scmp.ne.s32.totalorder %s102, %s116
    %p118 = scmp.eq.s32.totalorder %s17, 0
    %p119 = por %p117, %p118
    %s121 = sadd.s32 %s120, 1
    %p124 = scmp.eq.s32.totalorder %s11, 1
    %p125 = scmp.ne.s32.totalorder %s120, %s122
    %p126 = scmp.eq.s32.totalorder %s11, 0
    %p127 = por %p125, %p126
    %p128 = scmp.ne.s32.totalorder %s120, %s122
    %p129 = scmp.eq.s32.totalorder %s16, 1
    %p130 = por %p128, %p129
    %p131 = scmp.ne.s32.totalorder %s122, %s123
    %p132 = scmp.eq.s32.totalorder %s16, 0
    %p133 = por %p131, %p132
    %p134 = scmp.ne.s32.totalorder %s122, %s123
    %p135 = scmp.eq.s32.totalorder %s17, 1
    %p136 = por %p134, %p135
    %p138 = scmp.ne.s32.totalorder %s123, %s137
    %p139 = scmp.eq.s32.totalorder %s17, 0
    %p140 = por %p138, %p139
    %s141 = ssub.s32 %s18, %s30
    %s142 = ssub.s32 %s19, %s26
    %s143 = sor.u32 %s141, %s142
    %p144 = scmp.eq.s32.totalorder %s143, 0
    %s146 = sadd.s32 %s145, 1
    %s147 = scalar_select %p144, %s145, %s146
    %p150 = pneg %p144
    %p151 = scmp.eq.s32.totalorder %s11, 1
    %p152 = por %p150, %p151
    %p153 = scmp.ne.s32.totalorder %s145, %s148
    %p154 = scmp.eq.s32.totalorder %s11, 0
    %p155 = por %p153, %p154
    %p156 = scmp.ne.s32.totalorder %s145, %s148
    %p157 = scmp.eq.s32.totalorder %s16, 1
    %p158 = por %p156, %p157
    %p159 = scmp.ne.s32.totalorder %s148, %s149
    %p160 = scmp.eq.s32.totalorder %s16, 0
    %p161 = por %p159, %p160
    %p162 = scmp.ne.s32.totalorder %s148, %s149
    %p163 = scmp.eq.s32.totalorder %s17, 1
    %p164 = por %p162, %p163
    %p166 = scmp.ne.s32.totalorder %s149, %s165
    %p167 = scmp.eq.s32.totalorder %s17, 0
    %p168 = por %p166, %p167
    %p169 = scmp.le.s32.totalorder 1, %s11
    %p170 = scmp.lt.s32.totalorder %s11, 3
    %p171 = pnand %p169, %p170
    %p172 = pneg %p171
    // Predicated region
    $region9: #{encoder_forward.9} parent=5 // pred_check
      _
    $region10: #{encoder_forward.9} parent=5 // pred_check_branch
      %174 = sbr.rel (%p171) target = $region12
    $region11: #{encoder_forward.9} parent=5 // pred_region
      %s175 = ssub.s32 %s11, 1
      // Predicated region
      $region13: #{encoder_forward.9} parent=11 // pred_check
        %p176 = pneg %p70
      $region14: #{encoder_forward.9} parent=11 // pred_check_branch
        %178 = sbr.rel (%p176) target = $region16
      $region15: #{encoder_forward.9} parent=11 // pred_region
        _
      $region16: #{encoder_forward.9} parent=11 // pred_fallthru
        _
      // Predicated region
      $region17: #{encoder_forward.9} parent=11 // pred_check
        %p179 = pneg %p91
      $region18: #{encoder_forward.9} parent=11 // pred_check_branch
        %181 = sbr.rel (%p179) target = $region20
      $region19: #{encoder_forward.9} parent=11 // pred_region
        _
      $region20: #{encoder_forward.9} parent=11 // pred_fallthru
        _
      // Predicated region
      $region21: #{encoder_forward.9} parent=11 // pred_check
        %p182 = pneg %p112
      $region22: #{encoder_forward.9} parent=11 // pred_check_branch
        %184 = sbr.rel (%p182) target = $region24
      $region23: #{encoder_forward.9} parent=11 // pred_region
        _
      $region24: #{encoder_forward.9} parent=11 // pred_fallthru
        _
      // Predicated region
      $region25: #{encoder_forward.9} parent=11 // pred_check
        %p185 = pneg %p133
      $region26: #{encoder_forward.9} parent=11 // pred_check_branch
        %187 = sbr.rel (%p185) target = $region28
      $region27: #{encoder_forward.9} parent=11 // pred_region
        _
      $region28: #{encoder_forward.9} parent=11 // pred_fallthru
        _
    $region12: #{encoder_forward.9} parent=5 // pred_fallthru
      _
    %p188 = scmp.lt.s32.totalorder %s11, 2
    // Predicated region
    $region29: #{encoder_forward.9} parent=5 // pred_check
      %p189 = pneg %p188
    $region30: #{encoder_forward.9} parent=5 // pred_check_branch
      %191 = sbr.rel (%p189) target = $region32
    $region31: #{encoder_forward.9} parent=5 // pred_region
      // Predicated region
      $region33: #{encoder_forward.9} parent=31 // pred_check
        %p192 = pneg %p43
      $region34: #{encoder_forward.9} parent=31 // pred_check_branch
        %194 = sbr.rel (%p192) target = $region36
      $region35: #{encoder_forward.9} parent=31 // pred_region
        %p195 = scmp.lt.s32.totalorder %s18, 1
        %s196 = scalar_select %p195, %s18, 1
        %s197 = smul.addr %s196, 2
        %s198 = smul.addr %s197, 8
        %s199 = scalar_lea.vmem %s0, %s198
      $region36: #{encoder_forward.9} parent=31 // pred_fallthru
        _
    $region32: #{encoder_forward.9} parent=5 // pred_fallthru
      _
    %p200 = scmp.le.s32.totalorder 1, %s11
    %p201 = scmp.lt.s32.totalorder %s11, 3
    %p202 = pnand %p200, %p201
    %p203 = pneg %p202
    // Predicated region
    $region37: #{encoder_forward.9} parent=5 // pred_check
      _
    $region38: #{encoder_forward.9} parent=5 // pred_check_branch
      %205 = sbr.rel (%p202) target = $region40
    $region39: #{encoder_forward.9} parent=5 // pred_region
      %s206 = ssub.s32 %s11, 1
      %p207 = scmp.lt.s32.totalorder %s20, 1
      %s208 = scalar_select %p207, %s20, 1
      %s209 = smul.addr %s208, 2
      %s210 = smul.addr %s209, 8
      %s211 = scalar_lea.vmem %s0, %s210
      %p212 = pneg %p49
      %p213 = pneg %p46
      %p214 = pneg %p70
      %p215 = pneg %p67
      %p216 = pneg %p91
      %p217 = pneg %p88
      %p218 = pneg %p112
      %p219 = pneg %p109
      %p220 = pneg %p133
      %p221 = pneg %p130
      %p222 = pneg %p161
      %p223 = pneg %p158
      %p224 = scmp.lt.s32.totalorder %s20, 1
      %s225 = scalar_select %p224, %s20, 1
      %p226 = scmp.lt.s32.totalorder %s21, 0
      %s227 = scalar_select %p226, %s21, 0
      %s228 = sadd.s32 %s227, %s225
      %s229 = smul.addr %s228, 8
      %s230 = scalar_lea.vmem %s5, %s229
      %p231 = scmp.lt.s32.totalorder %s20, 1
      %s232 = scalar_select %p231, %s20, 1
      %s233 = smul.addr %s232, 2
      %s234 = smul.addr %s233, 8
      %s235 = scalar_lea.vmem %s0, %s234
      %p236 = scmp.lt.s32.totalorder %s20, 1
      %s237 = scalar_select %p236, %s20, 1
      %p238 = scmp.lt.s32.totalorder %s21, 0
      %s239 = scalar_select %p238, %s21, 0
      %s240 = sadd.s32 %s239, %s237
      %s241 = smul.addr %s240, 8
      %s242 = scalar_lea.vmem %s5, %s241
      %v243 = vld [vmem:[%s235] sm:$0xff]
      %v244 = vmax.f32 %v243, 0.0
      %v245 = vld [vmem:[%s1] sm:$0xff]
      %v246 = vld [vmem:[%s1 + $0x8] sm:$0xff]
      %v247 = vld [vmem:[%s1 + $0x10] sm:$0xff]
      %v248 = vld [vmem:[%s1 + $0x18] sm:$0xff]
      %v249 = vld [vmem:[%s1 + $0x20] sm:$0xff]
      %v250 = vld [vmem:[%s1 + $0x28] sm:$0xff]
      %v251 = vld [vmem:[%s1 + $0x30] sm:$0xff]
      %v252 = vld [vmem:[%s1 + $0x38] sm:$0xff]
      %v253 = vld [vmem:[%s1 + $0x40] sm:$0xff]
      %v254 = vld [vmem:[%s1 + $0x48] sm:$0xff]
      %v255 = vld [vmem:[%s1 + $0x50] sm:$0xff]
      %v256 = vld [vmem:[%s1 + $0x58] sm:$0xff]
      %v257 = vld [vmem:[%s1 + $0x60] sm:$0xff]
      %v258 = vld [vmem:[%s1 + $0x68] sm:$0xff]
      %v259 = vld [vmem:[%s1 + $0x70] sm:$0xff]
      %v260 = vld [vmem:[%s1 + $0x78] sm:$0xff]
      %v261 = vld [vmem:[%s235 + $0x3] sm:$0xff]
      %v262 = vmax.f32 %v261, 0.0
      %s263 = scalar_lea.vmem %s1, 128
      %v264 = vld [vmem:[%s263] sm:$0xff]
      %v265 = vld [vmem:[%s263 + $0x8] sm:$0xff]
      %v266 = vld [vmem:[%s263 + $0x10] sm:$0xff]
      %v267 = vld [vmem:[%s263 + $0x18] sm:$0xff]
      %v268 = vld [vmem:[%s263 + $0x20] sm:$0xff]
      %v269 = vld [vmem:[%s263 + $0x28] sm:$0xff]
      %v270 = vld [vmem:[%s263 + $0x30] sm:$0xff]
      %v271 = vld [vmem:[%s263 + $0x38] sm:$0xff]
      %v272 = vld [vmem:[%s263 + $0x40] sm:$0xff]
      %v273 = vld [vmem:[%s263 + $0x48] sm:$0xff]
      %v274 = vld [vmem:[%s263 + $0x50] sm:$0xff]
      %v275 = vld [vmem:[%s263 + $0x58] sm:$0xff]
      %v276 = vld [vmem:[%s263 + $0x60] sm:$0xff]
      %v277 = vld [vmem:[%s263 + $0x68] sm:$0xff]
      %v278 = vld [vmem:[%s263 + $0x70] sm:$0xff]
      %v279 = vld [vmem:[%s263 + $0x78] sm:$0xff]
      %280 = vmatprep.subr.mxu0 0.0
      %281 = vmatpush1.msra.mxu0 %v264
      %282 = vmatprep.subr.mxu0 0.0
      %283 = vmatpush1.msra.mxu0 %v265
      %284 = vmatprep.subr.mxu0 0.0
      %285 = vmatpush1.msra.mxu0 %v266
      %286 = vmatprep.subr.mxu0 0.0
      %287 = vmatpush1.msra.mxu0 %v267
      %288 = vmatprep.subr.mxu0 0.0
      %289 = vmatpush1.msra.mxu0 %v268
      %290 = vmatprep.subr.mxu0 0.0
      %291 = vmatpush1.msra.mxu0 %v269
      %292 = vmatprep.subr.mxu0 0.0
      %293 = vmatpush1.msra.mxu0 %v270
      %294 = vmatprep.subr.mxu0 0.0
      %295 = vmatpush1.msra.mxu0 %v271
      %296 = vmatprep.subr.mxu0 0.0
      %297 = vmatpush1.msra.mxu0 %v272
      %298 = vmatprep.subr.mxu0 0.0
      %299 = vmatpush1.msra.mxu0 %v273
      %300 = vmatprep.subr.mxu0 0.0
      %301 = vmatpush1.msra.mxu0 %v274
      %302 = vmatprep.subr.mxu0 0.0
      %303 = vmatpush1.msra.mxu0 %v275
      %304 = vmatprep.subr.mxu0 0.0
      %305 = vmatpush1.msra.mxu0 %v276
      %306 = vmatprep.subr.mxu0 0.0
      %307 = vmatpush1.msra.mxu0 %v277
      %308 = vmatprep.subr.mxu0 0.0
      %309 = vmatpush1.msra.mxu0 %v278
      %310 = vmatprep.subr.mxu0 0.0
      %311 = vmatpush1.msra.mxu0 %v279
      %312 = vmatprep.subr.mxu0 0.0
      %313 = vmatpush1.msra.mxu0 0.0
      %314 = vmatprep.subr.mxu0 0.0
      %315 = vmatpush1.msra.mxu0 0.0
      %316 = vmatprep.subr.mxu0 0.0
      %317 = vmatpush1.msra.mxu0 0.0
      %318 = vmatprep.subr.mxu0 0.0
      %319 = vmatpush1.msra.mxu0 0.0
      %320 = vmatprep.subr.mxu0 0.0
      %321 = vmatpush1.msra.mxu0 0.0
      %322 = vmatprep.subr.mxu0 0.0
      %323 = vmatpush1.msra.mxu0 0.0
      %324 = vmatprep.subr.mxu0 0.0
      %325 = vmatpush1.msra.mxu0 0.0
      %326 = vmatprep.subr.mxu0 0.0
      %327 = vmatpush1.msra.mxu0 0.0
      %328 = vmatprep.subr.mxu0 0.0
      %329 = vmatpush1.msra.mxu0 0.0
      %330 = vmatprep.subr.mxu0 0.0
      %331 = vmatpush1.msra.mxu0 0.0
      %332 = vmatprep.subr.mxu0 0.0
      %333 = vmatpush1.msra.mxu0 0.0
      %334 = vmatprep.subr.mxu0 0.0
      %335 = vmatpush1.msra.mxu0 0.0
      %336 = vmatprep.subr.mxu0 0.0
      %337 = vmatpush1.msra.mxu0 0.0
      %338 = vmatprep.subr.mxu0 0.0
      %339 = vmatpush1.msra.mxu0 0.0
      %340 = vmatprep.subr.mxu0 0.0
      %341 = vmatpush1.msra.mxu0 0.0
      %342 = vmatprep.subr.mxu0 0.0
      %343 = vmatpush1.msra.mxu0 0.0
      %344 = vmatprep.mubr.f32.mxu0 0.0
      %345 = vmatmul.mubr.f32.gmra.mrb[0].mxu0 %v262
      %v346 = vpop.f32.mrb[0].mxu0
      %v347 = vadd.f32 0.0, %v346
      %v348 = vpop.f32.mrb[0].mxu0
      %349 = vdwg.mxu0
      %350 = vmatprep.subr.mxu0 0.0
      %351 = vmatpush1.msra.mxu0 %v245
      %352 = vmatprep.subr.mxu0 0.0
      %353 = vmatpush1.msra.mxu0 %v246
      %354 = vmatprep.subr.mxu0 0.0
      %355 = vmatpush1.msra.mxu0 %v247
      %356 = vmatprep.subr.mxu0 0.0
      %357 = vmatpush1.msra.mxu0 %v248
      %358 = vmatprep.subr.mxu0 0.0
      %359 = vmatpush1.msra.mxu0 %v249
      %360 = vmatprep.subr.mxu0 0.0
      %361 = vmatpush1.msra.mxu0 %v250
      %362 = vmatprep.subr.mxu0 0.0
      %363 = vmatpush1.msra.mxu0 %v251
      %364 = vmatprep.subr.mxu0 0.0
      %365 = vmatpush1.msra.mxu0 %v252
      %366 = vmatprep.subr.mxu0 0.0
      %367 = vmatpush1.msra.mxu0 %v253
      %368 = vmatprep.subr.mxu0 0.0
      %369 = vmatpush1.msra.mxu0 %v254
      %370 = vmatprep.subr.mxu0 0.0
      %371 = vmatpush1.msra.mxu0 %v255
      %372 = vmatprep.subr.mxu0 0.0
      %373 = vmatpush1.msra.mxu0 %v256
      %374 = vmatprep.subr.mxu0 0.0
      %375 = vmatpush1.msra.mxu0 %v257
      %376 = vmatprep.subr.mxu0 0.0
      %377 = vmatpush1.msra.mxu0 %v258
      %378 = vmatprep.subr.mxu0 0.0
      %379 = vmatpush1.msra.mxu0 %v259
      %380 = vmatprep.subr.mxu0 0.0
      %381 = vmatpush1.msra.mxu0 %v260
      %382 = vmatprep.subr.mxu0 0.0
      %383 = vmatpush1.msra.mxu0 0.0
      %384 = vmatprep.subr.mxu0 0.0
      %385 = vmatpush1.msra.mxu0 0.0
      %386 = vmatprep.subr.mxu0 0.0
      %387 = vmatpush1.msra.mxu0 0.0
      %388 = vmatprep.subr.mxu0 0.0
      %389 = vmatpush1.msra.mxu0 0.0
      %390 = vmatprep.subr.mxu0 0.0
      %391 = vmatpush1.msra.mxu0 0.0
      %392 = vmatprep.subr.mxu0 0.0
      %393 = vmatpush1.msra.mxu0 0.0
      %394 = vmatprep.subr.mxu0 0.0
      %395 = vmatpush1.msra.mxu0 0.0
      %396 = vmatprep.subr.mxu0 0.0
      %397 = vmatpush1.msra.mxu0 0.0
      %398 = vmatprep.subr.mxu0 0.0
      %399 = vmatpush1.msra.mxu0 0.0
      %400 = vmatprep.subr.mxu0 0.0
      %401 = vmatpush1.msra.mxu0 0.0
      %402 = vmatprep.subr.mxu0 0.0
      %403 = vmatpush1.msra.mxu0 0.0
      %404 = vmatprep.subr.mxu0 0.0
      %405 = vmatpush1.msra.mxu0 0.0
      %406 = vmatprep.subr.mxu0 0.0
      %407 = vmatpush1.msra.mxu0 0.0
      %408 = vmatprep.subr.mxu0 0.0
      %409 = vmatpush1.msra.mxu0 0.0
      %410 = vmatprep.subr.mxu0 0.0
      %411 = vmatpush1.msra.mxu0 0.0
      %412 = vmatprep.subr.mxu0 0.0
      %413 = vmatpush1.msra.mxu0 0.0
      %414 = vmatprep.mubr.f32.mxu0 0.0
      %415 = vmatmul.mubr.f32.gmra.mrb[0].mxu0 %v244
      %v416 = vpop.f32.mrb[0].mxu0
      %v417 = vadd.f32 %v347, %v416
      %v418 = vpop.f32.mrb[0].mxu0
      %419 = vdwg.mxu0
      %v420 = vld [vmem:[%s235 + $0x6] sm:$0xff]
      %v421 = vmax.f32 %v420, 0.0
      %s422 = scalar_lea.vmem %s1, 256
      %v423 = vld [vmem:[%s422] sm:$0xff]
      %v424 = vld [vmem:[%s422 + $0x8] sm:$0xff]
      %v425 = vld [vmem:[%s422 + $0x10] sm:$0xff]
      %v426 = vld [vmem:[%s422 + $0x18] sm:$0xff]
      %v427 = vld [vmem:[%s422 + $0x20] sm:$0xff]
      %v428 = vld [vmem:[%s422 + $0x28] sm:$0xff]
      %v429 = vld [vmem:[%s422 + $0x30] sm:$0xff]
      %v430 = vld [vmem:[%s422 + $0x38] sm:$0xff]
      %v431 = vld [vmem:[%s422 + $0x40] sm:$0xff]
      %v432 = vld [vmem:[%s422 + $0x48] sm:$0xff]
      %v433 = vld [vmem:[%s422 + $0x50] sm:$0xff]
      %v434 = vld [vmem:[%s422 + $0x58] sm:$0xff]
      %v435 = vld [vmem:[%s422 + $0x60] sm:$0xff]
      %v436 = vld [vmem:[%s422 + $0x68] sm:$0xff]
      %v437 = vld [vmem:[%s422 + $0x70] sm:$0xff]
      %v438 = vld [vmem:[%s422 + $0x78] sm:$0xff]
      %439 = vmatprep.subr.mxu0 0.0
      %440 = vmatpush1.msra.mxu0 %v423
      %441 = vmatprep.subr.mxu0 0.0
      %442 = vmatpush1.msra.mxu0 %v424
      %443 = vmatprep.subr.mxu0 0.0
      %444 = vmatpush1.msra.mxu0 %v425
      %445 = vmatprep.subr.mxu0 0.0
      %446 = vmatpush1.msra.mxu0 %v426
      %447 = vmatprep.subr.mxu0 0.0
      %448 = vmatpush1.msra.mxu0 %v427
      %449 = vmatprep.subr.mxu0 0.0
      %450 = vmatpush1.msra.mxu0 %v428
      %451 = vmatprep.subr.mxu0 0.0
      %452 = vmatpush1.msra.mxu0 %v429
      %453 = vmatprep.subr.mxu0 0.0
      %454 = vmatpush1.msra.mxu0 %v430
      %455 = vmatprep.subr.mxu0 0.0
      %456 = vmatpush1.msra.mxu0 %v431
      %457 = vmatprep.subr.mxu0 0.0
      %458 = vmatpush1.msra.mxu0 %v432
      %459 = vmatprep.subr.mxu0 0.0
      %460 = vmatpush1.msra.mxu0 %v433
      %461 = vmatprep.subr.mxu0 0.0
      %462 = vmatpush1.msra.mxu0 %v434
      %463 = vmatprep.subr.mxu0 0.0
      %464 = vmatpush1.msra.mxu0 %v435
      %465 = vmatprep.subr.mxu0 0.0
      %466 = vmatpush1.msra.mxu0 %v436
      %467 = vmatprep.subr.mxu0 0.0
      %468 = vmatpush1.msra.mxu0 %v437
      %469 = vmatprep.subr.mxu0 0.0
      %470 = vmatpush1.msra.mxu0 %v438
      %471 = vmatprep.subr.mxu0 0.0
      %472 = vmatpush1.msra.mxu0 0.0
      %473 = vmatprep.subr.mxu0 0.0
      %474 = vmatpush1.msra.mxu0 0.0
      %475 = vmatprep.subr.mxu0 0.0
      %476 = vmatpush1.msra.mxu0 0.0
      %477 = vmatprep.subr.mxu0 0.0
      %478 = vmatpush1.msra.mxu0 0.0
      %479 = vmatprep.subr.mxu0 0.0
      %480 = vmatpush1.msra.mxu0 0.0
      %481 = vmatprep.subr.mxu0 0.0
      %482 = vmatpush1.msra.mxu0 0.0
      %483 = vmatprep.subr.mxu0 0.0
      %484 = vmatpush1.msra.mxu0 0.0
      %485 = vmatprep.subr.mxu0 0.0
      %486 = vmatpush1.msra.mxu0 0.0
      %487 = vmatprep.subr.mxu0 0.0
      %488 = vmatpush1.msra.mxu0 0.0
      %489 = vmatprep.subr.mxu0 0.0
      %490 = vmatpush1.msra.mxu0 0.0
      %491 = vmatprep.subr.mxu0 0.0
      %492 = vmatpush1.msra.mxu0 0.0
      %493 = vmatprep.subr.mxu0 0.0
      %494 = vmatpush1.msra.mxu0 0.0
      %495 = vmatprep.subr.mxu0 0.0
      %496 = vmatpush1.msra.mxu0 0.0
      %497 = vmatprep.subr.mxu0 0.0
      %498 = vmatpush1.msra.mxu0 0.0
      %499 = vmatprep.subr.mxu0 0.0
      %500 = vmatpush1.msra.mxu0 0.0
      %501 = vmatprep.subr.mxu0 0.0
      %502 = vmatpush1.msra.mxu0 0.0
      %503 = vmatprep.mubr.f32.mxu0 0.0
      %504 = vmatmul.mubr.f32.gmra.mrb[0].mxu0 %v421
      %v505 = vpop.f32.mrb[0].mxu0
      %v506 = vadd.f32 0.0, %v505
      %v507 = vpop.f32.mrb[0].mxu0
      %508 = vdwg.mxu0
      %v509 = vadd.f32 %v417, %v506
      %v510 = vld [vmem:[%s2] sm:$0x1]
      %v512 = vlaneseq
      %v513 = vshrl.u32 %v512, 7
      %v514 = vsub.s32 0, %v513
      %v515 = vrot.slane %v510, %v514
      %v517 = vadd.f32 %v509, %v515
      %v518 = vmax.f32 %v517, 0.0
      %v519 = vld [vmem:[%s3] sm:$0xff]
      %v520 = vld [vmem:[%s3 + $0x8] sm:$0xff]
      %v521 = vld [vmem:[%s3 + $0x10] sm:$0xff]
      %v522 = vld [vmem:[%s3 + $0x18] sm:$0xff]
      %v523 = vld [vmem:[%s3 + $0x20] sm:$0xff]
      %v524 = vld [vmem:[%s3 + $0x28] sm:$0xff]
      %v525 = vld [vmem:[%s3 + $0x30] sm:$0xff]
      %v526 = vld [vmem:[%s3 + $0x38] sm:$0xff]
      %v527 = vld [vmem:[%s3 + $0x40] sm:$0xff]
      %v528 = vld [vmem:[%s3 + $0x48] sm:$0xff]
      %v529 = vld [vmem:[%s3 + $0x50] sm:$0xff]
      %v530 = vld [vmem:[%s3 + $0x58] sm:$0xff]
      %v531 = vld [vmem:[%s3 + $0x60] sm:$0xff]
      %v532 = vld [vmem:[%s3 + $0x68] sm:$0xff]
      %v533 = vld [vmem:[%s3 + $0x70] sm:$0xff]
      %v534 = vld [vmem:[%s3 + $0x78] sm:$0xff]
      %v535 = vld [vmem:[%s4] sm:$0x1]
      %v537 = vlaneseq
      %v538 = vshrl.u32 %v537, 7
      %v539 = vsub.s32 0, %v538
      %v540 = vrot.slane %v535, %v539
      %542 = vmatprep.subr.mxu0 0.0
      %543 = vmatpush1.msra.mxu0 %v519
      %544 = vmatprep.subr.mxu0 0.0
      %545 = vmatpush1.msra.mxu0 %v520
      %546 = vmatprep.subr.mxu0 0.0
      %547 = vmatpush1.msra.mxu0 %v521
      %548 = vmatprep.subr.mxu0 0.0
      %549 = vmatpush1.msra.mxu0 %v522
      %550 = vmatprep.subr.mxu0 0.0
      %551 = vmatpush1.msra.mxu0 %v523
      %552 = vmatprep.subr.mxu0 0.0
      %553 = vmatpush1.msra.mxu0 %v524
      %554 = vmatprep.subr.mxu0 0.0
      %555 = vmatpush1.msra.mxu0 %v525
      %556 = vmatprep.subr.mxu0 0.0
      %557 = vmatpush1.msra.mxu0 %v526
      %558 = vmatprep.subr.mxu0 0.0
      %559 = vmatpush1.msra.mxu0 %v527
      %560 = vmatprep.subr.mxu0 0.0
      %561 = vmatpush1.msra.mxu0 %v528
      %562 = vmatprep.subr.mxu0 0.0
      %563 = vmatpush1.msra.mxu0 %v529
      %564 = vmatprep.subr.mxu0 0.0
      %565 = vmatpush1.msra.mxu0 %v530
      %566 = vmatprep.subr.mxu0 0.0
      %567 = vmatpush1.msra.mxu0 %v531
      %568 = vmatprep.subr.mxu0 0.0
      %569 = vmatpush1.msra.mxu0 %v532
      %570 = vmatprep.subr.mxu0 0.0
      %571 = vmatpush1.msra.mxu0 %v533
      %572 = vmatprep.subr.mxu0 0.0
      %573 = vmatpush1.msra.mxu0 %v534
      %574 = vmatprep.subr.mxu0 0.0
      %575 = vmatpush1.msra.mxu0 0.0
      %576 = vmatprep.subr.mxu0 0.0
      %577 = vmatpush1.msra.mxu0 0.0
      %578 = vmatprep.subr.mxu0 0.0
      %579 = vmatpush1.msra.mxu0 0.0
      %580 = vmatprep.subr.mxu0 0.0
      %581 = vmatpush1.msra.mxu0 0.0
      %582 = vmatprep.subr.mxu0 0.0
      %583 = vmatpush1.msra.mxu0 0.0
      %584 = vmatprep.subr.mxu0 0.0
      %585 = vmatpush1.msra.mxu0 0.0
      %586 = vmatprep.subr.mxu0 0.0
      %587 = vmatpush1.msra.mxu0 0.0
      %588 = vmatprep.subr.mxu0 0.0
      %589 = vmatpush1.msra.mxu0 0.0
      %590 = vmatprep.subr.mxu0 0.0
      %591 = vmatpush1.msra.mxu0 0.0
      %592 = vmatprep.subr.mxu0 0.0
      %593 = vmatpush1.msra.mxu0 0.0
      %594 = vmatprep.subr.mxu0 0.0
      %595 = vmatpush1.msra.mxu0 0.0
      %596 = vmatprep.subr.mxu0 0.0
      %597 = vmatpush1.msra.mxu0 0.0
      %598 = vmatprep.subr.mxu0 0.0
      %599 = vmatpush1.msra.mxu0 0.0
      %600 = vmatprep.subr.mxu0 0.0
      %601 = vmatpush1.msra.mxu0 0.0
      %602 = vmatprep.subr.mxu0 0.0
      %603 = vmatpush1.msra.mxu0 0.0
      %604 = vmatprep.subr.mxu0 0.0
      %605 = vmatpush1.msra.mxu0 0.0
      %606 = vmatprep.mubr.f32.mxu0 0.0
      %607 = vmatmul.mubr.f32.gmra.mrb[0].mxu0 %v518
      %v608 = vpop.f32.mrb[0].mxu0
      %v609 = vadd.f32 %v540, %v608
      %v610 = vpop.f32.mrb[0].mxu0
      %611 = vdwg.mxu0
      %v612 = vadd.f32 %v261, %v609
      %613 = vst [vmem:[%s242] sm:$0xff] %v612
      %p614 = scmp.lt.s32.totalorder %s20, 1
      %s615 = scalar_select %p614, %s20, 1
      %p616 = scmp.lt.s32.totalorder %s21, 0
      %s617 = scalar_select %p616, %s21, 0
      %s618 = sadd.s32 %s617, %s615
      %s619 = smul.addr %s618, 8
      %s620 = scalar_lea.vmem %s5, %s619
      // Predicated region
      $region41: #{encoder_forward.9} parent=39 // pred_check
        %p621 = pneg %p158
      $region42: #{encoder_forward.9} parent=39 // pred_check_branch
        %623 = sbr.rel (%p621) target = $region44
      $region43: #{encoder_forward.9} parent=39 // pred_region
        _
      $region44: #{encoder_forward.9} parent=39 // pred_fallthru
        _
    $region40: #{encoder_forward.9} parent=5 // pred_fallthru
      _
    %p624 = scmp.le.s32.totalorder 2, %s11
    // Predicated region
    $region45: #{encoder_forward.9} parent=5 // pred_check
      %p625 = pneg %p624
    $region46: #{encoder_forward.9} parent=5 // pred_check_branch
      %627 = sbr.rel (%p625) target = $region48
    $region47: #{encoder_forward.9} parent=5 // pred_region
      %s628 = ssub.s32 %s11, 2
      // Predicated region
      $region49: #{encoder_forward.9} parent=47 // pred_check
        %p629 = pneg %p164
      $region50: #{encoder_forward.9} parent=47 // pred_check_branch
        %631 = sbr.rel (%p629) target = $region52
      $region51: #{encoder_forward.9} parent=47 // pred_region
        %p632 = scmp.lt.s32.totalorder %s22, 1
        %s633 = scalar_select %p632, %s22, 1
        %p634 = scmp.lt.s32.totalorder %s23, 0
        %s635 = scalar_select %p634, %s23, 0
        %s636 = sadd.s32 %s635, %s633
        %s637 = smul.addr %s636, 8
        %s638 = scalar_lea.vmem %s5, %s637
      $region52: #{encoder_forward.9} parent=47 // pred_fallthru
        _
    $region48: #{encoder_forward.9} parent=5 // pred_fallthru
      _
  $region6: #{encoder_forward.9} parent=0 // loop_footer
    %s15 = sadd.s32 1, %s11
  $region7: #{encoder_forward.9} parent=0 // loop_footer_branch
    %10 = sbr.rel target = $region3
  $region8: #{encoder_forward.9} parent=0 // loop_exit
    _

// kernel: encoder_forward.10
$region0: #{encoder_forward.10}
  #allocation0 [shape = 'u32[]', space=smem, size = 0x4, offset = 0x4, fixed_abs, tag = 'smem constant byte address 0x4 - core index']
  #allocation1 [shape = 'u32[144,128]{1,0:T(1,128)}', space=vmem, size = 0x12000, scoped, tag = 'internal scratch']
  %s0 = inlined_call_operand.vmem [shape: f32[2,6,256], index: 0, kind: input, shape index: {}]
  %s1 = inlined_call_operand.vmem [shape: f32[3,256,128], index: 1, kind: input, shape index: {}]
  %s2 = inlined_call_operand.vmem [shape: f32[1,128], index: 2, kind: input, shape index: {}]
  %s3 = inlined_call_operand.vmem [shape: f32[2,4,128], index: 3, kind: output, shape index: {}]
  %s4 = sld [smem:[#allocation0]]
  $region45: #{encoder_forward.10} parent=0
    _
  %s6 = ssub.s32 1, %s4
  %s7 = scalar_select 0, %s6, %s4
  loop: start=0, step=1, limit=4
  $region2: #{encoder_forward.10} parent=0 // loop_pre_header
    _
  $region3: #{encoder_forward.10} parent=0 // loop_header
    %s9 = sphi 0, %s13
    %p10 = scmp.ge.s32.totalorder %s9, 4
    %s16 = sphi 0, %s28
    %s17 = sphi 0, %s24
    %s18 = sphi 0, %s16
    %s19 = sphi 0, %s17
    %s20 = sphi 0, %s18
    %s21 = sphi 0, %s19
    %s31 = sphi 0, %s33
    %s34 = sphi 0, %s31
    %s35 = sphi 0, %s34
    %s51 = sphi 0, %s35
    %s55 = sphi 0, %s55
    %s57 = sphi 0, %s55
    %s58 = sphi 0, %s57
    %s72 = sphi 0, %s58
    %s76 = sphi 0, %s76
    %s78 = sphi 0, %s76
    %s79 = sphi 0, %s78
    %s93 = sphi 0, %s79
    %s101 = sphi 0, %s103
    %s104 = sphi 0, %s101
    %s105 = sphi 0, %s104
    %s121 = sphi 0, %s105
  $region4: #{encoder_forward.10} parent=0 // loop_header_branch
    %12 = sbr.rel (%p10) target = $region8
  $region5: #{encoder_forward.10} parent=0 // loop_body
    %s14 = ssub.s32 %s9, 1
    %s15 = ssub.s32 %s9, 2
    %s22 = sadd.s32 1, %s17
    %p23 = scmp.ge.s32.totalorder %s22, 1
    %s24 = scalar_select %p23, 0, %s22
    %s25 = sadd.s32 1, %s16
    %s26 = scalar_select %p23, %s25, %s16
    %p27 = scmp.ge.s32.totalorder %s26, 2
    %s28 = scalar_select %p27, 0, %s26
    %s29 = ssub.s32 %s16, %s28
    %p30 = scmp.eq.s32.totalorder %s29, 0
    %s32 = sadd.s32 %s31, 1
    %s33 = scalar_select %p30, %s31, %s32
    %p36 = pneg %p30
    %p37 = scmp.eq.s32.totalorder %s9, 1
    %p38 = por %p36, %p37
    %p39 = scmp.ne.s32.totalorder %s31, %s34
    %p40 = scmp.eq.s32.totalorder %s9, 0
    %p41 = por %p39, %p40
    %p42 = scmp.ne.s32.totalorder %s31, %s34
    %p43 = scmp.eq.s32.totalorder %s14, 1
    %p44 = por %p42, %p43
    %p45 = scmp.ne.s32.totalorder %s34, %s35
    %p46 = scmp.eq.s32.totalorder %s14, 0
    %p47 = por %p45, %p46
    %p48 = scmp.ne.s32.totalorder %s34, %s35
    %p49 = scmp.eq.s32.totalorder %s15, 1
    %p50 = por %p48, %p49
    %p52 = scmp.ne.s32.totalorder %s35, %s51
    %p53 = scmp.eq.s32.totalorder %s15, 0
    %p54 = por %p52, %p53
    %s56 = sadd.s32 %s55, 1
    %p59 = scmp.eq.s32.totalorder %s9, 1
    %p60 = scmp.ne.s32.totalorder %s55, %s57
    %p61 = scmp.eq.s32.totalorder %s9, 0
    %p62 = por %p60, %p61
    %p63 = scmp.ne.s32.totalorder %s55, %s57
    %p64 = scmp.eq.s32.totalorder %s14, 1
    %p65 = por %p63, %p64
    %p66 = scmp.ne.s32.totalorder %s57, %s58
    %p67 = scmp.eq.s32.totalorder %s14, 0
    %p68 = por %p66, %p67
    %p69 = scmp.ne.s32.totalorder %s57, %s58
    %p70 = scmp.eq.s32.totalorder %s15, 1
    %p71 = por %p69, %p70
    %p73 = scmp.ne.s32.totalorder %s58, %s72
    %p74 = scmp.eq.s32.totalorder %s15, 0
    %p75 = por %p73, %p74
    %s77 = sadd.s32 %s76, 1
    %p80 = scmp.eq.s32.totalorder %s9, 1
    %p81 = scmp.ne.s32.totalorder %s76, %s78
    %p82 = scmp.eq.s32.totalorder %s9, 0
    %p83 = por %p81, %p82
    %p84 = scmp.ne.s32.totalorder %s76, %s78
    %p85 = scmp.eq.s32.totalorder %s14, 1
    %p86 = por %p84, %p85
    %p87 = scmp.ne.s32.totalorder %s78, %s79
    %p88 = scmp.eq.s32.totalorder %s14, 0
    %p89 = por %p87, %p88
    %p90 = scmp.ne.s32.totalorder %s78, %s79
    %p91 = scmp.eq.s32.totalorder %s15, 1
    %p92 = por %p90, %p91
    %p94 = scmp.ne.s32.totalorder %s79, %s93
    %p95 = scmp.eq.s32.totalorder %s15, 0
    %p96 = por %p94, %p95
    %s97 = ssub.s32 %s16, %s28
    %s98 = ssub.s32 %s17, %s24
    %s99 = sor.u32 %s97, %s98
    %p100 = scmp.eq.s32.totalorder %s99, 0
    %s102 = sadd.s32 %s101, 1
    %s103 = scalar_select %p100, %s101, %s102
    %p106 = pneg %p100
    %p107 = scmp.eq.s32.totalorder %s9, 1
    %p108 = por %p106, %p107
    %p109 = scmp.ne.s32.totalorder %s101, %s104
    %p110 = scmp.eq.s32.totalorder %s9, 0
    %p111 = por %p109, %p110
    %p112 = scmp.ne.s32.totalorder %s101, %s104
    %p113 = scmp.eq.s32.totalorder %s14, 1
    %p114 = por %p112, %p113
    %p115 = scmp.ne.s32.totalorder %s104, %s105
    %p116 = scmp.eq.s32.totalorder %s14, 0
    %p117 = por %p115, %p116
    %p118 = scmp.ne.s32.totalorder %s104, %s105
    %p119 = scmp.eq.s32.totalorder %s15, 1
    %p120 = por %p118, %p119
    %p122 = scmp.ne.s32.totalorder %s105, %s121
    %p123 = scmp.eq.s32.totalorder %s15, 0
    %p124 = por %p122, %p123
    %p125 = scmp.le.s32.totalorder 1, %s9
    %p126 = scmp.lt.s32.totalorder %s9, 3
    %p127 = pnand %p125, %p126
    %p128 = pneg %p127
    // Predicated region
    $region9: #{encoder_forward.10} parent=5 // pred_check
      _
    $region10: #{encoder_forward.10} parent=5 // pred_check_branch
      %130 = sbr.rel (%p127) target = $region12
    $region11: #{encoder_forward.10} parent=5 // pred_region
      %s131 = ssub.s32 %s9, 1
      // Predicated region
      $region13: #{encoder_forward.10} parent=11 // pred_check
        %p132 = pneg %p68
      $region14: #{encoder_forward.10} parent=11 // pred_check_branch
        %134 = sbr.rel (%p132) target = $region16
      $region15: #{encoder_forward.10} parent=11 // pred_region
        _
      $region16: #{encoder_forward.10} parent=11 // pred_fallthru
        _
      // Predicated region
      $region17: #{encoder_forward.10} parent=11 // pred_check
        %p135 = pneg %p89
      $region18: #{encoder_forward.10} parent=11 // pred_check_branch
        %137 = sbr.rel (%p135) target = $region20
      $region19: #{encoder_forward.10} parent=11 // pred_region
        _
      $region20: #{encoder_forward.10} parent=11 // pred_fallthru
        _
    $region12: #{encoder_forward.10} parent=5 // pred_fallthru
      _
    %p138 = scmp.lt.s32.totalorder %s9, 2
    // Predicated region
    $region21: #{encoder_forward.10} parent=5 // pred_check
      %p139 = pneg %p138
    $region22: #{encoder_forward.10} parent=5 // pred_check_branch
      %141 = sbr.rel (%p139) target = $region24
    $region23: #{encoder_forward.10} parent=5 // pred_region
      // Predicated region
      $region25: #{encoder_forward.10} parent=23 // pred_check
        %p142 = pneg %p41
      $region26: #{encoder_forward.10} parent=23 // pred_check_branch
        %144 = sbr.rel (%p142) target = $region28
      $region27: #{encoder_forward.10} parent=23 // pred_region
        %p145 = scmp.lt.s32.totalorder %s16, 1
        %s146 = scalar_select %p145, %s16, 1
        %s147 = smul.addr %s146, 2
        %s148 = smul.addr %s147, 8
        %s149 = scalar_lea.vmem %s0, %s148
      $region28: #{encoder_forward.10} parent=23 // pred_fallthru
        _
    $region24: #{encoder_forward.10} parent=5 // pred_fallthru
      _
    %p150 = scmp.le.s32.totalorder 1, %s9
    %p151 = scmp.lt.s32.totalorder %s9, 3
    %p152 = pnand %p150, %p151
    %p153 = pneg %p152
    // Predicated region
    $region29: #{encoder_forward.10} parent=5 // pred_check
      _
    $region30: #{encoder_forward.10} parent=5 // pred_check_branch
      %155 = sbr.rel (%p152) target = $region32
    $region31: #{encoder_forward.10} parent=5 // pred_region
      %s156 = ssub.s32 %s9, 1
      %p157 = scmp.lt.s32.totalorder %s18, 1
      %s158 = scalar_select %p157, %s18, 1
      %s159 = smul.addr %s158, 2
      %s160 = smul.addr %s159, 8
      %s161 = scalar_lea.vmem %s0, %s160
      %p162 = pneg %p47
      %p163 = pneg %p44
      %p164 = pneg %p68
      %p165 = pneg %p65
      %p166 = pneg %p89
      %p167 = pneg %p86
      %p168 = pneg %p117
      %p169 = pneg %p114
      %p170 = scmp.lt.s32.totalorder %s18, 1
      %s171 = scalar_select %p170, %s18, 1
      %p172 = scmp.lt.s32.totalorder %s19, 0
      %s173 = scalar_select %p172, %s19, 0
      %s174 = sadd.s32 %s173, %s171
      %s175 = smul.addr %s174, 4
      %s176 = scalar_lea.vmem %s3, %s175
      %p177 = scmp.lt.s32.totalorder %s18, 1
      %s178 = scalar_select %p177, %s18, 1
      %s179 = smul.addr %s178, 2
      %s180 = smul.addr %s179, 8
      %s181 = scalar_lea.vmem %s0, %s180
      %p182 = scmp.lt.s32.totalorder %s18, 1
      %s183 = scalar_select %p182, %s18, 1
      %p184 = scmp.lt.s32.totalorder %s19, 0
      %s185 = scalar_select %p184, %s19, 0
      %s186 = sadd.s32 %s185, %s183
      %s187 = smul.addr %s186, 4
      %s188 = scalar_lea.vmem %s3, %s187
      %v189 = vld [vmem:[%s181] sm:$0xf]
      %v190 = vld [vmem:[%s181 + $0x8] sm:$0xf]
      %v191 = vld [vmem:[%s1] sm:$0xff]
      %v192 = vld [vmem:[%s1 + $0x8] sm:$0xff]
      %v193 = vld [vmem:[%s1 + $0x10] sm:$0xff]
      %v194 = vld [vmem:[%s1 + $0x18] sm:$0xff]
      %v195 = vld [vmem:[%s1 + $0x20] sm:$0xff]
      %v196 = vld [vmem:[%s1 + $0x28] sm:$0xff]
      %v197 = vld [vmem:[%s1 + $0x30] sm:$0xff]
      %v198 = vld [vmem:[%s1 + $0x38] sm:$0xff]
      %v199 = vld [vmem:[%s1 + $0x40] sm:$0xff]
      %v200 = vld [vmem:[%s1 + $0x48] sm:$0xff]
      %v201 = vld [vmem:[%s1 + $0x50] sm:$0xff]
      %v202 = vld [vmem:[%s1 + $0x58] sm:$0xff]
      %v203 = vld [vmem:[%s1 + $0x60] sm:$0xff]
      %v204 = vld [vmem:[%s1 + $0x68] sm:$0xff]
      %v205 = vld [vmem:[%s1 + $0x70] sm:$0xff]
      %v206 = vld [vmem:[%s1 + $0x78] sm:$0xff]
      %v207 = vld [vmem:[%s1 + $0x80] sm:$0xff]
      %v208 = vld [vmem:[%s1 + $0x88] sm:$0xff]
      %v209 = vld [vmem:[%s1 + $0x90] sm:$0xff]
      %v210 = vld [vmem:[%s1 + $0x98] sm:$0xff]
      %v211 = vld [vmem:[%s1 + $0xa0] sm:$0xff]
      %v212 = vld [vmem:[%s1 + $0xa8] sm:$0xff]
      %v213 = vld [vmem:[%s1 + $0xb0] sm:$0xff]
      %v214 = vld [vmem:[%s1 + $0xb8] sm:$0xff]
      %v215 = vld [vmem:[%s1 + $0xc0] sm:$0xff]
      %v216 = vld [vmem:[%s1 + $0xc8] sm:$0xff]
      %v217 = vld [vmem:[%s1 + $0xd0] sm:$0xff]
      %v218 = vld [vmem:[%s1 + $0xd8] sm:$0xff]
      %v219 = vld [vmem:[%s1 + $0xe0] sm:$0xff]
      %v220 = vld [vmem:[%s1 + $0xe8] sm:$0xff]
      %v221 = vld [vmem:[%s1 + $0xf0] sm:$0xff]
      %v222 = vld [vmem:[%s1 + $0xf8] sm:$0xff]
      %v223 = vld [vmem:[%s181] sm:$0x1e]
      %v224 = vld [vmem:[%s181 + $0x8] sm:$0x1e]
      %s225 = scalar_lea.vmem %s1, 256
      %v226 = vld [vmem:[%s225] sm:$0xff]
      %v227 = vld [vmem:[%s225 + $0x8] sm:$0xff]
      %v228 = vld [vmem:[%s225 + $0x10] sm:$0xff]
      %v229 = vld [vmem:[%s225 + $0x18] sm:$0xff]
      %v230 = vld [vmem:[%s225 + $0x20] sm:$0xff]
      %v231 = vld [vmem:[%s225 + $0x28] sm:$0xff]
      %v232 = vld [vmem:[%s225 + $0x30] sm:$0xff]
      %v233 = vld [vmem:[%s225 + $0x38] sm:$0xff]
      %v234 = vld [vmem:[%s225 + $0x40] sm:$0xff]
      %v235 = vld [vmem:[%s225 + $0x48] sm:$0xff]
      %v236 = vld [vmem:[%s225 + $0x50] sm:$0xff]
      %v237 = vld [vmem:[%s225 + $0x58] sm:$0xff]
      %v238 = vld [vmem:[%s225 + $0x60] sm:$0xff]
      %v239 = vld [vmem:[%s225 + $0x68] sm:$0xff]
      %v240 = vld [vmem:[%s225 + $0x70] sm:$0xff]
      %v241 = vld [vmem:[%s225 + $0x78] sm:$0xff]
      %v242 = vld [vmem:[%s225 + $0x80] sm:$0xff]
      %v243 = vld [vmem:[%s225 + $0x88] sm:$0xff]
      %v244 = vld [vmem:[%s225 + $0x90] sm:$0xff]
      %v245 = vld [vmem:[%s225 + $0x98] sm:$0xff]
      %v246 = vld [vmem:[%s225 + $0xa0] sm:$0xff]
      %v247 = vld [vmem:[%s225 + $0xa8] sm:$0xff]
      %v248 = vld [vmem:[%s225 + $0xb0] sm:$0xff]
      %v249 = vld [vmem:[%s225 + $0xb8] sm:$0xff]
      %v250 = vld [vmem:[%s225 + $0xc0] sm:$0xff]
      %v251 = vld [vmem:[%s225 + $0xc8] sm:$0xff]
      %v252 = vld [vmem:[%s225 + $0xd0] sm:$0xff]
      %v253 = vld [vmem:[%s225 + $0xd8] sm:$0xff]
      %v254 = vld [vmem:[%s225 + $0xe0] sm:$0xff]
      %v255 = vld [vmem:[%s225 + $0xe8] sm:$0xff]
      %v256 = vld [vmem:[%s225 + $0xf0] sm:$0xff]
      %v257 = vld [vmem:[%s225 + $0xf8] sm:$0xff]
      %v260 = vrot.slane %v223, 1
      %v261 = vrot.slane %v224, 1
      %264 = vmatprep.subr.mxu0 0.0
      %265 = vmatpush1.msra.mxu0 %v226
      %266 = vmatprep.subr.mxu0 0.0
      %267 = vmatpush1.msra.mxu0 %v227
      %268 = vmatprep.subr.mxu0 0.0
      %269 = vmatpush1.msra.mxu0 %v228
      %270 = vmatprep.subr.mxu0 0.0
      %271 = vmatpush1.msra.mxu0 %v229
      %272 = vmatprep.subr.mxu0 0.0
      %273 = vmatpush1.msra.mxu0 %v230
      %274 = vmatprep.subr.mxu0 0.0
      %275 = vmatpush1.msra.mxu0 %v231
      %276 = vmatprep.subr.mxu0 0.0
      %277 = vmatpush1.msra.mxu0 %v232
      %278 = vmatprep.subr.mxu0 0.0
      %279 = vmatpush1.msra.mxu0 %v233
      %280 = vmatprep.subr.mxu0 0.0
      %281 = vmatpush1.msra.mxu0 %v234
      %282 = vmatprep.subr.mxu0 0.0
      %283 = vmatpush1.msra.mxu0 %v235
      %284 = vmatprep.subr.mxu0 0.0
      %285 = vmatpush1.msra.mxu0 %v236
      %286 = vmatprep.subr.mxu0 0.0
      %287 = vmatpush1.msra.mxu0 %v237
      %288 = vmatprep.subr.mxu0 0.0
      %289 = vmatpush1.msra.mxu0 %v238
      %290 = vmatprep.subr.mxu0 0.0
      %291 = vmatpush1.msra.mxu0 %v239
      %292 = vmatprep.subr.mxu0 0.0
      %293 = vmatpush1.msra.mxu0 %v240
      %294 = vmatprep.subr.mxu0 0.0
      %295 = vmatpush1.msra.mxu0 %v241
      %296 = vmatprep.subr.mxu0 0.0
      %297 = vmatpush1.msra.mxu0 %v242
      %298 = vmatprep.subr.mxu0 0.0
      %299 = vmatpush1.msra.mxu0 %v243
      %300 = vmatprep.subr.mxu0 0.0
      %301 = vmatpush1.msra.mxu0 %v244
      %302 = vmatprep.subr.mxu0 0.0
      %303 = vmatpush1.msra.mxu0 %v245
      %304 = vmatprep.subr.mxu0 0.0
      %305 = vmatpush1.msra.mxu0 %v246
      %306 = vmatprep.subr.mxu0 0.0
      %307 = vmatpush1.msra.mxu0 %v247
      %308 = vmatprep.subr.mxu0 0.0
      %309 = vmatpush1.msra.mxu0 %v248
      %310 = vmatprep.subr.mxu0 0.0
      %311 = vmatpush1.msra.mxu0 %v249
      %312 = vmatprep.subr.mxu0 0.0
      %313 = vmatpush1.msra.mxu0 %v250
      %314 = vmatprep.subr.mxu0 0.0
      %315 = vmatpush1.msra.mxu0 %v251
      %316 = vmatprep.subr.mxu0 0.0
      %317 = vmatpush1.msra.mxu0 %v252
      %318 = vmatprep.subr.mxu0 0.0
      %319 = vmatpush1.msra.mxu0 %v253
      %320 = vmatprep.subr.mxu0 0.0
      %321 = vmatpush1.msra.mxu0 %v254
      %322 = vmatprep.subr.mxu0 0.0
      %323 = vmatpush1.msra.mxu0 %v255
      %324 = vmatprep.subr.mxu0 0.0
      %325 = vmatpush1.msra.mxu0 %v256
      %326 = vmatprep.subr.mxu0 0.0
      %327 = vmatpush1.msra.mxu0 %v257
      %328 = vmatprep.mubr.f32.mxu0 %v261
      %329 = vmatmul.mubr.f32.gmra.mrb[0].mxu0 %v260
      %v330 = vpop.f32.mrb[0].mxu0
      %v331 = vadd.f32 0.0, %v330
      %v332 = vpop.f32.mrb[0].mxu0
      %333 = vdwg.mxu0
      %334 = vmatprep.subr.mxu0 0.0
      %335 = vmatpush1.msra.mxu0 %v191
      %336 = vmatprep.subr.mxu0 0.0
      %337 = vmatpush1.msra.mxu0 %v192
      %338 = vmatprep.subr.mxu0 0.0
      %339 = vmatpush1.msra.mxu0 %v193
      %340 = vmatprep.subr.mxu0 0.0
      %341 = vmatpush1.msra.mxu0 %v194
      %342 = vmatprep.subr.mxu0 0.0
      %343 = vmatpush1.msra.mxu0 %v195
      %344 = vmatprep.subr.mxu0 0.0
      %345 = vmatpush1.msra.mxu0 %v196
      %346 = vmatprep.subr.mxu0 0.0
      %347 = vmatpush1.msra.mxu0 %v197
      %348 = vmatprep.subr.mxu0 0.0
      %349 = vmatpush1.msra.mxu0 %v198
      %350 = vmatprep.subr.mxu0 0.0
      %351 = vmatpush1.msra.mxu0 %v199
      %352 = vmatprep.subr.mxu0 0.0
      %353 = vmatpush1.msra.mxu0 %v200
      %354 = vmatprep.subr.mxu0 0.0
      %355 = vmatpush1.msra.mxu0 %v201
      %356 = vmatprep.subr.mxu0 0.0
      %357 = vmatpush1.msra.mxu0 %v202
      %358 = vmatprep.subr.mxu0 0.0
      %359 = vmatpush1.msra.mxu0 %v203
      %360 = vmatprep.subr.mxu0 0.0
      %361 = vmatpush1.msra.mxu0 %v204
      %362 = vmatprep.subr.mxu0 0.0
      %363 = vmatpush1.msra.mxu0 %v205
      %364 = vmatprep.subr.mxu0 0.0
      %365 = vmatpush1.msra.mxu0 %v206
      %366 = vmatprep.subr.mxu0 0.0
      %367 = vmatpush1.msra.mxu0 %v207
      %368 = vmatprep.subr.mxu0 0.0
      %369 = vmatpush1.msra.mxu0 %v208
      %370 = vmatprep.subr.mxu0 0.0
      %371 = vmatpush1.msra.mxu0 %v209
      %372 = vmatprep.subr.mxu0 0.0
      %373 = vmatpush1.msra.mxu0 %v210
      %374 = vmatprep.subr.mxu0 0.0
      %375 = vmatpush1.msra.mxu0 %v211
      %376 = vmatprep.subr.mxu0 0.0
      %377 = vmatpush1.msra.mxu0 %v212
      %378 = vmatprep.subr.mxu0 0.0
      %379 = vmatpush1.msra.mxu0 %v213
      %380 = vmatprep.subr.mxu0 0.0
      %381 = vmatpush1.msra.mxu0 %v214
      %382 = vmatprep.subr.mxu0 0.0
      %383 = vmatpush1.msra.mxu0 %v215
      %384 = vmatprep.subr.mxu0 0.0
      %385 = vmatpush1.msra.mxu0 %v216
      %386 = vmatprep.subr.mxu0 0.0
      %387 = vmatpush1.msra.mxu0 %v217
      %388 = vmatprep.subr.mxu0 0.0
      %389 = vmatpush1.msra.mxu0 %v218
      %390 = vmatprep.subr.mxu0 0.0
      %391 = vmatpush1.msra.mxu0 %v219
      %392 = vmatprep.subr.mxu0 0.0
      %393 = vmatpush1.msra.mxu0 %v220
      %394 = vmatprep.subr.mxu0 0.0
      %395 = vmatpush1.msra.mxu0 %v221
      %396 = vmatprep.subr.mxu0 0.0
      %397 = vmatpush1.msra.mxu0 %v222
      %398 = vmatprep.mubr.f32.mxu0 %v190
      %399 = vmatmul.mubr.f32.gmra.mrb[0].mxu0 %v189
      %v400 = vpop.f32.mrb[0].mxu0
      %v401 = vadd.f32 %v331, %v400
      %v402 = vpop.f32.mrb[0].mxu0
      %403 = vdwg.mxu0
      %v404 = vld [vmem:[%s181] sm:$0x3c]
      %v405 = vld [vmem:[%s181 + $0x8] sm:$0x3c]
      %s406 = scalar_lea.vmem %s1, 512
      %v407 = vld [vmem:[%s406] sm:$0xff]
      %v408 = vld [vmem:[%s406 + $0x8] sm:$0xff]
      %v409 = vld [vmem:[%s406 + $0x10] sm:$0xff]
      %v410 = vld [vmem:[%s406 + $0x18] sm:$0xff]
      %v411 = vld [vmem:[%s406 + $0x20] sm:$0xff]
      %v412 = vld [vmem:[%s406 + $0x28] sm:$0xff]
      %v413 = vld [vmem:[%s406 + $0x30] sm:$0xff]
      %v414 = vld [vmem:[%s406 + $0x38] sm:$0xff]
      %v415 = vld [vmem:[%s406 + $0x40] sm:$0xff]
      %v416 = vld [vmem:[%s406 + $0x48] sm:$0xff]
      %v417 = vld [vmem:[%s406 + $0x50] sm:$0xff]
      %v418 = vld [vmem:[%s406 + $0x58] sm:$0xff]
      %v419 = vld [vmem:[%s406 + $0x60] sm:$0xff]
      %v420 = vld [vmem:[%s406 + $0x68] sm:$0xff]
      %v421 = vld [vmem:[%s406 + $0x70] sm:$0xff]
      %v422 = vld [vmem:[%s406 + $0x78] sm:$0xff]
      %v423 = vld [vmem:[%s406 + $0x80] sm:$0xff]
      %v424 = vld [vmem:[%s406 + $0x88] sm:$0xff]
      %v425 = vld [vmem:[%s406 + $0x90] sm:$0xff]
      %v426 = vld [vmem:[%s406 + $0x98] sm:$0xff]
      %v427 = vld [vmem:[%s406 + $0xa0] sm:$0xff]
      %v428 = vld [vmem:[%s406 + $0xa8] sm:$0xff]
      %v429 = vld [vmem:[%s406 + $0xb0] sm:$0xff]
      %v430 = vld [vmem:[%s406 + $0xb8] sm:$0xff]
      %v431 = vld [vmem:[%s406 + $0xc0] sm:$0xff]
      %v432 = vld [vmem:[%s406 + $0xc8] sm:$0xff]
      %v433 = vld [vmem:[%s406 + $0xd0] sm:$0xff]
      %v434 = vld [vmem:[%s406 + $0xd8] sm:$0xff]
      %v435 = vld [vmem:[%s406 + $0xe0] sm:$0xff]
      %v436 = vld [vmem:[%s406 + $0xe8] sm:$0xff]
      %v437 = vld [vmem:[%s406 + $0xf0] sm:$0xff]
      %v438 = vld [vmem:[%s406 + $0xf8] sm:$0xff]
      %v441 = vrot.slane %v404, 2
      %v442 = vrot.slane %v405, 2
      %445 = vmatprep.subr.mxu0 0.0
      %446 = vmatpush1.msra.mxu0 %v407
      %447 = vmatprep.subr.mxu0 0.0
      %448 = vmatpush1.msra.mxu0 %v408
      %449 = vmatprep.subr.mxu0 0.0
      %450 = vmatpush1.msra.mxu0 %v409
      %451 = vmatprep.subr.mxu0 0.0
      %452 = vmatpush1.msra.mxu0 %v410
      %453 = vmatprep.subr.mxu0 0.0
      %454 = vmatpush1.msra.mxu0 %v411
      %455 = vmatprep.subr.mxu0 0.0
      %456 = vmatpush1.msra.mxu0 %v412
      %457 = vmatprep.subr.mxu0 0.0
      %458 = vmatpush1.msra.mxu0 %v413
      %459 = vmatprep.subr.mxu0 0.0
      %460 = vmatpush1.msra.mxu0 %v414
      %461 = vmatprep.subr.mxu0 0.0
      %462 = vmatpush1.msra.mxu0 %v415
      %463 = vmatprep.subr.mxu0 0.0
      %464 = vmatpush1.msra.mxu0 %v416
      %465 = vmatprep.subr.mxu0 0.0
      %466 = vmatpush1.msra.mxu0 %v417
      %467 = vmatprep.subr.mxu0 0.0
      %468 = vmatpush1.msra.mxu0 %v418
      %469 = vmatprep.subr.mxu0 0.0
      %470 = vmatpush1.msra.mxu0 %v419
      %471 = vmatprep.subr.mxu0 0.0
      %472 = vmatpush1.msra.mxu0 %v420
      %473 = vmatprep.subr.mxu0 0.0
      %474 = vmatpush1.msra.mxu0 %v421
      %475 = vmatprep.subr.mxu0 0.0
      %476 = vmatpush1.msra.mxu0 %v422
      %477 = vmatprep.subr.mxu0 0.0
      %478 = vmatpush1.msra.mxu0 %v423
      %479 = vmatprep.subr.mxu0 0.0
      %480 = vmatpush1.msra.mxu0 %v424
      %481 = vmatprep.subr.mxu0 0.0
      %482 = vmatpush1.msra.mxu0 %v425
      %483 = vmatprep.subr.mxu0 0.0
      %484 = vmatpush1.msra.mxu0 %v426
      %485 = vmatprep.subr.mxu0 0.0
      %486 = vmatpush1.msra.mxu0 %v427
      %487 = vmatprep.subr.mxu0 0.0
      %488 = vmatpush1.msra.mxu0 %v428
      %489 = vmatprep.subr.mxu0 0.0
      %490 = vmatpush1.msra.mxu0 %v429
      %491 = vmatprep.subr.mxu0 0.0
      %492 = vmatpush1.msra.mxu0 %v430
      %493 = vmatprep.subr.mxu0 0.0
      %494 = vmatpush1.msra.mxu0 %v431
      %495 = vmatprep.subr.mxu0 0.0
      %496 = vmatpush1.msra.mxu0 %v432
      %497 = vmatprep.subr.mxu0 0.0
      %498 = vmatpush1.msra.mxu0 %v433
      %499 = vmatprep.subr.mxu0 0.0
      %500 = vmatpush1.msra.mxu0 %v434
      %501 = vmatprep.subr.mxu0 0.0
      %502 = vmatpush1.msra.mxu0 %v435
      %503 = vmatprep.subr.mxu0 0.0
      %504 = vmatpush1.msra.mxu0 %v436
      %505 = vmatprep.subr.mxu0 0.0
      %506 = vmatpush1.msra.mxu0 %v437
      %507 = vmatprep.subr.mxu0 0.0
      %508 = vmatpush1.msra.mxu0 %v438
      %509 = vmatprep.mubr.f32.mxu0 %v442
      %510 = vmatmul.mubr.f32.gmra.mrb[0].mxu0 %v441
      %v511 = vpop.f32.mrb[0].mxu0
      %v512 = vadd.f32 0.0, %v511
      %v513 = vpop.f32.mrb[0].mxu0
      %514 = vdwg.mxu0
      %v515 = vadd.f32 %v401, %v512
      %v516 = vld [vmem:[%s2] sm:$0x1]
      %v518 = vlaneseq
      %v519 = vshrl.u32 %v518, 7
      %v520 = vsub.s32 0, %v519
      %v521 = vrot.slane %v516, %v520
      %v523 = vadd.f32 %v515, %v521
      %524 = vst [vmem:[%s188] sm:$0xf] %v523
      %p525 = scmp.lt.s32.totalorder %s18, 1
      %s526 = scalar_select %p525, %s18, 1
      %p527 = scmp.lt.s32.totalorder %s19, 0
      %s528 = scalar_select %p527, %s19, 0
      %s529 = sadd.s32 %s528, %s526
      %s530 = smul.addr %s529, 4
      %s531 = scalar_lea.vmem %s3, %s530
      // Predicated region
      $region33: #{encoder_forward.10} parent=31 // pred_check
        %p532 = pneg %p114
      $region34: #{encoder_forward.10} parent=31 // pred_check_branch
        %534 = sbr.rel (%p532) target = $region36
      $region35: #{encoder_forward.10} parent=31 // pred_region
        _
      $region36: #{encoder_forward.10} parent=31 // pred_fallthru
        _
    $region32: #{encoder_forward.10} parent=5 // pred_fallthru
      _
    %p535 = scmp.le.s32.totalorder 2, %s9
    // Predicated region
    $region37: #{encoder_forward.10} parent=5 // pred_check
      %p536 = pneg %p535
    $region38: #{encoder_forward.10} parent=5 // pred_check_branch
      %538 = sbr.rel (%p536) target = $region40
    $region39: #{encoder_forward.10} parent=5 // pred_region
      %s539 = ssub.s32 %s9, 2
      // Predicated region
      $region41: #{encoder_forward.10} parent=39 // pred_check
        %p540 = pneg %p120
      $region42: #{encoder_forward.10} parent=39 // pred_check_branch
        %542 = sbr.rel (%p540) target = $region44
      $region43: #{encoder_forward.10} parent=39 // pred_region
        %p543 = scmp.lt.s32.totalorder %s20, 1
        %s544 = scalar_select %p543, %s20, 1
        %p545 = scmp.lt.s32.totalorder %s21, 0
        %s546 = scalar_select %p545, %s21, 0
        %s547 = sadd.s32 %s546, %s544
        %s548 = smul.addr %s547, 4
        %s549 = scalar_lea.vmem %s3, %s548
      $region44: #{encoder_forward.10} parent=39 // pred_fallthru
        _
    $region40: #{encoder_forward.10} parent=5 // pred_fallthru
      _
  $region6: #{encoder_forward.10} parent=0 // loop_footer
    %s13 = sadd.s32 1, %s9
  $region7: #{encoder_forward.10} parent=0 // loop_footer_branch
    %8 = sbr.rel target = $region3
  $region8: #{encoder_forward.10} parent=0 // loop_exit
    _

// kernel: encoder_forward.11
$region0: #{encoder_forward.11}
  #allocation0 [shape = 'u32[]', space=smem, size = 0x4, offset = 0x4, fixed_abs, tag = 'smem constant byte address 0x4 - core index']
  #allocation1 [shape = 'u32[144,128]{1,0:T(1,128)}', space=vmem, size = 0x12000, scoped, tag = 'internal scratch']
  %s0 = inlined_call_operand.vmem [shape: f32[2,6,128], index: 0, kind: input, shape index: {}]
  %s1 = inlined_call_operand.vmem [shape: f32[3,128,128], index: 1, kind: input, shape index: {}]
  %s2 = inlined_call_operand.vmem [shape: f32[1,128], index: 2, kind: input, shape index: {}]
  %s3 = inlined_call_operand.vmem [shape: f32[1,128,128], index: 3, kind: input, shape index: {}]
  %s4 = inlined_call_operand.vmem [shape: f32[1,128], index: 4, kind: input, shape index: {}]
  %s5 = inlined_call_operand.vmem [shape: f32[2,4,128], index: 5, kind: output, shape index: {}]
  %s6 = sld [smem:[#allocation0]]
  $region53: #{encoder_forward.11} parent=0
    _
  %s8 = ssub.s32 1, %s6
  %s9 = scalar_select 0, %s8, %s6
  loop: start=0, step=1, limit=4
  $region2: #{encoder_forward.11} parent=0 // loop_pre_header
    _
  $region3: #{encoder_forward.11} parent=0 // loop_header
    %s11 = sphi 0, %s15
    %p12 = scmp.ge.s32.totalorder %s11, 4
    %s18 = sphi 0, %s30
    %s19 = sphi 0, %s26
    %s20 = sphi 0, %s18
    %s21 = sphi 0, %s19
    %s22 = sphi 0, %s20
    %s23 = sphi 0, %s21
    %s33 = sphi 0, %s35
    %s36 = sphi 0, %s33
    %s37 = sphi 0, %s36
    %s53 = sphi 0, %s37
    %s57 = sphi 0, %s57
    %s59 = sphi 0, %s57
    %s60 = sphi 0, %s59
    %s74 = sphi 0, %s60
    %s78 = sphi 0, %s78
    %s80 = sphi 0, %s78
    %s81 = sphi 0, %s80
    %s95 = sphi 0, %s81
    %s99 = sphi 0, %s99
    %s101 = sphi 0, %s99
    %s102 = sphi 0, %s101
    %s116 = sphi 0, %s102
    %s120 = sphi 0, %s120
    %s122 = sphi 0, %s120
    %s123 = sphi 0, %s122
    %s137 = sphi 0, %s123
    %s145 = sphi 0, %s147
    %s148 = sphi 0, %s145
    %s149 = sphi 0, %s148
    %s165 = sphi 0, %s149
  $region4: #{encoder_forward.11} parent=0 // loop_header_branch
    %14 = sbr.rel (%p12) target = $region8
  $region5: #{encoder_forward.11} parent=0 // loop_body
    %s16 = ssub.s32 %s11, 1
    %s17 = ssub.s32 %s11, 2
    %s24 = sadd.s32 1, %s19
    %p25 = scmp.ge.s32.totalorder %s24, 1
    %s26 = scalar_select %p25, 0, %s24
    %s27 = sadd.s32 1, %s18
    %s28 = scalar_select %p25, %s27, %s18
    %p29 = scmp.ge.s32.totalorder %s28, 2
    %s30 = scalar_select %p29, 0, %s28
    %s31 = ssub.s32 %s18, %s30
    %p32 = scmp.eq.s32.totalorder %s31, 0
    %s34 = sadd.s32 %s33, 1
    %s35 = scalar_select %p32, %s33, %s34
    %p38 = pneg %p32
    %p39 = scmp.eq.s32.totalorder %s11, 1
    %p40 = por %p38, %p39
    %p41 = scmp.ne.s32.totalorder %s33, %s36
    %p42 = scmp.eq.s32.totalorder %s11, 0
    %p43 = por %p41, %p42
    %p44 = scmp.ne.s32.totalorder %s33, %s36
    %p45 = scmp.eq.s32.totalorder %s16, 1
    %p46 = por %p44, %p45
    %p47 = scmp.ne.s32.totalorder %s36, %s37
    %p48 = scmp.eq.s32.totalorder %s16, 0
    %p49 = por %p47, %p48
    %p50 = scmp.ne.s32.totalorder %s36, %s37
    %p51 = scmp.eq.s32.totalorder %s17, 1
    %p52 = por %p50, %p51
    %p54 = scmp.ne.s32.totalorder %s37, %s53
    %p55 = scmp.eq.s32.totalorder %s17, 0
    %p56 = por %p54, %p55
    %s58 = sadd.s32 %s57, 1
    %p61 = scmp.eq.s32.totalorder %s11, 1
    %p62 = scmp.ne.s32.totalorder %s57, %s59
    %p63 = scmp.eq.s32.totalorder %s11, 0
    %p64 = por %p62, %p63
    %p65 = scmp.ne.s32.totalorder %s57, %s59
    %p66 = scmp.eq.s32.totalorder %s16, 1
    %p67 = por %p65, %p66
    %p68 = scmp.ne.s32.totalorder %s59, %s60
    %p69 = scmp.eq.s32.totalorder %s16, 0
    %p70 = por %p68, %p69
    %p71 = scmp.ne.s32.totalorder %s59, %s60
    %p72 = scmp.eq.s32.totalorder %s17, 1
    %p73 = por %p71, %p72
    %p75 = scmp.ne.s32.totalorder %s60, %s74
    %p76 = scmp.eq.s32.totalorder %s17, 0
    %p77 = por %p75, %p76
    %s79 = sadd.s32 %s78, 1
    %p82 = scmp.eq.s32.totalorder %s11, 1
    %p83 = scmp.ne.s32.totalorder %s78, %s80
    %p84 = scmp.eq.s32.totalorder %s11, 0
    %p85 = por %p83, %p84
    %p86 = scmp.ne.s32.totalorder %s78, %s80
    %p87 = scmp.eq.s32.totalorder %s16, 1
    %p88 = por %p86, %p87
    %p89 = scmp.ne.s32.totalorder %s80, %s81
    %p90 = scmp.eq.s32.totalorder %s16, 0
    %p91 = por %p89, %p90
    %p92 = scmp.ne.s32.totalorder %s80, %s81
    %p93 = scmp.eq.s32.totalorder %s17, 1
    %p94 = por %p92, %p93
    %p96 = scmp.ne.s32.totalorder %s81, %s95
    %p97 = scmp.eq.s32.totalorder %s17, 0
    %p98 = por %p96, %p97
    %s100 = sadd.s32 %s99, 1
    %p103 = scmp.eq.s32.totalorder %s11, 1
    %p104 = scmp.ne.s32.totalorder %s99, %s101
    %p105 = scmp.eq.s32.totalorder %s11, 0
    %p106 = por %p104, %p105
    %p107 = scmp.ne.s32.totalorder %s99, %s101
    %p108 = scmp.eq.s32.totalorder %s16, 1
    %p109 = por %p107, %p108
    %p110 = scmp.ne.s32.totalorder %s101, %s102
    %p111 = scmp.eq.s32.totalorder %s16, 0
    %p112 = por %p110, %p111
    %p113 = scmp.ne.s32.totalorder %s101, %s102
    %p114 = scmp.eq.s32.totalorder %s17, 1
    %p115 = por %p113, %p114
    %p117 = scmp.ne.s32.totalorder %s102, %s116
    %p118 = scmp.eq.s32.totalorder %s17, 0
    %p119 = por %p117, %p118
    %s121 = sadd.s32 %s120, 1
    %p124 = scmp.eq.s32.totalorder %s11, 1
    %p125 = scmp.ne.s32.totalorder %s120, %s122
    %p126 = scmp.eq.s32.totalorder %s11, 0
    %p127 = por %p125, %p126
    %p128 = scmp.ne.s32.totalorder %s120, %s122
    %p129 = scmp.eq.s32.totalorder %s16, 1
    %p130 = por %p128, %p129
    %p131 = scmp.ne.s32.totalorder %s122, %s123
    %p132 = scmp.eq.s32.totalorder %s16, 0
    %p133 = por %p131, %p132
    %p134 = scmp.ne.s32.totalorder %s122, %s123
    %p135 = scmp.eq.s32.totalorder %s17, 1
    %p136 = por %p134, %p135
    %p138 = scmp.ne.s32.totalorder %s123, %s137
    %p139 = scmp.eq.s32.totalorder %s17, 0
    %p140 = por %p138, %p139
    %s141 = ssub.s32 %s18, %s30
    %s142 = ssub.s32 %s19, %s26
    %s143 = sor.u32 %s141, %s142
    %p144 = scmp.eq.s32.totalorder %s143, 0
    %s146 = sadd.s32 %s145, 1
    %s147 = scalar_select %p144, %s145, %s146
    %p150 = pneg %p144
    %p151 = scmp.eq.s32.totalorder %s11, 1
    %p152 = por %p150, %p151
    %p153 = scmp.ne.s32.totalorder %s145, %s148
    %p154 = scmp.eq.s32.totalorder %s11, 0
    %p155 = por %p153, %p154
    %p156 = scmp.ne.s32.totalorder %s145, %s148
    %p157 = scmp.eq.s32.totalorder %s16, 1
    %p158 = por %p156, %p157
    %p159 = scmp.ne.s32.totalorder %s148, %s149
    %p160 = scmp.eq.s32.totalorder %s16, 0
    %p161 = por %p159, %p160
    %p162 = scmp.ne.s32.totalorder %s148, %s149
    %p163 = scmp.eq.s32.totalorder %s17, 1
    %p164 = por %p162, %p163
    %p166 = scmp.ne.s32.totalorder %s149, %s165
    %p167 = scmp.eq.s32.totalorder %s17, 0
    %p168 = por %p166, %p167
    %p169 = scmp.le.s32.totalorder 1, %s11
    %p170 = scmp.lt.s32.totalorder %s11, 3
    %p171 = pnand %p169, %p170
    %p172 = pneg %p171
    // Predicated region
    $region9: #{encoder_forward.11} parent=5 // pred_check
      _
    $region10: #{encoder_forward.11} parent=5 // pred_check_branch
      %174 = sbr.rel (%p171) target = $region12
    $region11: #{encoder_forward.11} parent=5 // pred_region
      %s175 = ssub.s32 %s11, 1
      // Predicated region
      $region13: #{encoder_forward.11} parent=11 // pred_check
        %p176 = pneg %p70
      $region14: #{encoder_forward.11} parent=11 // pred_check_branch
        %178 = sbr.rel (%p176) target = $region16
      $region15: #{encoder_forward.11} parent=11 // pred_region
        _
      $region16: #{encoder_forward.11} parent=11 // pred_fallthru
        _
      // Predicated region
      $region17: #{encoder_forward.11} parent=11 // pred_check
        %p179 = pneg %p91
      $region18: #{encoder_forward.11} parent=11 // pred_check_branch
        %181 = sbr.rel (%p179) target = $region20
      $region19: #{encoder_forward.11} parent=11 // pred_region
        _
      $region20: #{encoder_forward.11} parent=11 // pred_fallthru
        _
      // Predicated region
      $region21: #{encoder_forward.11} parent=11 // pred_check
        %p182 = pneg %p112
      $region22: #{encoder_forward.11} parent=11 // pred_check_branch
        %184 = sbr.rel (%p182) target = $region24
      $region23: #{encoder_forward.11} parent=11 // pred_region
        _
      $region24: #{encoder_forward.11} parent=11 // pred_fallthru
        _
      // Predicated region
      $region25: #{encoder_forward.11} parent=11 // pred_check
        %p185 = pneg %p133
      $region26: #{encoder_forward.11} parent=11 // pred_check_branch
        %187 = sbr.rel (%p185) target = $region28
      $region27: #{encoder_forward.11} parent=11 // pred_region
        _
      $region28: #{encoder_forward.11} parent=11 // pred_fallthru
        _
    $region12: #{encoder_forward.11} parent=5 // pred_fallthru
      _
    %p188 = scmp.lt.s32.totalorder %s11, 2
    // Predicated region
    $region29: #{encoder_forward.11} parent=5 // pred_check
      %p189 = pneg %p188
    $region30: #{encoder_forward.11} parent=5 // pred_check_branch
      %191 = sbr.rel (%p189) target = $region32
    $region31: #{encoder_forward.11} parent=5 // pred_region
      // Predicated region
      $region33: #{encoder_forward.11} parent=31 // pred_check
        %p192 = pneg %p43
      $region34: #{encoder_forward.11} parent=31 // pred_check_branch
        %194 = sbr.rel (%p192) target = $region36
      $region35: #{encoder_forward.11} parent=31 // pred_region
        %p195 = scmp.lt.s32.totalorder %s18, 1
        %s196 = scalar_select %p195, %s18, 1
        %s197 = smul.addr %s196, 8
        %s198 = scalar_lea.vmem %s0, %s197
      $region36: #{encoder_forward.11} parent=31 // pred_fallthru
        _
    $region32: #{encoder_forward.11} parent=5 // pred_fallthru
      _
    %p199 = scmp.le.s32.totalorder 1, %s11
    %p200 = scmp.lt.s32.totalorder %s11, 3
    %p201 = pnand %p199, %p200
    %p202 = pneg %p201
    // Predicated region
    $region37: #{encoder_forward.11} parent=5 // pred_check
      _
    $region38: #{encoder_forward.11} parent=5 // pred_check_branch
      %204 = sbr.rel (%p201) target = $region40
    $region39: #{encoder_forward.11} parent=5 // pred_region
      %s205 = ssub.s32 %s11, 1
      %p206 = scmp.lt.s32.totalorder %s20, 1
      %s207 = scalar_select %p206, %s20, 1
      %s208 = smul.addr %s207, 8
      %s209 = scalar_lea.vmem %s0, %s208
      %p210 = pneg %p49
      %p211 = pneg %p46
      %p212 = pneg %p70
      %p213 = pneg %p67
      %p214 = pneg %p91
      %p215 = pneg %p88
      %p216 = pneg %p112
      %p217 = pneg %p109
      %p218 = pneg %p133
      %p219 = pneg %p130
      %p220 = pneg %p161
      %p221 = pneg %p158
      %p222 = scmp.lt.s32.totalorder %s20, 1
      %s223 = scalar_select %p222, %s20, 1
      %p224 = scmp.lt.s32.totalorder %s21, 0
      %s225 = scalar_select %p224, %s21, 0
      %s226 = sadd.s32 %s225, %s223
      %s227 = smul.addr %s226, 4
      %s228 = scalar_lea.vmem %s5, %s227
      %p229 = scmp.lt.s32.totalorder %s20, 1
      %s230 = scalar_select %p229, %s20, 1
      %s231 = smul.addr %s230, 8
      %s232 = scalar_lea.vmem %s0, %s231
      %p233 = scmp.lt.s32.totalorder %s20, 1
      %s234 = scalar_select %p233, %s20, 1
      %p235 = scmp.lt.s32.totalorder %s21, 0
      %s236 = scalar_select %p235, %s21, 0
      %s237 = sadd.s32 %s236, %s234
      %s238 = smul.addr %s237, 4
      %s239 = scalar_lea.vmem %s5, %s238
      %v240 = vld [vmem:[%s232] sm:$0xf]
      %v241 = vmax.f32 %v240, 0.0
      %v242 = vld [vmem:[%s1] sm:$0xff]
      %v243 = vld [vmem:[%s1 + $0x8] sm:$0xff]
      %v244 = vld [vmem:[%s1 + $0x10] sm:$0xff]
      %v245 = vld [vmem:[%s1 + $0x18] sm:$0xff]
      %v246 = vld [vmem:[%s1 + $0x20] sm:$0xff]
      %v247 = vld [vmem:[%s1 + $0x28] sm:$0xff]
      %v248 = vld [vmem:[%s1 + $0x30] sm:$0xff]
      %v249 = vld [vmem:[%s1 + $0x38] sm:$0xff]
      %v250 = vld [vmem:[%s1 + $0x40] sm:$0xff]
      %v251 = vld [vmem:[%s1 + $0x48] sm:$0xff]
      %v252 = vld [vmem:[%s1 + $0x50] sm:$0xff]
      %v253 = vld [vmem:[%s1 + $0x58] sm:$0xff]
      %v254 = vld [vmem:[%s1 + $0x60] sm:$0xff]
      %v255 = vld [vmem:[%s1 + $0x68] sm:$0xff]
      %v256 = vld [vmem:[%s1 + $0x70] sm:$0xff]
      %v257 = vld [vmem:[%s1 + $0x78] sm:$0xff]
      %v258 = vld [vmem:[%s232 + $0x1] sm:$0xf]
      %v259 = vmax.f32 %v258, 0.0
      %s260 = scalar_lea.vmem %s1, 128
      %v261 = vld [vmem:[%s260] sm:$0xff]
      %v262 = vld [vmem:[%s260 + $0x8] sm:$0xff]
      %v263 = vld [vmem:[%s260 + $0x10] sm:$0xff]
      %v264 = vld [vmem:[%s260 + $0x18] sm:$0xff]
      %v265 = vld [vmem:[%s260 + $0x20] sm:$0xff]
      %v266 = vld [vmem:[%s260 + $0x28] sm:$0xff]
      %v267 = vld [vmem:[%s260 + $0x30] sm:$0xff]
      %v268 = vld [vmem:[%s260 + $0x38] sm:$0xff]
      %v269 = vld [vmem:[%s260 + $0x40] sm:$0xff]
      %v270 = vld [vmem:[%s260 + $0x48] sm:$0xff]
      %v271 = vld [vmem:[%s260 + $0x50] sm:$0xff]
      %v272 = vld [vmem:[%s260 + $0x58] sm:$0xff]
      %v273 = vld [vmem:[%s260 + $0x60] sm:$0xff]
      %v274 = vld [vmem:[%s260 + $0x68] sm:$0xff]
      %v275 = vld [vmem:[%s260 + $0x70] sm:$0xff]
      %v276 = vld [vmem:[%s260 + $0x78] sm:$0xff]
      %277 = vmatprep.subr.mxu0 0.0
      %278 = vmatpush1.msra.mxu0 %v261
      %279 = vmatprep.subr.mxu0 0.0
      %280 = vmatpush1.msra.mxu0 %v262
      %281 = vmatprep.subr.mxu0 0.0
      %282 = vmatpush1.msra.mxu0 %v263
      %283 = vmatprep.subr.mxu0 0.0
      %284 = vmatpush1.msra.mxu0 %v264
      %285 = vmatprep.subr.mxu0 0.0
      %286 = vmatpush1.msra.mxu0 %v265
      %287 = vmatprep.subr.mxu0 0.0
      %288 = vmatpush1.msra.mxu0 %v266
      %289 = vmatprep.subr.mxu0 0.0
      %290 = vmatpush1.msra.mxu0 %v267
      %291 = vmatprep.subr.mxu0 0.0
      %292 = vmatpush1.msra.mxu0 %v268
      %293 = vmatprep.subr.mxu0 0.0
      %294 = vmatpush1.msra.mxu0 %v269
      %295 = vmatprep.subr.mxu0 0.0
      %296 = vmatpush1.msra.mxu0 %v270
      %297 = vmatprep.subr.mxu0 0.0
      %298 = vmatpush1.msra.mxu0 %v271
      %299 = vmatprep.subr.mxu0 0.0
      %300 = vmatpush1.msra.mxu0 %v272
      %301 = vmatprep.subr.mxu0 0.0
      %302 = vmatpush1.msra.mxu0 %v273
      %303 = vmatprep.subr.mxu0 0.0
      %304 = vmatpush1.msra.mxu0 %v274
      %305 = vmatprep.subr.mxu0 0.0
      %306 = vmatpush1.msra.mxu0 %v275
      %307 = vmatprep.subr.mxu0 0.0
      %308 = vmatpush1.msra.mxu0 %v276
      %309 = vmatprep.subr.mxu0 0.0
      %310 = vmatpush1.msra.mxu0 0.0
      %311 = vmatprep.subr.mxu0 0.0
      %312 = vmatpush1.msra.mxu0 0.0
      %313 = vmatprep.subr.mxu0 0.0
      %314 = vmatpush1.msra.mxu0 0.0
      %315 = vmatprep.subr.mxu0 0.0
      %316 = vmatpush1.msra.mxu0 0.0
      %317 = vmatprep.subr.mxu0 0.0
      %318 = vmatpush1.msra.mxu0 0.0
      %319 = vmatprep.subr.mxu0 0.0
      %320 = vmatpush1.msra.mxu0 0.0
      %321 = vmatprep.subr.mxu0 0.0
      %322 = vmatpush1.msra.mxu0 0.0
      %323 = vmatprep.subr.mxu0 0.0
      %324 = vmatpush1.msra.mxu0 0.0
      %325 = vmatprep.subr.mxu0 0.0
      %326 = vmatpush1.msra.mxu0 0.0
      %327 = vmatprep.subr.mxu0 0.0
      %328 = vmatpush1.msra.mxu0 0.0
      %329 = vmatprep.subr.mxu0 0.0
      %330 = vmatpush1.msra.mxu0 0.0
      %331 = vmatprep.subr.mxu0 0.0
      %332 = vmatpush1.msra.mxu0 0.0
      %333 = vmatprep.subr.mxu0 0.0
      %334 = vmatpush1.msra.mxu0 0.0
      %335 = vmatprep.subr.mxu0 0.0
      %336 = vmatpush1.msra.mxu0 0.0
      %337 = vmatprep.subr.mxu0 0.0
      %338 = vmatpush1.msra.mxu0 0.0
      %339 = vmatprep.subr.mxu0 0.0
      %340 = vmatpush1.msra.mxu0 0.0
      %341 = vmatprep.mubr.f32.mxu0 0.0
      %342 = vmatmul.mubr.f32.gmra.mrb[0].mxu0 %v259
      %v343 = vpop.f32.mrb[0].mxu0
      %v344 = vadd.f32 0.0, %v343
      %v345 = vpop.f32.mrb[0].mxu0
      %346 = vdwg.mxu0
      %347 = vmatprep.subr.mxu0 0.0
      %348 = vmatpush1.msra.mxu0 %v242
      %349 = vmatprep.subr.mxu0 0.0
      %350 = vmatpush1.msra.mxu0 %v243
      %351 = vmatprep.subr.mxu0 0.0
      %352 = vmatpush1.msra.mxu0 %v244
      %353 = vmatprep.subr.mxu0 0.0
      %354 = vmatpush1.msra.mxu0 %v245
      %355 = vmatprep.subr.mxu0 0.0
      %356 = vmatpush1.msra.mxu0 %v246
      %357 = vmatprep.subr.mxu0 0.0
      %358 = vmatpush1.msra.mxu0 %v247
      %359 = vmatprep.subr.mxu0 0.0
      %360 = vmatpush1.msra.mxu0 %v248
      %361 = vmatprep.subr.mxu0 0.0
      %362 = vmatpush1.msra.mxu0 %v249
      %363 = vmatprep.subr.mxu0 0.0
      %364 = vmatpush1.msra.mxu0 %v250
      %365 = vmatprep.subr.mxu0 0.0
      %366 = vmatpush1.msra.mxu0 %v251
      %367 = vmatprep.subr.mxu0 0.0
      %368 = vmatpush1.msra.mxu0 %v252
      %369 = vmatprep.subr.mxu0 0.0
      %370 = vmatpush1.msra.mxu0 %v253
      %371 = vmatprep.subr.mxu0 0.0
      %372 = vmatpush1.msra.mxu0 %v254
      %373 = vmatprep.subr.mxu0 0.0
      %374 = vmatpush1.msra.mxu0 %v255
      %375 = vmatprep.subr.mxu0 0.0
      %376 = vmatpush1.msra.mxu0 %v256
      %377 = vmatprep.subr.mxu0 0.0
      %378 = vmatpush1.msra.mxu0 %v257
      %379 = vmatprep.subr.mxu0 0.0
      %380 = vmatpush1.msra.mxu0 0.0
      %381 = vmatprep.subr.mxu0 0.0
      %382 = vmatpush1.msra.mxu0 0.0
      %383 = vmatprep.subr.mxu0 0.0
      %384 = vmatpush1.msra.mxu0 0.0
      %385 = vmatprep.subr.mxu0 0.0
      %386 = vmatpush1.msra.mxu0 0.0
      %387 = vmatprep.subr.mxu0 0.0
      %388 = vmatpush1.msra.mxu0 0.0
      %389 = vmatprep.subr.mxu0 0.0
      %390 = vmatpush1.msra.mxu0 0.0
      %391 = vmatprep.subr.mxu0 0.0
      %392 = vmatpush1.msra.mxu0 0.0
      %393 = vmatprep.subr.mxu0 0.0
      %394 = vmatpush1.msra.mxu0 0.0
      %395 = vmatprep.subr.mxu0 0.0
      %396 = vmatpush1.msra.mxu0 0.0
      %397 = vmatprep.subr.mxu0 0.0
      %398 = vmatpush1.msra.mxu0 0.0
      %399 = vmatprep.subr.mxu0 0.0
      %400 = vmatpush1.msra.mxu0 0.0
      %401 = vmatprep.subr.mxu0 0.0
      %402 = vmatpush1.msra.mxu0 0.0
      %403 = vmatprep.subr.mxu0 0.0
      %404 = vmatpush1.msra.mxu0 0.0
      %405 = vmatprep.subr.mxu0 0.0
      %406 = vmatpush1.msra.mxu0 0.0
      %407 = vmatprep.subr.mxu0 0.0
      %408 = vmatpush1.msra.mxu0 0.0
      %409 = vmatprep.subr.mxu0 0.0
      %410 = vmatpush1.msra.mxu0 0.0
      %411 = vmatprep.mubr.f32.mxu0 0.0
      %412 = vmatmul.mubr.f32.gmra.mrb[0].mxu0 %v241
      %v413 = vpop.f32.mrb[0].mxu0
      %v414 = vadd.f32 %v344, %v413
      %v415 = vpop.f32.mrb[0].mxu0
      %416 = vdwg.mxu0
      %v417 = vld [vmem:[%s232 + $0x2] sm:$0xf]
      %v418 = vmax.f32 %v417, 0.0
      %s419 = scalar_lea.vmem %s1, 256
      %v420 = vld [vmem:[%s419] sm:$0xff]
      %v421 = vld [vmem:[%s419 + $0x8] sm:$0xff]
      %v422 = vld [vmem:[%s419 + $0x10] sm:$0xff]
      %v423 = vld [vmem:[%s419 + $0x18] sm:$0xff]
      %v424 = vld [vmem:[%s419 + $0x20] sm:$0xff]
      %v425 = vld [vmem:[%s419 + $0x28] sm:$0xff]
      %v426 = vld [vmem:[%s419 + $0x30] sm:$0xff]
      %v427 = vld [vmem:[%s419 + $0x38] sm:$0xff]
      %v428 = vld [vmem:[%s419 + $0x40] sm:$0xff]
      %v429 = vld [vmem:[%s419 + $0x48] sm:$0xff]
      %v430 = vld [vmem:[%s419 + $0x50] sm:$0xff]
      %v431 = vld [vmem:[%s419 + $0x58] sm:$0xff]
      %v432 = vld [vmem:[%s419 + $0x60] sm:$0xff]
      %v433 = vld [vmem:[%s419 + $0x68] sm:$0xff]
      %v434 = vld [vmem:[%s419 + $0x70] sm:$0xff]
      %v435 = vld [vmem:[%s419 + $0x78] sm:$0xff]
      %436 = vmatprep.subr.mxu0 0.0
      %437 = vmatpush1.msra.mxu0 %v420
      %438 = vmatprep.subr.mxu0 0.0
      %439 = vmatpush1.msra.mxu0 %v421
      %440 = vmatprep.subr.mxu0 0.0
      %441 = vmatpush1.msra.mxu0 %v422
      %442 = vmatprep.subr.mxu0 0.0
      %443 = vmatpush1.msra.mxu0 %v423
      %444 = vmatprep.subr.mxu0 0.0
      %445 = vmatpush1.msra.mxu0 %v424
      %446 = vmatprep.subr.mxu0 0.0
      %447 = vmatpush1.msra.mxu0 %v425
      %448 = vmatprep.subr.mxu0 0.0
      %449 = vmatpush1.msra.mxu0 %v426
      %450 = vmatprep.subr.mxu0 0.0
      %451 = vmatpush1.msra.mxu0 %v427
      %452 = vmatprep.subr.mxu0 0.0
      %453 = vmatpush1.msra.mxu0 %v428
      %454 = vmatprep.subr.mxu0 0.0
      %455 = vmatpush1.msra.mxu0 %v429
      %456 = vmatprep.subr.mxu0 0.0
      %457 = vmatpush1.msra.mxu0 %v430
      %458 = vmatprep.subr.mxu0 0.0
      %459 = vmatpush1.msra.mxu0 %v431
      %460 = vmatprep.subr.mxu0 0.0
      %461 = vmatpush1.msra.mxu0 %v432
      %462 = vmatprep.subr.mxu0 0.0
      %463 = vmatpush1.msra.mxu0 %v433
      %464 = vmatprep.subr.mxu0 0.0
      %465 = vmatpush1.msra.mxu0 %v434
      %466 = vmatprep.subr.mxu0 0.0
      %467 = vmatpush1.msra.mxu0 %v435
      %468 = vmatprep.subr.mxu0 0.0
      %469 = vmatpush1.msra.mxu0 0.0
      %470 = vmatprep.subr.mxu0 0.0
      %471 = vmatpush1.msra.mxu0 0.0
      %472 = vmatprep.subr.mxu0 0.0
      %473 = vmatpush1.msra.mxu0 0.0
      %474 = vmatprep.subr.mxu0 0.0
      %475 = vmatpush1.msra.mxu0 0.0
      %476 = vmatprep.subr.mxu0 0.0
      %477 = vmatpush1.msra.mxu0 0.0
      %478 = vmatprep.subr.mxu0 0.0
      %479 = vmatpush1.msra.mxu0 0.0
      %480 = vmatprep.subr.mxu0 0.0
      %481 = vmatpush1.msra.mxu0 0.0
      %482 = vmatprep.subr.mxu0 0.0
      %483 = vmatpush1.msra.mxu0 0.0
      %484 = vmatprep.subr.mxu0 0.0
      %485 = vmatpush1.msra.mxu0 0.0
      %486 = vmatprep.subr.mxu0 0.0
      %487 = vmatpush1.msra.mxu0 0.0
      %488 = vmatprep.subr.mxu0 0.0
      %489 = vmatpush1.msra.mxu0 0.0
      %490 = vmatprep.subr.mxu0 0.0
      %491 = vmatpush1.msra.mxu0 0.0
      %492 = vmatprep.subr.mxu0 0.0
      %493 = vmatpush1.msra.mxu0 0.0
      %494 = vmatprep.subr.mxu0 0.0
      %495 = vmatpush1.msra.mxu0 0.0
      %496 = vmatprep.subr.mxu0 0.0
      %497 = vmatpush1.msra.mxu0 0.0
      %498 = vmatprep.subr.mxu0 0.0
      %499 = vmatpush1.msra.mxu0 0.0
      %500 = vmatprep.mubr.f32.mxu0 0.0
      %501 = vmatmul.mubr.f32.gmra.mrb[0].mxu0 %v418
      %v502 = vpop.f32.mrb[0].mxu0
      %v503 = vadd.f32 0.0, %v502
      %v504 = vpop.f32.mrb[0].mxu0
      %505 = vdwg.mxu0
      %v506 = vadd.f32 %v414, %v503
      %v507 = vld [vmem:[%s2] sm:$0x1]
      %v509 = vlaneseq
      %v510 = vshrl.u32 %v509, 7
      %v511 = vsub.s32 0, %v510
      %v512 = vrot.slane %v507, %v511
      %v514 = vadd.f32 %v506, %v512
      %v515 = vmax.f32 %v514, 0.0
      %v516 = vld [vmem:[%s3] sm:$0xff]
      %v517 = vld [vmem:[%s3 + $0x8] sm:$0xff]
      %v518 = vld [vmem:[%s3 + $0x10] sm:$0xff]
      %v519 = vld [vmem:[%s3 + $0x18] sm:$0xff]
      %v520 = vld [vmem:[%s3 + $0x20] sm:$0xff]
      %v521 = vld [vmem:[%s3 + $0x28] sm:$0xff]
      %v522 = vld [vmem:[%s3 + $0x30] sm:$0xff]
      %v523 = vld [vmem:[%s3 + $0x38] sm:$0xff]
      %v524 = vld [vmem:[%s3 + $0x40] sm:$0xff]
      %v525 = vld [vmem:[%s3 + $0x48] sm:$0xff]
      %v526 = vld [vmem:[%s3 + $0x50] sm:$0xff]
      %v527 = vld [vmem:[%s3 + $0x58] sm:$0xff]
      %v528 = vld [vmem:[%s3 + $0x60] sm:$0xff]
      %v529 = vld [vmem:[%s3 + $0x68] sm:$0xff]
      %v530 = vld [vmem:[%s3 + $0x70] sm:$0xff]
      %v531 = vld [vmem:[%s3 + $0x78] sm:$0xff]
      %v532 = vld [vmem:[%s4] sm:$0x1]
      %v534 = vlaneseq
      %v535 = vshrl.u32 %v534, 7
      %v536 = vsub.s32 0, %v535
      %v537 = vrot.slane %v532, %v536
      %539 = vmatprep.subr.mxu0 0.0
      %540 = vmatpush1.msra.mxu0 %v516
      %541 = vmatprep.subr.mxu0 0.0
      %542 = vmatpush1.msra.mxu0 %v517
      %543 = vmatprep.subr.mxu0 0.0
      %544 = vmatpush1.msra.mxu0 %v518
      %545 = vmatprep.subr.mxu0 0.0
      %546 = vmatpush1.msra.mxu0 %v519
      %547 = vmatprep.subr.mxu0 0.0
      %548 = vmatpush1.msra.mxu0 %v520
      %549 = vmatprep.subr.mxu0 0.0
      %550 = vmatpush1.msra.mxu0 %v521
      %551 = vmatprep.subr.mxu0 0.0
      %552 = vmatpush1.msra.mxu0 %v522
      %553 = vmatprep.subr.mxu0 0.0
      %554 = vmatpush1.msra.mxu0 %v523
      %555 = vmatprep.subr.mxu0 0.0
      %556 = vmatpush1.msra.mxu0 %v524
      %557 = vmatprep.subr.mxu0 0.0
      %558 = vmatpush1.msra.mxu0 %v525
      %559 = vmatprep.subr.mxu0 0.0
      %560 = vmatpush1.msra.mxu0 %v526
      %561 = vmatprep.subr.mxu0 0.0
      %562 = vmatpush1.msra.mxu0 %v527
      %563 = vmatprep.subr.mxu0 0.0
      %564 = vmatpush1.msra.mxu0 %v528
      %565 = vmatprep.subr.mxu0 0.0
      %566 = vmatpush1.msra.mxu0 %v529
      %567 = vmatprep.subr.mxu0 0.0
      %568 = vmatpush1.msra.mxu0 %v530
      %569 = vmatprep.subr.mxu0 0.0
      %570 = vmatpush1.msra.mxu0 %v531
      %571 = vmatprep.subr.mxu0 0.0
      %572 = vmatpush1.msra.mxu0 0.0
      %573 = vmatprep.subr.mxu0 0.0
      %574 = vmatpush1.msra.mxu0 0.0
      %575 = vmatprep.subr.mxu0 0.0
      %576 = vmatpush1.msra.mxu0 0.0
      %577 = vmatprep.subr.mxu0 0.0
      %578 = vmatpush1.msra.mxu0 0.0
      %579 = vmatprep.subr.mxu0 0.0
      %580 = vmatpush1.msra.mxu0 0.0
      %581 = vmatprep.subr.mxu0 0.0
      %582 = vmatpush1.msra.mxu0 0.0
      %583 = vmatprep.subr.mxu0 0.0
      %584 = vmatpush1.msra.mxu0 0.0
      %585 = vmatprep.subr.mxu0 0.0
      %586 = vmatpush1.msra.mxu0 0.0
      %587 = vmatprep.subr.mxu0 0.0
      %588 = vmatpush1.msra.mxu0 0.0
      %589 = vmatprep.subr.mxu0 0.0
      %590 = vmatpush1.msra.mxu0 0.0
      %591 = vmatprep.subr.mxu0 0.0
      %592 = vmatpush1.msra.mxu0 0.0
      %593 = vmatprep.subr.mxu0 0.0
      %594 = vmatpush1.msra.mxu0 0.0
      %595 = vmatprep.subr.mxu0 0.0
      %596 = vmatpush1.msra.mxu0 0.0
      %597 = vmatprep.subr.mxu0 0.0
      %598 = vmatpush1.msra.mxu0 0.0
      %599 = vmatprep.subr.mxu0 0.0
      %600 = vmatpush1.msra.mxu0 0.0
      %601 = vmatprep.subr.mxu0 0.0
      %602 = vmatpush1.msra.mxu0 0.0
      %603 = vmatprep.mubr.f32.mxu0 0.0
      %604 = vmatmul.mubr.f32.gmra.mrb[0].mxu0 %v515
      %v605 = vpop.f32.mrb[0].mxu0
      %v606 = vadd.f32 %v537, %v605
      %v607 = vpop.f32.mrb[0].mxu0
      %608 = vdwg.mxu0
      %v609 = vadd.f32 %v258, %v606
      %610 = vst [vmem:[%s239] sm:$0xf] %v609
      %p611 = scmp.lt.s32.totalorder %s20, 1
      %s612 = scalar_select %p611, %s20, 1
      %p613 = scmp.lt.s32.totalorder %s21, 0
      %s614 = scalar_select %p613, %s21, 0
      %s615 = sadd.s32 %s614, %s612
      %s616 = smul.addr %s615, 4
      %s617 = scalar_lea.vmem %s5, %s616
      // Predicated region
      $region41: #{encoder_forward.11} parent=39 // pred_check
        %p618 = pneg %p158
      $region42: #{encoder_forward.11} parent=39 // pred_check_branch
        %620 = sbr.rel (%p618) target = $region44
      $region43: #{encoder_forward.11} parent=39 // pred_region
        _
      $region44: #{encoder_forward.11} parent=39 // pred_fallthru
        _
    $region40: #{encoder_forward.11} parent=5 // pred_fallthru
      _
    %p621 = scmp.le.s32.totalorder 2, %s11
    // Predicated region
    $region45: #{encoder_forward.11} parent=5 // pred_check
      %p622 = pneg %p621
    $region46: #{encoder_forward.11} parent=5 // pred_check_branch
      %624 = sbr.rel (%p622) target = $region48
    $region47: #{encoder_forward.11} parent=5 // pred_region
      %s625 = ssub.s32 %s11, 2
      // Predicated region
      $region49: #{encoder_forward.11} parent=47 // pred_check
        %p626 = pneg %p164
      $region50: #{encoder_forward.11} parent=47 // pred_check_branch
        %628 = sbr.rel (%p626) target = $region52
      $region51: #{encoder_forward.11} parent=47 // pred_region
        %p629 = scmp.lt.s32.totalorder %s22, 1
        %s630 = scalar_select %p629, %s22, 1
        %p631 = scmp.lt.s32.totalorder %s23, 0
        %s632 = scalar_select %p631, %s23, 0
        %s633 = sadd.s32 %s632, %s630
        %s634 = smul.addr %s633, 4
        %s635 = scalar_lea.vmem %s5, %s634
      $region52: #{encoder_forward.11} parent=47 // pred_fallthru
        _
    $region48: #{encoder_forward.11} parent=5 // pred_fallthru
      _
  $region6: #{encoder_forward.11} parent=0 // loop_footer
    %s15 = sadd.s32 1, %s11
  $region7: #{encoder_forward.11} parent=0 // loop_footer_branch
    %10 = sbr.rel target = $region3
  $region8: #{encoder_forward.11} parent=0 // loop_exit
    _

// kernel: encoder_forward.12
$region0: #{encoder_forward.12}
  #allocation0 [shape = 'u32[]', space=smem, size = 0x4, offset = 0x4, fixed_abs, tag = 'smem constant byte address 0x4 - core index']
  #allocation1 [shape = 'u32[144,128]{1,0:T(1,128)}', space=vmem, size = 0x12000, scoped, tag = 'internal scratch']
  %s0 = inlined_call_operand.vmem [shape: f32[2,10,128], index: 0, kind: input, shape index: {}]
  %s1 = inlined_call_operand.vmem [shape: f32[3,128,128], index: 1, kind: input, shape index: {}]
  %s2 = inlined_call_operand.vmem [shape: f32[1,128], index: 2, kind: input, shape index: {}]
  %s3 = inlined_call_operand.vmem [shape: f32[1,128,128], index: 3, kind: input, shape index: {}]
  %s4 = inlined_call_operand.vmem [shape: f32[1,128], index: 4, kind: input, shape index: {}]
  %s5 = inlined_call_operand.vmem [shape: f32[2,4,128], index: 5, kind: output, shape index: {}]
  %s6 = sld [smem:[#allocation0]]
  $region53: #{encoder_forward.12} parent=0
    _
  %s8 = ssub.s32 1, %s6
  %s9 = scalar_select 0, %s8, %s6
  loop: start=0, step=1, limit=4
  $region2: #{encoder_forward.12} parent=0 // loop_pre_header
    _
  $region3: #{encoder_forward.12} parent=0 // loop_header
    %s11 = sphi 0, %s15
    %p12 = scmp.ge.s32.totalorder %s11, 4
    %s18 = sphi 0, %s30
    %s19 = sphi 0, %s26
    %s20 = sphi 0, %s18
    %s21 = sphi 0, %s19
    %s22 = sphi 0, %s20
    %s23 = sphi 0, %s21
    %s33 = sphi 0, %s35
    %s36 = sphi 0, %s33
    %s37 = sphi 0, %s36
    %s53 = sphi 0, %s37
    %s57 = sphi 0, %s57
    %s59 = sphi 0, %s57
    %s60 = sphi 0, %s59
    %s74 = sphi 0, %s60
    %s78 = sphi 0, %s78
    %s80 = sphi 0, %s78
    %s81 = sphi 0, %s80
    %s95 = sphi 0, %s81
    %s99 = sphi 0, %s99
    %s101 = sphi 0, %s99
    %s102 = sphi 0, %s101
    %s116 = sphi 0, %s102
    %s120 = sphi 0, %s120
    %s122 = sphi 0, %s120
    %s123 = sphi 0, %s122
    %s137 = sphi 0, %s123
    %s145 = sphi 0, %s147
    %s148 = sphi 0, %s145
    %s149 = sphi 0, %s148
    %s165 = sphi 0, %s149
  $region4: #{encoder_forward.12} parent=0 // loop_header_branch
    %14 = sbr.rel (%p12) target = $region8
  $region5: #{encoder_forward.12} parent=0 // loop_body
    %s16 = ssub.s32 %s11, 1
    %s17 = ssub.s32 %s11, 2
    %s24 = sadd.s32 1, %s19
    %p25 = scmp.ge.s32.totalorder %s24, 1
    %s26 = scalar_select %p25, 0, %s24
    %s27 = sadd.s32 1, %s18
    %s28 = scalar_select %p25, %s27, %s18
    %p29 = scmp.ge.s32.totalorder %s28, 2
    %s30 = scalar_select %p29, 0, %s28
    %s31 = ssub.s32 %s18, %s30
    %p32 = scmp.eq.s32.totalorder %s31, 0
    %s34 = sadd.s32 %s33, 1
    %s35 = scalar_select %p32, %s33, %s34
    %p38 = pneg %p32
    %p39 = scmp.eq.s32.totalorder %s11, 1
    %p40 = por %p38, %p39
    %p41 = scmp.ne.s32.totalorder %s33, %s36
    %p42 = scmp.eq.s32.totalorder %s11, 0
    %p43 = por %p41, %p42
    %p44 = scmp.ne.s32.totalorder %s33, %s36
    %p45 = scmp.eq.s32.totalorder %s16, 1
    %p46 = por %p44, %p45
    %p47 = scmp.ne.s32.totalorder %s36, %s37
    %p48 = scmp.eq.s32.totalorder %s16, 0
    %p49 = por %p47, %p48
    %p50 = scmp.ne.s32.totalorder %s36, %s37
    %p51 = scmp.eq.s32.totalorder %s17, 1
    %p52 = por %p50, %p51
    %p54 = scmp.ne.s32.totalorder %s37, %s53
    %p55 = scmp.eq.s32.totalorder %s17, 0
    %p56 = por %p54, %p55
    %s58 = sadd.s32 %s57, 1
    %p61 = scmp.eq.s32.totalorder %s11, 1
    %p62 = scmp.ne.s32.totalorder %s57, %s59
    %p63 = scmp.eq.s32.totalorder %s11, 0
    %p64 = por %p62, %p63
    %p65 = scmp.ne.s32.totalorder %s57, %s59
    %p66 = scmp.eq.s32.totalorder %s16, 1
    %p67 = por %p65, %p66
    %p68 = scmp.ne.s32.totalorder %s59, %s60
    %p69 = scmp.eq.s32.totalorder %s16, 0
    %p70 = por %p68, %p69
    %p71 = scmp.ne.s32.totalorder %s59, %s60
    %p72 = scmp.eq.s32.totalorder %s17, 1
    %p73 = por %p71, %p72
    %p75 = scmp.ne.s32.totalorder %s60, %s74
    %p76 = scmp.eq.s32.totalorder %s17, 0
    %p77 = por %p75, %p76
    %s79 = sadd.s32 %s78, 1
    %p82 = scmp.eq.s32.totalorder %s11, 1
    %p83 = scmp.ne.s32.totalorder %s78, %s80
    %p84 = scmp.eq.s32.totalorder %s11, 0
    %p85 = por %p83, %p84
    %p86 = scmp.ne.s32.totalorder %s78, %s80
    %p87 = scmp.eq.s32.totalorder %s16, 1
    %p88 = por %p86, %p87
    %p89 = scmp.ne.s32.totalorder %s80, %s81
    %p90 = scmp.eq.s32.totalorder %s16, 0
    %p91 = por %p89, %p90
    %p92 = scmp.ne.s32.totalorder %s80, %s81
    %p93 = scmp.eq.s32.totalorder %s17, 1
    %p94 = por %p92, %p93
    %p96 = scmp.ne.s32.totalorder %s81, %s95
    %p97 = scmp.eq.s32.totalorder %s17, 0
    %p98 = por %p96, %p97
    %s100 = sadd.s32 %s99, 1
    %p103 = scmp.eq.s32.totalorder %s11, 1
    %p104 = scmp.ne.s32.totalorder %s99, %s101
    %p105 = scmp.eq.s32.totalorder %s11, 0
    %p106 = por %p104, %p105
    %p107 = scmp.ne.s32.totalorder %s99, %s101
    %p108 = scmp.eq.s32.totalorder %s16, 1
    %p109 = por %p107, %p108
    %p110 = scmp.ne.s32.totalorder %s101, %s102
    %p111 = scmp.eq.s32.totalorder %s16, 0
    %p112 = por %p110, %p111
    %p113 = scmp.ne.s32.totalorder %s101, %s102
    %p114 = scmp.eq.s32.totalorder %s17, 1
    %p115 = por %p113, %p114
    %p117 = scmp.ne.s32.totalorder %s102, %s116
    %p118 = scmp.eq.s32.totalorder %s17, 0
    %p119 = por %p117, %p118
    %s121 = sadd.s32 %s120, 1
    %p124 = scmp.eq.s32.totalorder %s11, 1
    %p125 = scmp.ne.s32.totalorder %s120, %s122
    %p126 = scmp.eq.s32.totalorder %s11, 0
    %p127 = por %p125, %p126
    %p128 = scmp.ne.s32.totalorder %s120, %s122
    %p129 = scmp.eq.s32.totalorder %s16, 1
    %p130 = por %p128, %p129
    %p131 = scmp.ne.s32.totalorder %s122, %s123
    %p132 = scmp.eq.s32.totalorder %s16, 0
    %p133 = por %p131, %p132
    %p134 = scmp.ne.s32.totalorder %s122, %s123
    %p135 = scmp.eq.s32.totalorder %s17, 1
    %p136 = por %p134, %p135
    %p138 = scmp.ne.s32.totalorder %s123, %s137
    %p139 = scmp.eq.s32.totalorder %s17, 0
    %p140 = por %p138, %p139
    %s141 = ssub.s32 %s18, %s30
    %s142 = ssub.s32 %s19, %s26
    %s143 = sor.u32 %s141, %s142
    %p144 = scmp.eq.s32.totalorder %s143, 0
    %s146 = sadd.s32 %s145, 1
    %s147 = scalar_select %p144, %s145, %s146
    %p150 = pneg %p144
    %p151 = scmp.eq.s32.totalorder %s11, 1
    %p152 = por %p150, %p151
    %p153 = scmp.ne.s32.totalorder %s145, %s148
    %p154 = scmp.eq.s32.totalorder %s11, 0
    %p155 = por %p153, %p154
    %p156 = scmp.ne.s32.totalorder %s145, %s148
    %p157 = scmp.eq.s32.totalorder %s16, 1
    %p158 = por %p156, %p157
    %p159 = scmp.ne.s32.totalorder %s148, %s149
    %p160 = scmp.eq.s32.totalorder %s16, 0
    %p161 = por %p159, %p160
    %p162 = scmp.ne.s32.totalorder %s148, %s149
    %p163 = scmp.eq.s32.totalorder %s17, 1
    %p164 = por %p162, %p163
    %p166 = scmp.ne.s32.totalorder %s149, %s165
    %p167 = scmp.eq.s32.totalorder %s17, 0
    %p168 = por %p166, %p167
    %p169 = scmp.le.s32.totalorder 1, %s11
    %p170 = scmp.lt.s32.totalorder %s11, 3
    %p171 = pnand %p169, %p170
    %p172 = pneg %p171
    // Predicated region
    $region9: #{encoder_forward.12} parent=5 // pred_check
      _
    $region10: #{encoder_forward.12} parent=5 // pred_check_branch
      %174 = sbr.rel (%p171) target = $region12
    $region11: #{encoder_forward.12} parent=5 // pred_region
      %s175 = ssub.s32 %s11, 1
      // Predicated region
      $region13: #{encoder_forward.12} parent=11 // pred_check
        %p176 = pneg %p70
      $region14: #{encoder_forward.12} parent=11 // pred_check_branch
        %178 = sbr.rel (%p176) target = $region16
      $region15: #{encoder_forward.12} parent=11 // pred_region
        _
      $region16: #{encoder_forward.12} parent=11 // pred_fallthru
        _
      // Predicated region
      $region17: #{encoder_forward.12} parent=11 // pred_check
        %p179 = pneg %p91
      $region18: #{encoder_forward.12} parent=11 // pred_check_branch
        %181 = sbr.rel (%p179) target = $region20
      $region19: #{encoder_forward.12} parent=11 // pred_region
        _
      $region20: #{encoder_forward.12} parent=11 // pred_fallthru
        _
      // Predicated region
      $region21: #{encoder_forward.12} parent=11 // pred_check
        %p182 = pneg %p112
      $region22: #{encoder_forward.12} parent=11 // pred_check_branch
        %184 = sbr.rel (%p182) target = $region24
      $region23: #{encoder_forward.12} parent=11 // pred_region
        _
      $region24: #{encoder_forward.12} parent=11 // pred_fallthru
        _
      // Predicated region
      $region25: #{encoder_forward.12} parent=11 // pred_check
        %p185 = pneg %p133
      $region26: #{encoder_forward.12} parent=11 // pred_check_branch
        %187 = sbr.rel (%p185) target = $region28
      $region27: #{encoder_forward.12} parent=11 // pred_region
        _
      $region28: #{encoder_forward.12} parent=11 // pred_fallthru
        _
    $region12: #{encoder_forward.12} parent=5 // pred_fallthru
      _
    %p188 = scmp.lt.s32.totalorder %s11, 2
    // Predicated region
    $region29: #{encoder_forward.12} parent=5 // pred_check
      %p189 = pneg %p188
    $region30: #{encoder_forward.12} parent=5 // pred_check_branch
      %191 = sbr.rel (%p189) target = $region32
    $region31: #{encoder_forward.12} parent=5 // pred_region
      // Predicated region
      $region33: #{encoder_forward.12} parent=31 // pred_check
        %p192 = pneg %p43
      $region34: #{encoder_forward.12} parent=31 // pred_check_branch
        %194 = sbr.rel (%p192) target = $region36
      $region35: #{encoder_forward.12} parent=31 // pred_region
        %p195 = scmp.lt.s32.totalorder %s18, 1
        %s196 = scalar_select %p195, %s18, 1
        %s197 = smul.addr %s196, 2
        %s198 = smul.addr %s197, 8
        %s199 = scalar_lea.vmem %s0, %s198
      $region36: #{encoder_forward.12} parent=31 // pred_fallthru
        _
    $region32: #{encoder_forward.12} parent=5 // pred_fallthru
      _
    %p200 = scmp.le.s32.totalorder 1, %s11
    %p201 = scmp.lt.s32.totalorder %s11, 3
    %p202 = pnand %p200, %p201
    %p203 = pneg %p202
    // Predicated region
    $region37: #{encoder_forward.12} parent=5 // pred_check
      _
    $region38: #{encoder_forward.12} parent=5 // pred_check_branch
      %205 = sbr.rel (%p202) target = $region40
    $region39: #{encoder_forward.12} parent=5 // pred_region
      %s206 = ssub.s32 %s11, 1
      %p207 = scmp.lt.s32.totalorder %s20, 1
      %s208 = scalar_select %p207, %s20, 1
      %s209 = smul.addr %s208, 2
      %s210 = smul.addr %s209, 8
      %s211 = scalar_lea.vmem %s0, %s210
      %p212 = pneg %p49
      %p213 = pneg %p46
      %p214 = pneg %p70
      %p215 = pneg %p67
      %p216 = pneg %p91
      %p217 = pneg %p88
      %p218 = pneg %p112
      %p219 = pneg %p109
      %p220 = pneg %p133
      %p221 = pneg %p130
      %p222 = pneg %p161
      %p223 = pneg %p158
      %p224 = scmp.lt.s32.totalorder %s20, 1
      %s225 = scalar_select %p224, %s20, 1
      %p226 = scmp.lt.s32.totalorder %s21, 0
      %s227 = scalar_select %p226, %s21, 0
      %s228 = sadd.s32 %s227, %s225
      %s229 = smul.addr %s228, 4
      %s230 = scalar_lea.vmem %s5, %s229
      %p231 = scmp.lt.s32.totalorder %s20, 1
      %s232 = scalar_select %p231, %s20, 1
      %s233 = smul.addr %s232, 2
      %s234 = smul.addr %s233, 8
      %s235 = scalar_lea.vmem %s0, %s234
      %p236 = scmp.lt.s32.totalorder %s20, 1
      %s237 = scalar_select %p236, %s20, 1
      %p238 = scmp.lt.s32.totalorder %s21, 0
      %s239 = scalar_select %p238, %s21, 0
      %s240 = sadd.s32 %s239, %s237
      %s241 = smul.addr %s240, 4
      %s242 = scalar_lea.vmem %s5, %s241
      %v243 = vld [vmem:[%s235] sm:$0xf]
      %v244 = vmax.f32 %v243, 0.0
      %v245 = vld [vmem:[%s1] sm:$0xff]
      %v246 = vld [vmem:[%s1 + $0x8] sm:$0xff]
      %v247 = vld [vmem:[%s1 + $0x10] sm:$0xff]
      %v248 = vld [vmem:[%s1 + $0x18] sm:$0xff]
      %v249 = vld [vmem:[%s1 + $0x20] sm:$0xff]
      %v250 = vld [vmem:[%s1 + $0x28] sm:$0xff]
      %v251 = vld [vmem:[%s1 + $0x30] sm:$0xff]
      %v252 = vld [vmem:[%s1 + $0x38] sm:$0xff]
      %v253 = vld [vmem:[%s1 + $0x40] sm:$0xff]
      %v254 = vld [vmem:[%s1 + $0x48] sm:$0xff]
      %v255 = vld [vmem:[%s1 + $0x50] sm:$0xff]
      %v256 = vld [vmem:[%s1 + $0x58] sm:$0xff]
      %v257 = vld [vmem:[%s1 + $0x60] sm:$0xff]
      %v258 = vld [vmem:[%s1 + $0x68] sm:$0xff]
      %v259 = vld [vmem:[%s1 + $0x70] sm:$0xff]
      %v260 = vld [vmem:[%s1 + $0x78] sm:$0xff]
      %v261 = vld [vmem:[%s235 + $0x3] sm:$0xf]
      %v262 = vmax.f32 %v261, 0.0
      %s263 = scalar_lea.vmem %s1, 128
      %v264 = vld [vmem:[%s263] sm:$0xff]
      %v265 = vld [vmem:[%s263 + $0x8] sm:$0xff]
      %v266 = vld [vmem:[%s263 + $0x10] sm:$0xff]
      %v267 = vld [vmem:[%s263 + $0x18] sm:$0xff]
      %v268 = vld [vmem:[%s263 + $0x20] sm:$0xff]
      %v269 = vld [vmem:[%s263 + $0x28] sm:$0xff]
      %v270 = vld [vmem:[%s263 + $0x30] sm:$0xff]
      %v271 = vld [vmem:[%s263 + $0x38] sm:$0xff]
      %v272 = vld [vmem:[%s263 + $0x40] sm:$0xff]
      %v273 = vld [vmem:[%s263 + $0x48] sm:$0xff]
      %v274 = vld [vmem:[%s263 + $0x50] sm:$0xff]
      %v275 = vld [vmem:[%s263 + $0x58] sm:$0xff]
      %v276 = vld [vmem:[%s263 + $0x60] sm:$0xff]
      %v277 = vld [vmem:[%s263 + $0x68] sm:$0xff]
      %v278 = vld [vmem:[%s263 + $0x70] sm:$0xff]
      %v279 = vld [vmem:[%s263 + $0x78] sm:$0xff]
      %280 = vmatprep.subr.mxu0 0.0
      %281 = vmatpush1.msra.mxu0 %v264
      %282 = vmatprep.subr.mxu0 0.0
      %283 = vmatpush1.msra.mxu0 %v265
      %284 = vmatprep.subr.mxu0 0.0
      %285 = vmatpush1.msra.mxu0 %v266
      %286 = vmatprep.subr.mxu0 0.0
      %287 = vmatpush1.msra.mxu0 %v267
      %288 = vmatprep.subr.mxu0 0.0
      %289 = vmatpush1.msra.mxu0 %v268
      %290 = vmatprep.subr.mxu0 0.0
      %291 = vmatpush1.msra.mxu0 %v269
      %292 = vmatprep.subr.mxu0 0.0
      %293 = vmatpush1.msra.mxu0 %v270
      %294 = vmatprep.subr.mxu0 0.0
      %295 = vmatpush1.msra.mxu0 %v271
      %296 = vmatprep.subr.mxu0 0.0
      %297 = vmatpush1.msra.mxu0 %v272
      %298 = vmatprep.subr.mxu0 0.0
      %299 = vmatpush1.msra.mxu0 %v273
      %300 = vmatprep.subr.mxu0 0.0
      %301 = vmatpush1.msra.mxu0 %v274
      %302 = vmatprep.subr.mxu0 0.0
      %303 = vmatpush1.msra.mxu0 %v275
      %304 = vmatprep.subr.mxu0 0.0
      %305 = vmatpush1.msra.mxu0 %v276
      %306 = vmatprep.subr.mxu0 0.0
      %307 = vmatpush1.msra.mxu0 %v277
      %308 = vmatprep.subr.mxu0 0.0
      %309 = vmatpush1.msra.mxu0 %v278
      %310 = vmatprep.subr.mxu0 0.0
      %311 = vmatpush1.msra.mxu0 %v279
      %312 = vmatprep.subr.mxu0 0.0
      %313 = vmatpush1.msra.mxu0 0.0
      %314 = vmatprep.subr.mxu0 0.0
      %315 = vmatpush1.msra.mxu0 0.0
      %316 = vmatprep.subr.mxu0 0.0
      %317 = vmatpush1.msra.mxu0 0.0
      %318 = vmatprep.subr.mxu0 0.0
      %319 = vmatpush1.msra.mxu0 0.0
      %320 = vmatprep.subr.mxu0 0.0
      %321 = vmatpush1.msra.mxu0 0.0
      %322 = vmatprep.subr.mxu0 0.0
      %323 = vmatpush1.msra.mxu0 0.0
      %324 = vmatprep.subr.mxu0 0.0
      %325 = vmatpush1.msra.mxu0 0.0
      %326 = vmatprep.subr.mxu0 0.0
      %327 = vmatpush1.msra.mxu0 0.0
      %328 = vmatprep.subr.mxu0 0.0
      %329 = vmatpush1.msra.mxu0 0.0
      %330 = vmatprep.subr.mxu0 0.0
      %331 = vmatpush1.msra.mxu0 0.0
      %332 = vmatprep.subr.mxu0 0.0
      %333 = vmatpush1.msra.mxu0 0.0
      %334 = vmatprep.subr.mxu0 0.0
      %335 = vmatpush1.msra.mxu0 0.0
      %336 = vmatprep.subr.mxu0 0.0
      %337 = vmatpush1.msra.mxu0 0.0
      %338 = vmatprep.subr.mxu0 0.0
      %339 = vmatpush1.msra.mxu0 0.0
      %340 = vmatprep.subr.mxu0 0.0
      %341 = vmatpush1.msra.mxu0 0.0
      %342 = vmatprep.subr.mxu0 0.0
      %343 = vmatpush1.msra.mxu0 0.0
      %344 = vmatprep.mubr.f32.mxu0 0.0
      %345 = vmatmul.mubr.f32.gmra.mrb[0].mxu0 %v262
      %v346 = vpop.f32.mrb[0].mxu0
      %v347 = vadd.f32 0.0, %v346
      %v348 = vpop.f32.mrb[0].mxu0
      %349 = vdwg.mxu0
      %350 = vmatprep.subr.mxu0 0.0
      %351 = vmatpush1.msra.mxu0 %v245
      %352 = vmatprep.subr.mxu0 0.0
      %353 = vmatpush1.msra.mxu0 %v246
      %354 = vmatprep.subr.mxu0 0.0
      %355 = vmatpush1.msra.mxu0 %v247
      %356 = vmatprep.subr.mxu0 0.0
      %357 = vmatpush1.msra.mxu0 %v248
      %358 = vmatprep.subr.mxu0 0.0
      %359 = vmatpush1.msra.mxu0 %v249
      %360 = vmatprep.subr.mxu0 0.0
      %361 = vmatpush1.msra.mxu0 %v250
      %362 = vmatprep.subr.mxu0 0.0
      %363 = vmatpush1.msra.mxu0 %v251
      %364 = vmatprep.subr.mxu0 0.0
      %365 = vmatpush1.msra.mxu0 %v252
      %366 = vmatprep.subr.mxu0 0.0
      %367 = vmatpush1.msra.mxu0 %v253
      %368 = vmatprep.subr.mxu0 0.0
      %369 = vmatpush1.msra.mxu0 %v254
      %370 = vmatprep.subr.mxu0 0.0
      %371 = vmatpush1.msra.mxu0 %v255
      %372 = vmatprep.subr.mxu0 0.0
      %373 = vmatpush1.msra.mxu0 %v256
      %374 = vmatprep.subr.mxu0 0.0
      %375 = vmatpush1.msra.mxu0 %v257
      %376 = vmatprep.subr.mxu0 0.0
      %377 = vmatpush1.msra.mxu0 %v258
      %378 = vmatprep.subr.mxu0 0.0
      %379 = vmatpush1.msra.mxu0 %v259
      %380 = vmatprep.subr.mxu0 0.0
      %381 = vmatpush1.msra.mxu0 %v260
      %382 = vmatprep.subr.mxu0 0.0
      %383 = vmatpush1.msra.mxu0 0.0
      %384 = vmatprep.subr.mxu0 0.0
      %385 = vmatpush1.msra.mxu0 0.0
      %386 = vmatprep.subr.mxu0 0.0
      %387 = vmatpush1.msra.mxu0 0.0
      %388 = vmatprep.subr.mxu0 0.0
      %389 = vmatpush1.msra.mxu0 0.0
      %390 = vmatprep.subr.mxu0 0.0
      %391 = vmatpush1.msra.mxu0 0.0
      %392 = vmatprep.subr.mxu0 0.0
      %393 = vmatpush1.msra.mxu0 0.0
      %394 = vmatprep.subr.mxu0 0.0
      %395 = vmatpush1.msra.mxu0 0.0
      %396 = vmatprep.subr.mxu0 0.0
      %397 = vmatpush1.msra.mxu0 0.0
      %398 = vmatprep.subr.mxu0 0.0
      %399 = vmatpush1.msra.mxu0 0.0
      %400 = vmatprep.subr.mxu0 0.0
      %401 = vmatpush1.msra.mxu0 0.0
      %402 = vmatprep.subr.mxu0 0.0
      %403 = vmatpush1.msra.mxu0 0.0
      %404 = vmatprep.subr.mxu0 0.0
      %405 = vmatpush1.msra.mxu0 0.0
      %406 = vmatprep.subr.mxu0 0.0
      %407 = vmatpush1.msra.mxu0 0.0
      %408 = vmatprep.subr.mxu0 0.0
      %409 = vmatpush1.msra.mxu0 0.0
      %410 = vmatprep.subr.mxu0 0.0
      %411 = vmatpush1.msra.mxu0 0.0
      %412 = vmatprep.subr.mxu0 0.0
      %413 = vmatpush1.msra.mxu0 0.0
      %414 = vmatprep.mubr.f32.mxu0 0.0
      %415 = vmatmul.mubr.f32.gmra.mrb[0].mxu0 %v244
      %v416 = vpop.f32.mrb[0].mxu0
      %v417 = vadd.f32 %v347, %v416
      %v418 = vpop.f32.mrb[0].mxu0
      %419 = vdwg.mxu0
      %v420 = vld [vmem:[%s235 + $0x6] sm:$0xf]
      %v421 = vmax.f32 %v420, 0.0
      %s422 = scalar_lea.vmem %s1, 256
      %v423 = vld [vmem:[%s422] sm:$0xff]
      %v424 = vld [vmem:[%s422 + $0x8] sm:$0xff]
      %v425 = vld [vmem:[%s422 + $0x10] sm:$0xff]
      %v426 = vld [vmem:[%s422 + $0x18] sm:$0xff]
      %v427 = vld [vmem:[%s422 + $0x20] sm:$0xff]
      %v428 = vld [vmem:[%s422 + $0x28] sm:$0xff]
      %v429 = vld [vmem:[%s422 + $0x30] sm:$0xff]
      %v430 = vld [vmem:[%s422 + $0x38] sm:$0xff]
      %v431 = vld [vmem:[%s422 + $0x40] sm:$0xff]
      %v432 = vld [vmem:[%s422 + $0x48] sm:$0xff]
      %v433 = vld [vmem:[%s422 + $0x50] sm:$0xff]
      %v434 = vld [vmem:[%s422 + $0x58] sm:$0xff]
      %v435 = vld [vmem:[%s422 + $0x60] sm:$0xff]
      %v436 = vld [vmem:[%s422 + $0x68] sm:$0xff]
      %v437 = vld [vmem:[%s422 + $0x70] sm:$0xff]
      %v438 = vld [vmem:[%s422 + $0x78] sm:$0xff]
      %439 = vmatprep.subr.mxu0 0.0
      %440 = vmatpush1.msra.mxu0 %v423
      %441 = vmatprep.subr.mxu0 0.0
      %442 = vmatpush1.msra.mxu0 %v424
      %443 = vmatprep.subr.mxu0 0.0
      %444 = vmatpush1.msra.mxu0 %v425
      %445 = vmatprep.subr.mxu0 0.0
      %446 = vmatpush1.msra.mxu0 %v426
      %447 = vmatprep.subr.mxu0 0.0
      %448 = vmatpush1.msra.mxu0 %v427
      %449 = vmatprep.subr.mxu0 0.0
      %450 = vmatpush1.msra.mxu0 %v428
      %451 = vmatprep.subr.mxu0 0.0
      %452 = vmatpush1.msra.mxu0 %v429
      %453 = vmatprep.subr.mxu0 0.0
      %454 = vmatpush1.msra.mxu0 %v430
      %455 = vmatprep.subr.mxu0 0.0
      %456 = vmatpush1.msra.mxu0 %v431
      %457 = vmatprep.subr.mxu0 0.0
      %458 = vmatpush1.msra.mxu0 %v432
      %459 = vmatprep.subr.mxu0 0.0
      %460 = vmatpush1.msra.mxu0 %v433
      %461 = vmatprep.subr.mxu0 0.0
      %462 = vmatpush1.msra.mxu0 %v434
      %463 = vmatprep.subr.mxu0 0.0
      %464 = vmatpush1.msra.mxu0 %v435
      %465 = vmatprep.subr.mxu0 0.0
      %466 = vmatpush1.msra.mxu0 %v436
      %467 = vmatprep.subr.mxu0 0.0
      %468 = vmatpush1.msra.mxu0 %v437
      %469 = vmatprep.subr.mxu0 0.0
      %470 = vmatpush1.msra.mxu0 %v438
      %471 = vmatprep.subr.mxu0 0.0
      %472 = vmatpush1.msra.mxu0 0.0
      %473 = vmatprep.subr.mxu0 0.0
      %474 = vmatpush1.msra.mxu0 0.0
      %475 = vmatprep.subr.mxu0 0.0
      %476 = vmatpush1.msra.mxu0 0.0
      %477 = vmatprep.subr.mxu0 0.0
      %478 = vmatpush1.msra.mxu0 0.0
      %479 = vmatprep.subr.mxu0 0.0
      %480 = vmatpush1.msra.mxu0 0.0
      %481 = vmatprep.subr.mxu0 0.0
      %482 = vmatpush1.msra.mxu0 0.0
      %483 = vmatprep.subr.mxu0 0.0
      %484 = vmatpush1.msra.mxu0 0.0
      %485 = vmatprep.subr.mxu0 0.0
      %486 = vmatpush1.msra.mxu0 0.0
      %487 = vmatprep.subr.mxu0 0.0
      %488 = vmatpush1.msra.mxu0 0.0
      %489 = vmatprep.subr.mxu0 0.0
      %490 = vmatpush1.msra.mxu0 0.0
      %491 = vmatprep.subr.mxu0 0.0
      %492 = vmatpush1.msra.mxu0 0.0
      %493 = vmatprep.subr.mxu0 0.0
      %494 = vmatpush1.msra.mxu0 0.0
      %495 = vmatprep.subr.mxu0 0.0
      %496 = vmatpush1.msra.mxu0 0.0
      %497 = vmatprep.subr.mxu0 0.0
      %498 = vmatpush1.msra.mxu0 0.0
      %499 = vmatprep.subr.mxu0 0.0
      %500 = vmatpush1.msra.mxu0 0.0
      %501 = vmatprep.subr.mxu0 0.0
      %502 = vmatpush1.msra.mxu0 0.0
      %503 = vmatprep.mubr.f32.mxu0 0.0
      %504 = vmatmul.mubr.f32.gmra.mrb[0].mxu0 %v421
      %v505 = vpop.f32.mrb[0].mxu0
      %v506 = vadd.f32 0.0, %v505
      %v507 = vpop.f32.mrb[0].mxu0
      %508 = vdwg.mxu0
      %v509 = vadd.f32 %v417, %v506
      %v510 = vld [vmem:[%s2] sm:$0x1]
      %v512 = vlaneseq
      %v513 = vshrl.u32 %v512, 7
      %v514 = vsub.s32 0, %v513
      %v515 = vrot.slane %v510, %v514
      %v517 = vadd.f32 %v509, %v515
      %v518 = vmax.f32 %v517, 0.0
      %v519 = vld [vmem:[%s3] sm:$0xff]
      %v520 = vld [vmem:[%s3 + $0x8] sm:$0xff]
      %v521 = vld [vmem:[%s3 + $0x10] sm:$0xff]
      %v522 = vld [vmem:[%s3 + $0x18] sm:$0xff]
      %v523 = vld [vmem:[%s3 + $0x20] sm:$0xff]
      %v524 = vld [vmem:[%s3 + $0x28] sm:$0xff]
      %v525 = vld [vmem:[%s3 + $0x30] sm:$0xff]
      %v526 = vld [vmem:[%s3 + $0x38] sm:$0xff]
      %v527 = vld [vmem:[%s3 + $0x40] sm:$0xff]
      %v528 = vld [vmem:[%s3 + $0x48] sm:$0xff]
      %v529 = vld [vmem:[%s3 + $0x50] sm:$0xff]
      %v530 = vld [vmem:[%s3 + $0x58] sm:$0xff]
      %v531 = vld [vmem:[%s3 + $0x60] sm:$0xff]
      %v532 = vld [vmem:[%s3 + $0x68] sm:$0xff]
      %v533 = vld [vmem:[%s3 + $0x70] sm:$0xff]
      %v534 = vld [vmem:[%s3 + $0x78] sm:$0xff]
      %v535 = vld [vmem:[%s4] sm:$0x1]
      %v537 = vlaneseq
      %v538 = vshrl.u32 %v537, 7
      %v539 = vsub.s32 0, %v538
      %v540 = vrot.slane %v535, %v539
      %542 = vmatprep.subr.mxu0 0.0
      %543 = vmatpush1.msra.mxu0 %v519
      %544 = vmatprep.subr.mxu0 0.0
      %545 = vmatpush1.msra.mxu0 %v520
      %546 = vmatprep.subr.mxu0 0.0
      %547 = vmatpush1.msra.mxu0 %v521
      %548 = vmatprep.subr.mxu0 0.0
      %549 = vmatpush1.msra.mxu0 %v522
      %550 = vmatprep.subr.mxu0 0.0
      %551 = vmatpush1.msra.mxu0 %v523
      %552 = vmatprep.subr.mxu0 0.0
      %553 = vmatpush1.msra.mxu0 %v524
      %554 = vmatprep.subr.mxu0 0.0
      %555 = vmatpush1.msra.mxu0 %v525
      %556 = vmatprep.subr.mxu0 0.0
      %557 = vmatpush1.msra.mxu0 %v526
      %558 = vmatprep.subr.mxu0 0.0
      %559 = vmatpush1.msra.mxu0 %v527
      %560 = vmatprep.subr.mxu0 0.0
      %561 = vmatpush1.msra.mxu0 %v528
      %562 = vmatprep.subr.mxu0 0.0
      %563 = vmatpush1.msra.mxu0 %v529
      %564 = vmatprep.subr.mxu0 0.0
      %565 = vmatpush1.msra.mxu0 %v530
      %566 = vmatprep.subr.mxu0 0.0
      %567 = vmatpush1.msra.mxu0 %v531
      %568 = vmatprep.subr.mxu0 0.0
      %569 = vmatpush1.msra.mxu0 %v532
      %570 = vmatprep.subr.mxu0 0.0
      %571 = vmatpush1.msra.mxu0 %v533
      %572 = vmatprep.subr.mxu0 0.0
      %573 = vmatpush1.msra.mxu0 %v534
      %574 = vmatprep.subr.mxu0 0.0
      %575 = vmatpush1.msra.mxu0 0.0
      %576 = vmatprep.subr.mxu0 0.0
      %577 = vmatpush1.msra.mxu0 0.0
      %578 = vmatprep.subr.mxu0 0.0
      %579 = vmatpush1.msra.mxu0 0.0
      %580 = vmatprep.subr.mxu0 0.0
      %581 = vmatpush1.msra.mxu0 0.0
      %582 = vmatprep.subr.mxu0 0.0
      %583 = vmatpush1.msra.mxu0 0.0
      %584 = vmatprep.subr.mxu0 0.0
      %585 = vmatpush1.msra.mxu0 0.0
      %586 = vmatprep.subr.mxu0 0.0
      %587 = vmatpush1.msra.mxu0 0.0
      %588 = vmatprep.subr.mxu0 0.0
      %589 = vmatpush1.msra.mxu0 0.0
      %590 = vmatprep.subr.mxu0 0.0
      %591 = vmatpush1.msra.mxu0 0.0
      %592 = vmatprep.subr.mxu0 0.0
      %593 = vmatpush1.msra.mxu0 0.0
      %594 = vmatprep.subr.mxu0 0.0
      %595 = vmatpush1.msra.mxu0 0.0
      %596 = vmatprep.subr.mxu0 0.0
      %597 = vmatpush1.msra.mxu0 0.0
      %598 = vmatprep.subr.mxu0 0.0
      %599 = vmatpush1.msra.mxu0 0.0
      %600 = vmatprep.subr.mxu0 0.0
      %601 = vmatpush1.msra.mxu0 0.0
      %602 = vmatprep.subr.mxu0 0.0
      %603 = vmatpush1.msra.mxu0 0.0
      %604 = vmatprep.subr.mxu0 0.0
      %605 = vmatpush1.msra.mxu0 0.0
      %606 = vmatprep.mubr.f32.mxu0 0.0
      %607 = vmatmul.mubr.f32.gmra.mrb[0].mxu0 %v518
      %v608 = vpop.f32.mrb[0].mxu0
      %v609 = vadd.f32 %v540, %v608
      %v610 = vpop.f32.mrb[0].mxu0
      %611 = vdwg.mxu0
      %v612 = vadd.f32 %v261, %v609
      %613 = vst [vmem:[%s242] sm:$0xf] %v612
      %p614 = scmp.lt.s32.totalorder %s20, 1
      %s615 = scalar_select %p614, %s20, 1
      %p616 = scmp.lt.s32.totalorder %s21, 0
      %s617 = scalar_select %p616, %s21, 0
      %s618 = sadd.s32 %s617, %s615
      %s619 = smul.addr %s618, 4
      %s620 = scalar_lea.vmem %s5, %s619
      // Predicated region
      $region41: #{encoder_forward.12} parent=39 // pred_check
        %p621 = pneg %p158
      $region42: #{encoder_forward.12} parent=39 // pred_check_branch
        %623 = sbr.rel (%p621) target = $region44
      $region43: #{encoder_forward.12} parent=39 // pred_region
        _
      $region44: #{encoder_forward.12} parent=39 // pred_fallthru
        _
    $region40: #{encoder_forward.12} parent=5 // pred_fallthru
      _
    %p624 = scmp.le.s32.totalorder 2, %s11
    // Predicated region
    $region45: #{encoder_forward.12} parent=5 // pred_check
      %p625 = pneg %p624
    $region46: #{encoder_forward.12} parent=5 // pred_check_branch
      %627 = sbr.rel (%p625) target = $region48
    $region47: #{encoder_forward.12} parent=5 // pred_region
      %s628 = ssub.s32 %s11, 2
      // Predicated region
      $region49: #{encoder_forward.12} parent=47 // pred_check
        %p629 = pneg %p164
      $region50: #{encoder_forward.12} parent=47 // pred_check_branch
        %631 = sbr.rel (%p629) target = $region52
      $region51: #{encoder_forward.12} parent=47 // pred_region
        %p632 = scmp.lt.s32.totalorder %s22, 1
        %s633 = scalar_select %p632, %s22, 1
        %p634 = scmp.lt.s32.totalorder %s23, 0
        %s635 = scalar_select %p634, %s23, 0
        %s636 = sadd.s32 %s635, %s633
        %s637 = smul.addr %s636, 4
        %s638 = scalar_lea.vmem %s5, %s637
      $region52: #{encoder_forward.12} parent=47 // pred_fallthru
        _
    $region48: #{encoder_forward.12} parent=5 // pred_fallthru
      _
  $region6: #{encoder_forward.12} parent=0 // loop_footer
    %s15 = sadd.s32 1, %s11
  $region7: #{encoder_forward.12} parent=0 // loop_footer_branch
    %10 = sbr.rel target = $region3
  $region8: #{encoder_forward.12} parent=0 // loop_exit
    _

// kernel: encoder_forward.13
$region0: #{encoder_forward.13}
  #allocation0 [shape = 'u32[]', space=smem, size = 0x4, offset = 0x4, fixed_abs, tag = 'smem constant byte address 0x4 - core index']
  #allocation1 [shape = 'u32[144,128]{1,0:T(1,128)}', space=vmem, size = 0x12000, scoped, tag = 'internal scratch']
  %s0 = inlined_call_operand.vmem [shape: f32[2,6,128], index: 0, kind: input, shape index: {}]
  %s1 = inlined_call_operand.vmem [shape: f32[3,128,128], index: 1, kind: input, shape index: {}]
  %s2 = inlined_call_operand.vmem [shape: f32[1,128], index: 2, kind: input, shape index: {}]
  %s3 = inlined_call_operand.vmem [shape: f32[2,4,128], index: 3, kind: output, shape index: {}]
  %s4 = sld [smem:[#allocation0]]
  $region45: #{encoder_forward.13} parent=0
    _
  %s6 = ssub.s32 1, %s4
  %s7 = scalar_select 0, %s6, %s4
  loop: start=0, step=1, limit=4
  $region2: #{encoder_forward.13} parent=0 // loop_pre_header
    _
  $region3: #{encoder_forward.13} parent=0 // loop_header
    %s9 = sphi 0, %s13
    %p10 = scmp.ge.s32.totalorder %s9, 4
    %s16 = sphi 0, %s28
    %s17 = sphi 0, %s24
    %s18 = sphi 0, %s16
    %s19 = sphi 0, %s17
    %s20 = sphi 0, %s18
    %s21 = sphi 0, %s19
    %s31 = sphi 0, %s33
    %s34 = sphi 0, %s31
    %s35 = sphi 0, %s34
    %s51 = sphi 0, %s35
    %s55 = sphi 0, %s55
    %s57 = sphi 0, %s55
    %s58 = sphi 0, %s57
    %s72 = sphi 0, %s58
    %s76 = sphi 0, %s76
    %s78 = sphi 0, %s76
    %s79 = sphi 0, %s78
    %s93 = sphi 0, %s79
    %s101 = sphi 0, %s103
    %s104 = sphi 0, %s101
    %s105 = sphi 0, %s104
    %s121 = sphi 0, %s105
  $region4: #{encoder_forward.13} parent=0 // loop_header_branch
    %12 = sbr.rel (%p10) target = $region8
  $region5: #{encoder_forward.13} parent=0 // loop_body
    %s14 = ssub.s32 %s9, 1
    %s15 = ssub.s32 %s9, 2
    %s22 = sadd.s32 1, %s17
    %p23 = scmp.ge.s32.totalorder %s22, 1
    %s24 = scalar_select %p23, 0, %s22
    %s25 = sadd.s32 1, %s16
    %s26 = scalar_select %p23, %s25, %s16
    %p27 = scmp.ge.s32.totalorder %s26, 2
    %s28 = scalar_select %p27, 0, %s26
    %s29 = ssub.s32 %s16, %s28
    %p30 = scmp.eq.s32.totalorder %s29, 0
    %s32 = sadd.s32 %s31, 1
    %s33 = scalar_select %p30, %s31, %s32
    %p36 = pneg %p30
    %p37 = scmp.eq.s32.totalorder %s9, 1
    %p38 = por %p36, %p37
    %p39 = scmp.ne.s32.totalorder %s31, %s34
    %p40 = scmp.eq.s32.totalorder %s9, 0
    %p41 = por %p39, %p40
    %p42 = scmp.ne.s32.totalorder %s31, %s34
    %p43 = scmp.eq.s32.totalorder %s14, 1
    %p44 = por %p42, %p43
    %p45 = scmp.ne.s32.totalorder %s34, %s35
    %p46 = scmp.eq.s32.totalorder %s14, 0
    %p47 = por %p45, %p46
    %p48 = scmp.ne.s32.totalorder %s34, %s35
    %p49 = scmp.eq.s32.totalorder %s15, 1
    %p50 = por %p48, %p49
    %p52 = scmp.ne.s32.totalorder %s35, %s51
    %p53 = scmp.eq.s32.totalorder %s15, 0
    %p54 = por %p52, %p53
    %s56 = sadd.s32 %s55, 1
    %p59 = scmp.eq.s32.totalorder %s9, 1
    %p60 = scmp.ne.s32.totalorder %s55, %s57
    %p61 = scmp.eq.s32.totalorder %s9, 0
    %p62 = por %p60, %p61
    %p63 = scmp.ne.s32.totalorder %s55, %s57
    %p64 = scmp.eq.s32.totalorder %s14, 1
    %p65 = por %p63, %p64
    %p66 = scmp.ne.s32.totalorder %s57, %s58
    %p67 = scmp.eq.s32.totalorder %s14, 0
    %p68 = por %p66, %p67
    %p69 = scmp.ne.s32.totalorder %s57, %s58
    %p70 = scmp.eq.s32.totalorder %s15, 1
    %p71 = por %p69, %p70
    %p73 = scmp.ne.s32.totalorder %s58, %s72
    %p74 = scmp.eq.s32.totalorder %s15, 0
    %p75 = por %p73, %p74
    %s77 = sadd.s32 %s76, 1
    %p80 = scmp.eq.s32.totalorder %s9, 1
    %p81 = scmp.ne.s32.totalorder %s76, %s78
    %p82 = scmp.eq.s32.totalorder %s9, 0
    %p83 = por %p81, %p82
    %p84 = scmp.ne.s32.totalorder %s76, %s78
    %p85 = scmp.eq.s32.totalorder %s14, 1
    %p86 = por %p84, %p85
    %p87 = scmp.ne.s32.totalorder %s78, %s79
    %p88 = scmp.eq.s32.totalorder %s14, 0
    %p89 = por %p87, %p88
    %p90 = scmp.ne.s32.totalorder %s78, %s79
    %p91 = scmp.eq.s32.totalorder %s15, 1
    %p92 = por %p90, %p91
    %p94 = scmp.ne.s32.totalorder %s79, %s93
    %p95 = scmp.eq.s32.totalorder %s15, 0
    %p96 = por %p94, %p95
    %s97 = ssub.s32 %s16, %s28
    %s98 = ssub.s32 %s17, %s24
    %s99 = sor.u32 %s97, %s98
    %p100 = scmp.eq.s32.totalorder %s99, 0
    %s102 = sadd.s32 %s101, 1
    %s103 = scalar_select %p100, %s101, %s102
    %p106 = pneg %p100
    %p107 = scmp.eq.s32.totalorder %s9, 1
    %p108 = por %p106, %p107
    %p109 = scmp.ne.s32.totalorder %s101, %s104
    %p110 = scmp.eq.s32.totalorder %s9, 0
    %p111 = por %p109, %p110
    %p112 = scmp.ne.s32.totalorder %s101, %s104
    %p113 = scmp.eq.s32.totalorder %s14, 1
    %p114 = por %p112, %p113
    %p115 = scmp.ne.s32.totalorder %s104, %s105
    %p116 = scmp.eq.s32.totalorder %s14, 0
    %p117 = por %p115, %p116
    %p118 = scmp.ne.s32.totalorder %s104, %s105
    %p119 = scmp.eq.s32.totalorder %s15, 1
    %p120 = por %p118, %p119
    %p122 = scmp.ne.s32.totalorder %s105, %s121
    %p123 = scmp.eq.s32.totalorder %s15, 0
    %p124 = por %p122, %p123
    %p125 = scmp.le.s32.totalorder 1, %s9
    %p126 = scmp.lt.s32.totalorder %s9, 3
    %p127 = pnand %p125, %p126
    %p128 = pneg %p127
    // Predicated region
    $region9: #{encoder_forward.13} parent=5 // pred_check
      _
    $region10: #{encoder_forward.13} parent=5 // pred_check_branch
      %130 = sbr.rel (%p127) target = $region12
    $region11: #{encoder_forward.13} parent=5 // pred_region
      %s131 = ssub.s32 %s9, 1
      // Predicated region
      $region13: #{encoder_forward.13} parent=11 // pred_check
        %p132 = pneg %p68
      $region14: #{encoder_forward.13} parent=11 // pred_check_branch
        %134 = sbr.rel (%p132) target = $region16
      $region15: #{encoder_forward.13} parent=11 // pred_region
        _
      $region16: #{encoder_forward.13} parent=11 // pred_fallthru
        _
      // Predicated region
      $region17: #{encoder_forward.13} parent=11 // pred_check
        %p135 = pneg %p89
      $region18: #{encoder_forward.13} parent=11 // pred_check_branch
        %137 = sbr.rel (%p135) target = $region20
      $region19: #{encoder_forward.13} parent=11 // pred_region
        _
      $region20: #{encoder_forward.13} parent=11 // pred_fallthru
        _
    $region12: #{encoder_forward.13} parent=5 // pred_fallthru
      _
    %p138 = scmp.lt.s32.totalorder %s9, 2
    // Predicated region
    $region21: #{encoder_forward.13} parent=5 // pred_check
      %p139 = pneg %p138
    $region22: #{encoder_forward.13} parent=5 // pred_check_branch
      %141 = sbr.rel (%p139) target = $region24
    $region23: #{encoder_forward.13} parent=5 // pred_region
      // Predicated region
      $region25: #{encoder_forward.13} parent=23 // pred_check
        %p142 = pneg %p41
      $region26: #{encoder_forward.13} parent=23 // pred_check_branch
        %144 = sbr.rel (%p142) target = $region28
      $region27: #{encoder_forward.13} parent=23 // pred_region
        %p145 = scmp.lt.s32.totalorder %s16, 1
        %s146 = scalar_select %p145, %s16, 1
        %s147 = smul.addr %s146, 8
        %s148 = scalar_lea.vmem %s0, %s147
      $region28: #{encoder_forward.13} parent=23 // pred_fallthru
        _
    $region24: #{encoder_forward.13} parent=5 // pred_fallthru
      _
    %p149 = scmp.le.s32.totalorder 1, %s9
    %p150 = scmp.lt.s32.totalorder %s9, 3
    %p151 = pnand %p149, %p150
    %p152 = pneg %p151
    // Predicated region
    $region29: #{encoder_forward.13} parent=5 // pred_check
      _
    $region30: #{encoder_forward.13} parent=5 // pred_check_branch
      %154 = sbr.rel (%p151) target = $region32
    $region31: #{encoder_forward.13} parent=5 // pred_region
      %s155 = ssub.s32 %s9, 1
      %p156 = scmp.lt.s32.totalorder %s18, 1
      %s157 = scalar_select %p156, %s18, 1
      %s158 = smul.addr %s157, 8
      %s159 = scalar_lea.vmem %s0, %s158
      %p160 = pneg %p47
      %p161 = pneg %p44
      %p162 = pneg %p68
      %p163 = pneg %p65
      %p164 = pneg %p89
      %p165 = pneg %p86
      %p166 = pneg %p117
      %p167 = pneg %p114
      %p168 = scmp.lt.s32.totalorder %s18, 1
      %s169 = scalar_select %p168, %s18, 1
      %p170 = scmp.lt.s32.totalorder %s19, 0
      %s171 = scalar_select %p170, %s19, 0
      %s172 = sadd.s32 %s171, %s169
      %s173 = smul.addr %s172, 4
      %s174 = scalar_lea.vmem %s3, %s173
      %p175 = scmp.lt.s32.totalorder %s18, 1
      %s176 = scalar_select %p175, %s18, 1
      %s177 = smul.addr %s176, 8
      %s178 = scalar_lea.vmem %s0, %s177
      %p179 = scmp.lt.s32.totalorder %s18, 1
      %s180 = scalar_select %p179, %s18, 1
      %p181 = scmp.lt.s32.totalorder %s19, 0
      %s182 = scalar_select %p181, %s19, 0
      %s183 = sadd.s32 %s182, %s180
      %s184 = smul.addr %s183, 4
      %s185 = scalar_lea.vmem %s3, %s184
      %v186 = vld [vmem:[%s178] sm:$0xf]
      %v187 = vld [vmem:[%s1] sm:$0xff]
      %v188 = vld [vmem:[%s1 + $0x8] sm:$0xff]
      %v189 = vld [vmem:[%s1 + $0x10] sm:$0xff]
      %v190 = vld [vmem:[%s1 + $0x18] sm:$0xff]
      %v191 = vld [vmem:[%s1 + $0x20] sm:$0xff]
      %v192 = vld [vmem:[%s1 + $0x28] sm:$0xff]
      %v193 = vld [vmem:[%s1 + $0x30] sm:$0xff]
      %v194 = vld [vmem:[%s1 + $0x38] sm:$0xff]
      %v195 = vld [vmem:[%s1 + $0x40] sm:$0xff]
      %v196 = vld [vmem:[%s1 + $0x48] sm:$0xff]
      %v197 = vld [vmem:[%s1 + $0x50] sm:$0xff]
      %v198 = vld [vmem:[%s1 + $0x58] sm:$0xff]
      %v199 = vld [vmem:[%s1 + $0x60] sm:$0xff]
      %v200 = vld [vmem:[%s1 + $0x68] sm:$0xff]
      %v201 = vld [vmem:[%s1 + $0x70] sm:$0xff]
      %v202 = vld [vmem:[%s1 + $0x78] sm:$0xff]
      %v203 = vld [vmem:[%s178 + $0x1] sm:$0xf]
      %s204 = scalar_lea.vmem %s1, 128
      %v205 = vld [vmem:[%s204] sm:$0xff]
      %v206 = vld [vmem:[%s204 + $0x8] sm:$0xff]
      %v207 = vld [vmem:[%s204 + $0x10] sm:$0xff]
      %v208 = vld [vmem:[%s204 + $0x18] sm:$0xff]
      %v209 = vld [vmem:[%s204 + $0x20] sm:$0xff]
      %v210 = vld [vmem:[%s204 + $0x28] sm:$0xff]
      %v211 = vld [vmem:[%s204 + $0x30] sm:$0xff]
      %v212 = vld [vmem:[%s204 + $0x38] sm:$0xff]
      %v213 = vld [vmem:[%s204 + $0x40] sm:$0xff]
      %v214 = vld [vmem:[%s204 + $0x48] sm:$0xff]
      %v215 = vld [vmem:[%s204 + $0x50] sm:$0xff]
      %v216 = vld [vmem:[%s204 + $0x58] sm:$0xff]
      %v217 = vld [vmem:[%s204 + $0x60] sm:$0xff]
      %v218 = vld [vmem:[%s204 + $0x68] sm:$0xff]
      %v219 = vld [vmem:[%s204 + $0x70] sm:$0xff]
      %v220 = vld [vmem:[%s204 + $0x78] sm:$0xff]
      %221 = vmatprep.subr.mxu0 0.0
      %222 = vmatpush1.msra.mxu0 %v205
      %223 = vmatprep.subr.mxu0 0.0
      %224 = vmatpush1.msra.mxu0 %v206
      %225 = vmatprep.subr.mxu0 0.0
      %226 = vmatpush1.msra.mxu0 %v207
      %227 = vmatprep.subr.mxu0 0.0
      %228 = vmatpush1.msra.mxu0 %v208
      %229 = vmatprep.subr.mxu0 0.0
      %230 = vmatpush1.msra.mxu0 %v209
      %231 = vmatprep.subr.mxu0 0.0
      %232 = vmatpush1.msra.mxu0 %v210
      %233 = vmatprep.subr.mxu0 0.0
      %234 = vmatpush1.msra.mxu0 %v211
      %235 = vmatprep.subr.mxu0 0.0
      %236 = vmatpush1.msra.mxu0 %v212
      %237 = vmatprep.subr.mxu0 0.0
      %238 = vmatpush1.msra.mxu0 %v213
      %239 = vmatprep.subr.mxu0 0.0
      %240 = vmatpush1.msra.mxu0 %v214
      %241 = vmatprep.subr.mxu0 0.0
      %242 = vmatpush1.msra.mxu0 %v215
      %243 = vmatprep.subr.mxu0 0.0
      %244 = vmatpush1.msra.mxu0 %v216
      %245 = vmatprep.subr.mxu0 0.0
      %246 = vmatpush1.msra.mxu0 %v217
      %247 = vmatprep.subr.mxu0 0.0
      %248 = vmatpush1.msra.mxu0 %v218
      %249 = vmatprep.subr.mxu0 0.0
      %250 = vmatpush1.msra.mxu0 %v219
      %251 = vmatprep.subr.mxu0 0.0
      %252 = vmatpush1.msra.mxu0 %v220
      %253 = vmatprep.subr.mxu0 0.0
      %254 = vmatpush1.msra.mxu0 0.0
      %255 = vmatprep.subr.mxu0 0.0
      %256 = vmatpush1.msra.mxu0 0.0
      %257 = vmatprep.subr.mxu0 0.0
      %258 = vmatpush1.msra.mxu0 0.0
      %259 = vmatprep.subr.mxu0 0.0
      %260 = vmatpush1.msra.mxu0 0.0
      %261 = vmatprep.subr.mxu0 0.0
      %262 = vmatpush1.msra.mxu0 0.0
      %263 = vmatprep.subr.mxu0 0.0
      %264 = vmatpush1.msra.mxu0 0.0
      %265 = vmatprep.subr.mxu0 0.0
      %266 = vmatpush1.msra.mxu0 0.0
      %267 = vmatprep.subr.mxu0 0.0
      %268 = vmatpush1.msra.mxu0 0.0
      %269 = vmatprep.subr.mxu0 0.0
      %270 = vmatpush1.msra.mxu0 0.0
      %271 = vmatprep.subr.mxu0 0.0
      %272 = vmatpush1.msra.mxu0 0.0
      %273 = vmatprep.subr.mxu0 0.0
      %274 = vmatpush1.msra.mxu0 0.0
      %275 = vmatprep.subr.mxu0 0.0
      %276 = vmatpush1.msra.mxu0 0.0
      %277 = vmatprep.subr.mxu0 0.0
      %278 = vmatpush1.msra.mxu0 0.0
      %279 = vmatprep.subr.mxu0 0.0
      %280 = vmatpush1.msra.mxu0 0.0
      %281 = vmatprep.subr.mxu0 0.0
      %282 = vmatpush1.msra.mxu0 0.0
      %283 = vmatprep.subr.mxu0 0.0
      %284 = vmatpush1.msra.mxu0 0.0
      %285 = vmatprep.mubr.f32.mxu0 0.0
      %286 = vmatmul.mubr.f32.gmra.mrb[0].mxu0 %v203
      %v287 = vpop.f32.mrb[0].mxu0
      %v288 = vadd.f32 0.0, %v287
      %v289 = vpop.f32.mrb[0].mxu0
      %290 = vdwg.mxu0
      %291 = vmatprep.subr.mxu0 0.0
      %292 = vmatpush1.msra.mxu0 %v187
      %293 = vmatprep.subr.mxu0 0.0
      %294 = vmatpush1.msra.mxu0 %v188
      %295 = vmatprep.subr.mxu0 0.0
      %296 = vmatpush1.msra.mxu0 %v189
      %297 = vmatprep.subr.mxu0 0.0
      %298 = vmatpush1.msra.mxu0 %v190
      %299 = vmatprep.subr.mxu0 0.0
      %300 = vmatpush1.msra.mxu0 %v191
      %301 = vmatprep.subr.mxu0 0.0
      %302 = vmatpush1.msra.mxu0 %v192
      %303 = vmatprep.subr.mxu0 0.0
      %304 = vmatpush1.msra.mxu0 %v193
      %305 = vmatprep.subr.mxu0 0.0
      %306 = vmatpush1.msra.mxu0 %v194
      %307 = vmatprep.subr.mxu0 0.0
      %308 = vmatpush1.msra.mxu0 %v195
      %309 = vmatprep.subr.mxu0 0.0
      %310 = vmatpush1.msra.mxu0 %v196
      %311 = vmatprep.subr.mxu0 0.0
      %312 = vmatpush1.msra.mxu0 %v197
      %313 = vmatprep.subr.mxu0 0.0
      %314 = vmatpush1.msra.mxu0 %v198
      %315 = vmatprep.subr.mxu0 0.0
      %316 = vmatpush1.msra.mxu0 %v199
      %317 = vmatprep.subr.mxu0 0.0
      %318 = vmatpush1.msra.mxu0 %v200
      %319 = vmatprep.subr.mxu0 0.0
      %320 = vmatpush1.msra.mxu0 %v201
      %321 = vmatprep.subr.mxu0 0.0
      %322 = vmatpush1.msra.mxu0 %v202
      %323 = vmatprep.subr.mxu0 0.0
      %324 = vmatpush1.msra.mxu0 0.0
      %325 = vmatprep.subr.mxu0 0.0
      %326 = vmatpush1.msra.mxu0 0.0
      %327 = vmatprep.subr.mxu0 0.0
      %328 = vmatpush1.msra.mxu0 0.0
      %329 = vmatprep.subr.mxu0 0.0
      %330 = vmatpush1.msra.mxu0 0.0
      %331 = vmatprep.subr.mxu0 0.0
      %332 = vmatpush1.msra.mxu0 0.0
      %333 = vmatprep.subr.mxu0 0.0
      %334 = vmatpush1.msra.mxu0 0.0
      %335 = vmatprep.subr.mxu0 0.0
      %336 = vmatpush1.msra.mxu0 0.0
      %337 = vmatprep.subr.mxu0 0.0
      %338 = vmatpush1.msra.mxu0 0.0
      %339 = vmatprep.subr.mxu0 0.0
      %340 = vmatpush1.msra.mxu0 0.0
      %341 = vmatprep.subr.mxu0 0.0
      %342 = vmatpush1.msra.mxu0 0.0
      %343 = vmatprep.subr.mxu0 0.0
      %344 = vmatpush1.msra.mxu0 0.0
      %345 = vmatprep.subr.mxu0 0.0
      %346 = vmatpush1.msra.mxu0 0.0
      %347 = vmatprep.subr.mxu0 0.0
      %348 = vmatpush1.msra.mxu0 0.0
      %349 = vmatprep.subr.mxu0 0.0
      %350 = vmatpush1.msra.mxu0 0.0
      %351 = vmatprep.subr.mxu0 0.0
      %352 = vmatpush1.msra.mxu0 0.0
      %353 = vmatprep.subr.mxu0 0.0
      %354 = vmatpush1.msra.mxu0 0.0
      %355 = vmatprep.mubr.f32.mxu0 0.0
      %356 = vmatmul.mubr.f32.gmra.mrb[0].mxu0 %v186
      %v357 = vpop.f32.mrb[0].mxu0
      %v358 = vadd.f32 %v288, %v357
      %v359 = vpop.f32.mrb[0].mxu0
      %360 = vdwg.mxu0
      %v361 = vld [vmem:[%s178 + $0x2] sm:$0xf]
      %s362 = scalar_lea.vmem %s1, 256
      %v363 = vld [vmem:[%s362] sm:$0xff]
      %v364 = vld [vmem:[%s362 + $0x8] sm:$0xff]
      %v365 = vld [vmem:[%s362 + $0x10] sm:$0xff]
      %v366 = vld [vmem:[%s362 + $0x18] sm:$0xff]
      %v367 = vld [vmem:[%s362 + $0x20] sm:$0xff]
      %v368 = vld [vmem:[%s362 + $0x28] sm:$0xff]
      %v369 = vld [vmem:[%s362 + $0x30] sm:$0xff]
      %v370 = vld [vmem:[%s362 + $0x38] sm:$0xff]
      %v371 = vld [vmem:[%s362 + $0x40] sm:$0xff]
      %v372 = vld [vmem:[%s362 + $0x48] sm:$0xff]
      %v373 = vld [vmem:[%s362 + $0x50] sm:$0xff]
      %v374 = vld [vmem:[%s362 + $0x58] sm:$0xff]
      %v375 = vld [vmem:[%s362 + $0x60] sm:$0xff]
      %v376 = vld [vmem:[%s362 + $0x68] sm:$0xff]
      %v377 = vld [vmem:[%s362 + $0x70] sm:$0xff]
      %v378 = vld [vmem:[%s362 + $0x78] sm:$0xff]
      %379 = vmatprep.subr.mxu0 0.0
      %380 = vmatpush1.msra.mxu0 %v363
      %381 = vmatprep.subr.mxu0 0.0
      %382 = vmatpush1.msra.mxu0 %v364
      %383 = vmatprep.subr.mxu0 0.0
      %384 = vmatpush1.msra.mxu0 %v365
      %385 = vmatprep.subr.mxu0 0.0
      %386 = vmatpush1.msra.mxu0 %v366
      %387 = vmatprep.subr.mxu0 0.0
      %388 = vmatpush1.msra.mxu0 %v367
      %389 = vmatprep.subr.mxu0 0.0
      %390 = vmatpush1.msra.mxu0 %v368
      %391 = vmatprep.subr.mxu0 0.0
      %392 = vmatpush1.msra.mxu0 %v369
      %393 = vmatprep.subr.mxu0 0.0
      %394 = vmatpush1.msra.mxu0 %v370
      %395 = vmatprep.subr.mxu0 0.0
      %396 = vmatpush1.msra.mxu0 %v371
      %397 = vmatprep.subr.mxu0 0.0
      %398 = vmatpush1.msra.mxu0 %v372
      %399 = vmatprep.subr.mxu0 0.0
      %400 = vmatpush1.msra.mxu0 %v373
      %401 = vmatprep.subr.mxu0 0.0
      %402 = vmatpush1.msra.mxu0 %v374
      %403 = vmatprep.subr.mxu0 0.0
      %404 = vmatpush1.msra.mxu0 %v375
      %405 = vmatprep.subr.mxu0 0.0
      %406 = vmatpush1.msra.mxu0 %v376
      %407 = vmatprep.subr.mxu0 0.0
      %408 = vmatpush1.msra.mxu0 %v377
      %409 = vmatprep.subr.mxu0 0.0
      %410 = vmatpush1.msra.mxu0 %v378
      %411 = vmatprep.subr.mxu0 0.0
      %412 = vmatpush1.msra.mxu0 0.0
      %413 = vmatprep.subr.mxu0 0.0
      %414 = vmatpush1.msra.mxu0 0.0
      %415 = vmatprep.subr.mxu0 0.0
      %416 = vmatpush1.msra.mxu0 0.0
      %417 = vmatprep.subr.mxu0 0.0
      %418 = vmatpush1.msra.mxu0 0.0
      %419 = vmatprep.subr.mxu0 0.0
      %420 = vmatpush1.msra.mxu0 0.0
      %421 = vmatprep.subr.mxu0 0.0
      %422 = vmatpush1.msra.mxu0 0.0
      %423 = vmatprep.subr.mxu0 0.0
      %424 = vmatpush1.msra.mxu0 0.0
      %425 = vmatprep.subr.mxu0 0.0
      %426 = vmatpush1.msra.mxu0 0.0
      %427 = vmatprep.subr.mxu0 0.0
      %428 = vmatpush1.msra.mxu0 0.0
      %429 = vmatprep.subr.mxu0 0.0
      %430 = vmatpush1.msra.mxu0 0.0
      %431 = vmatprep.subr.mxu0 0.0
      %432 = vmatpush1.msra.mxu0 0.0
      %433 = vmatprep.subr.mxu0 0.0
      %434 = vmatpush1.msra.mxu0 0.0
      %435 = vmatprep.subr.mxu0 0.0
      %436 = vmatpush1.msra.mxu0 0.0
      %437 = vmatprep.subr.mxu0 0.0
      %438 = vmatpush1.msra.mxu0 0.0
      %439 = vmatprep.subr.mxu0 0.0
      %440 = vmatpush1.msra.mxu0 0.0
      %441 = vmatprep.subr.mxu0 0.0
      %442 = vmatpush1.msra.mxu0 0.0
      %443 = vmatprep.mubr.f32.mxu0 0.0
      %444 = vmatmul.mubr.f32.gmra.mrb[0].mxu0 %v361
      %v445 = vpop.f32.mrb[0].mxu0
      %v446 = vadd.f32 0.0, %v445
      %v447 = vpop.f32.mrb[0].mxu0
      %448 = vdwg.mxu0
      %v449 = vadd.f32 %v358, %v446
      %v450 = vld [vmem:[%s2] sm:$0x1]
      %v452 = vlaneseq
      %v453 = vshrl.u32 %v452, 7
      %v454 = vsub.s32 0, %v453
      %v455 = vrot.slane %v450, %v454
      %v457 = vadd.f32 %v449, %v455
      %458 = vst [vmem:[%s185] sm:$0xf] %v457
      %p459 = scmp.lt.s32.totalorder %s18, 1
      %s460 = scalar_select %p459, %s18, 1
      %p461 = scmp.lt.s32.totalorder %s19, 0
      %s462 = scalar_select %p461, %s19, 0
      %s463 = sadd.s32 %s462, %s460
      %s464 = smul.addr %s463, 4
      %s465 = scalar_lea.vmem %s3, %s464
      // Predicated region
      $region33: #{encoder_forward.13} parent=31 // pred_check
        %p466 = pneg %p114
      $region34: #{encoder_forward.13} parent=31 // pred_check_branch
        %468 = sbr.rel (%p466) target = $region36
      $region35: #{encoder_forward.13} parent=31 // pred_region
        _
      $region36: #{encoder_forward.13} parent=31 // pred_fallthru
        _
    $region32: #{encoder_forward.13} parent=5 // pred_fallthru
      _
    %p469 = scmp.le.s32.totalorder 2, %s9
    // Predicated region
    $region37: #{encoder_forward.13} parent=5 // pred_check
      %p470 = pneg %p469
    $region38: #{encoder_forward.13} parent=5 // pred_check_branch
      %472 = sbr.rel (%p470) target = $region40
    $region39: #{encoder_forward.13} parent=5 // pred_region
      %s473 = ssub.s32 %s9, 2
      // Predicated region
      $region41: #{encoder_forward.13} parent=39 // pred_check
        %p474 = pneg %p120
      $region42: #{encoder_forward.13} parent=39 // pred_check_branch
        %476 = sbr.rel (%p474) target = $region44
      $region43: #{encoder_forward.13} parent=39 // pred_region
        %p477 = scmp.lt.s32.totalorder %s20, 1
        %s478 = scalar_select %p477, %s20, 1
        %p479 = scmp.lt.s32.totalorder %s21, 0
        %s480 = scalar_select %p479, %s21, 0
        %s481 = sadd.s32 %s480, %s478
        %s482 = smul.addr %s481, 4
        %s483 = scalar_lea.vmem %s3, %s482
      $region44: #{encoder_forward.13} parent=39 // pred_fallthru
        _
    $region40: #{encoder_forward.13} parent=5 // pred_fallthru
      _
  $region6: #{encoder_forward.13} parent=0 // loop_footer
    %s13 = sadd.s32 1, %s9
  $region7: #{encoder_forward.13} parent=0 // loop_footer_branch
    %8 = sbr.rel target = $region3
  $region8: #{encoder_forward.13} parent=0 // loop_exit
    _

</llo_original>
